<compile_context>
chip_gen: v7x
topology: tpu7x:2x2x1
jax: 0.10.0
libtpu: 0.0.40
codegen_flags: <defaults>
</compile_context>

<pallas_src>
import functools

import jax
import jax.numpy as jnp
from jax.experimental import pallas as pl

# ------------------ small synthetic RoBERTa config --------------------------
VOCAB = 100
HIDDEN = 32
N_HEADS = 2
HEAD_DIM = HIDDEN // N_HEADS
N_LAYERS = 2
INTERMEDIATE = 64
MAX_POS = 16          # roberta.config.max_position_embeddings == fc out dim
N_CLASSES = 3
PAD_TOKEN_ID = 1
LN_EPS = 1e-5
_SQRT_HALF = 0.7071067811865476
LANES = 128


def _pad8(n):
    return (n + 7) // 8 * 8


# ---------------- packed-buffer layout (static, 8-row aligned) --------------
# matrices buffer (MATS_ROWS, 128):
OFF_WORD = 0
OFF_POS = OFF_WORD + _pad8(VOCAB)                 # 104
OFF_L0 = OFF_POS + MAX_POS                        # 120
LAYER_STRIDE = HIDDEN + HIDDEN + HIDDEN + INTERMEDIATE   # wqkv+wo+w1+w2 rows = 160
OFF_WQKV, OFF_WO, OFF_W1, OFF_W2 = 0, HIDDEN, 2 * HIDDEN, 3 * HIDDEN
OFF_WFC = OFF_L0 + N_LAYERS * LAYER_STRIDE        # 440
OFF_WCLS = OFF_WFC + HIDDEN                       # 472
MATS_ROWS = _pad8(OFF_WCLS + MAX_POS)             # 488

# row-vector buffer (VECS_ROWS, 128):
ROW_TYPE, ROW_EMB_G, ROW_EMB_B = 0, 1, 2
ROW_L0 = 3
ROWS_PER_LAYER = 8                                 # bqkv,bo,ln1g,ln1b,b1,b2,ln2g,ln2b
ROW_BFC = ROW_L0 + N_LAYERS * ROWS_PER_LAYER       # 19
ROW_BCLS = ROW_BFC + 1                             # 20
VECS_ROWS = _pad8(ROW_BCLS + 1)                    # 24


def _full_spec(shape):
    # Whole-array block (everything fits trivially in VMEM at this size).
    return pl.BlockSpec(shape, lambda: tuple(0 for _ in shape))


# --------------------------- in-kernel helpers -------------------------------
def _erf_approx(x):
    # Abramowitz & Stegun 7.1.26 rational approximation, |err| < 1.5e-7.
    a1, a2, a3, a4, a5 = (0.254829592, -0.284496736, 1.421413741,
                          -1.453152027, 1.061405429)
    p = 0.3275911
    ax = jnp.abs(x)
    t = 1.0 / (1.0 + p * ax)
    poly = ((((a5 * t + a4) * t + a3) * t + a2) * t + a1) * t
    y = 1.0 - poly * jnp.exp(-ax * ax)
    return jnp.where(x >= 0.0, y, -y)


def _gelu_exact(x):
    # erf-based GELU (PyTorch/HF RoBERTa "gelu").
    # TODO(synk): v5e is VALU-bound here at real INTERMEDIATE sizes; the tanh
    # approximation (single EUP op) is the cheaper alternative if allowed.
    return 0.5 * x * (1.0 + _erf_approx(x * _SQRT_HALF))


def _layernorm(x, g, b):
    mu = jnp.mean(x, axis=-1, keepdims=True)
    var = jnp.mean(jnp.square(x - mu), axis=-1, keepdims=True)
    return (x - mu) * jax.lax.rsqrt(var + LN_EPS) * g + b


# --------------------------- fused Pallas kernel -----------------------------
def _fused_kernel(idspos_ref, bias_ref, pool_ref, vecs_ref, mats_ref, o_ref,
                  *, batch, seq):
    f32 = jnp.float32
    bs = batch * seq
    H, NH, HD, I = HIDDEN, N_HEADS, HEAD_DIM, INTERMEDIATE

    def mat(off, rows, cols):                     # static slice of packed weights
        return mats_ref[off:off + rows, :cols]

    def vec(row, cols):                           # static slice -> (1, cols)
        return vecs_ref[row:row + 1, :cols]

    # ---- embeddings: gather as one-hot matmuls (stay in VMEM / MXU) ---------
    idspos = idspos_ref[...]                      # (BS, 2) int32
    ids = idspos[:, 0:1]
    pos = idspos[:, 1:2]
    iota_v = jax.lax.broadcasted_iota(jnp.int32, (bs, VOCAB), 1)
    iota_p = jax.lax.broadcasted_iota(jnp.int32, (bs, MAX_POS), 1)
    one_hot_w = (ids == iota_v).astype(f32)       # (BS, VOCAB)
    one_hot_p = (pos == iota_p).astype(f32)       # (BS, MAX_POS)
    emb = jnp.dot(one_hot_w, mat(OFF_WORD, VOCAB, H), preferred_element_type=f32)
    emb = emb + jnp.dot(one_hot_p, mat(OFF_POS, MAX_POS, H),
                        preferred_element_type=f32)
    emb = emb + vec(ROW_TYPE, H)                  # token_type_id == 0
    x = _layernorm(emb, vec(ROW_EMB_G, H), vec(ROW_EMB_B, H))
    # dropout(p=0.0) in the reference module is the identity — omitted.

    scale = 1.0 / float(HD) ** 0.5
    bias = bias_ref[...]                          # (B, S) additive attn mask
    # per-(batch,head) bias, hoisted out of the layer loop: (B*NH, 1, S)
    bias3 = jnp.stack([bias[b:b + 1, :]
                       for b in range(batch) for _ in range(NH)], axis=0)

    for l in range(N_LAYERS):
        mbase = OFF_L0 + l * LAYER_STRIDE
        vbase = ROW_L0 + l * ROWS_PER_LAYER
        wqkv = mat(mbase + OFF_WQKV, H, 3 * H)
        wo = mat(mbase + OFF_WO, H, H)
        w1 = mat(mbase + OFF_W1, H, I)
        w2 = mat(mbase + OFF_W2, I, H)
        bqkv, bo = vec(vbase + 0, 3 * H), vec(vbase + 1, H)
        ln1g, ln1b = vec(vbase + 2, H), vec(vbase + 3, H)
        b1, b2 = vec(vbase + 4, I), vec(vbase + 5, H)
        ln2g, ln2b = vec(vbase + 6, H), vec(vbase + 7, H)

        # fused QKV projection: one (BS,H) x (H,3H) matmul
        qkv = jnp.dot(x, wqkv, preferred_element_type=f32) + bqkv

        # gather heads into a batched (B*NH, S, HD) layout (registers only)
        def heads(col_base):
            tiles = []
            for b in range(batch):
                r0 = b * seq
                for h in range(NH):
                    c0 = col_base + h * HD
                    tiles.append(qkv[r0:r0 + seq, c0:c0 + HD])
            return jnp.stack(tiles, axis=0)

        qh, kh, vh = heads(0), heads(H), heads(2 * H)

        # 2 batched MXU pushes per layer instead of 8 tiny per-(b,h) dots
        s = jnp.einsum('bqd,bkd->bqk', qh, kh,
                       preferred_element_type=f32) * scale + bias3
        s = s - jnp.max(s, axis=-1, keepdims=True)
        p = jnp.exp(s)
        p = p * pl.reciprocal(jnp.sum(p, axis=-1, keepdims=True), approx=True)
        ctx_h = jnp.einsum('bqk,bkd->bqd', p, vh,
                           preferred_element_type=f32)      # (B*NH, S, HD)

        # rebuild (BS, H) context without any scratch stores / reloads
        ctx = jnp.concatenate(
            [jnp.concatenate([ctx_h[b * NH + h] for h in range(NH)], axis=-1)
             for b in range(batch)], axis=0)

        attn_out = jnp.dot(ctx, wo, preferred_element_type=f32) + bo
        x = _layernorm(x + attn_out, ln1g, ln1b)

        ffn = jnp.dot(x, w1, preferred_element_type=f32) + b1
        ffn = _gelu_exact(ffn)
        ffn = jnp.dot(ffn, w2, preferred_element_type=f32) + b2
        x = _layernorm(x + ffn, ln2g, ln2b)

    # ---- sentiment head: fc -> relu -> (mask + mean pool) matmul -> classifier
    wfc, bfc = mat(OFF_WFC, H, MAX_POS), vec(ROW_BFC, MAX_POS)
    wcls, bcls = mat(OFF_WCLS, MAX_POS, N_CLASSES), vec(ROW_BCLS, N_CLASSES)
    xp = jnp.maximum(jnp.dot(x, wfc, preferred_element_type=f32) + bfc, 0.0)
    # pool (B, BS) already carries mask[b,s]/max(sum(mask[b]),1)
    pooled = jnp.dot(pool_ref[...], xp, preferred_element_type=f32)   # (B, MAX_POS)
    logits = jnp.dot(pooled, wcls, preferred_element_type=f32) + bcls  # (B, C)
    o_ref[...] = logits.astype(o_ref.dtype)                 # single contiguous store


# --------------------------- parameter init & packing ------------------------
def init_params(key):
    def nrm(k, shape):
        return (0.02 * jax.random.normal(k, shape)).astype(jnp.float32)

    ks = iter(jax.random.split(key, 9))
    L, H, I, P, C = N_LAYERS, HIDDEN, INTERMEDIATE, MAX_POS, N_CLASSES
    word_emb = nrm(next(ks), (VOCAB, H))
    # nn.Embedding(padding_idx=1): padding row is zero.
    word_emb = word_emb.at[PAD_TOKEN_ID].set(0.0)
    return dict(
        word_emb=word_emb,
        pos_emb=nrm(next(ks), (MAX_POS, H)),
        type_emb=jnp.zeros((1, H), jnp.float32) + nrm(next(ks), (1, H)),
        emb_ln_g=jnp.ones((1, H), jnp.float32),
        emb_ln_b=jnp.zeros((1, H), jnp.float32),
        wqkv=nrm(next(ks), (L, H, 3 * H)),
        bqkv=jnp.zeros((L, 1, 3 * H), jnp.float32),
        wo=nrm(next(ks), (L, H, H)),
        bo=jnp.zeros((L, 1, H), jnp.float32),
        ln1_g=jnp.ones((L, 1, H), jnp.float32),
        ln1_b=jnp.zeros((L, 1, H), jnp.float32),
        w1=nrm(next(ks), (L, H, I)),
        b1=jnp.zeros((L, 1, I), jnp.float32),
        w2=nrm(next(ks), (L, I, H)),
        b2=jnp.zeros((L, 1, H), jnp.float32),
        ln2_g=jnp.ones((L, 1, H), jnp.float32),
        ln2_b=jnp.zeros((L, 1, H), jnp.float32),
        wfc=nrm(next(ks), (H, P)),          # nn.Linear(emb_dim, seq_dim)
        bfc=jnp.zeros((1, P), jnp.float32),
        wcls=nrm(next(ks), (P, C)),         # nn.Linear(seq_dim, n_classes)
        bcls=jnp.zeros((1, C), jnp.float32),
    )


def pack_params(p):
    """Pack all weights into 2 lane-padded f32 buffers (done once, host side)."""
    def put(buf, row, a):
        a = jnp.asarray(a, jnp.float32).reshape(-1, a.shape[-1])
        return buf.at[row:row + a.shape[0], :a.shape[1]].set(a)

    mats = jnp.zeros((MATS_ROWS, LANES), jnp.float32)
    mats = put(mats, OFF_WORD, p['word_emb'])
    mats = put(mats, OFF_POS, p['pos_emb'])
    for l in range(N_LAYERS):
        base = OFF_L0 + l * LAYER_STRIDE
        mats = put(mats, base + OFF_WQKV, p['wqkv'][l])
        mats = put(mats, base + OFF_WO, p['wo'][l])
        mats = put(mats, base + OFF_W1, p['w1'][l])
        mats = put(mats, base + OFF_W2, p['w2'][l])
    mats = put(mats, OFF_WFC, p['wfc'])
    mats = put(mats, OFF_WCLS, p['wcls'])

    vecs = jnp.zeros((VECS_ROWS, LANES), jnp.float32)
    vecs = put(vecs, ROW_TYPE, p['type_emb'])
    vecs = put(vecs, ROW_EMB_G, p['emb_ln_g'])
    vecs = put(vecs, ROW_EMB_B, p['emb_ln_b'])
    for l in range(N_LAYERS):
        base = ROW_L0 + l * ROWS_PER_LAYER
        vecs = put(vecs, base + 0, p['bqkv'][l])
        vecs = put(vecs, base + 1, p['bo'][l])
        vecs = put(vecs, base + 2, p['ln1_g'][l])
        vecs = put(vecs, base + 3, p['ln1_b'][l])
        vecs = put(vecs, base + 4, p['b1'][l])
        vecs = put(vecs, base + 5, p['b2'][l])
        vecs = put(vecs, base + 6, p['ln2_g'][l])
        vecs = put(vecs, base + 7, p['ln2_b'][l])
    vecs = put(vecs, ROW_BFC, p['bfc'])
    vecs = put(vecs, ROW_BCLS, p['bcls'])
    return vecs, mats


# --------------------------- full forward ------------------------------------
@jax.jit
def roberta_sentiment_forward(vecs, mats, input_ids, attention_mask):
    B, S = input_ids.shape
    assert S + PAD_TOKEN_ID < MAX_POS, "sequence too long for pos_emb table"

    mask_f = attention_mask.astype(jnp.float32)
    # RoBERTa-style position ids: incremental positions offset by padding_idx.
    pos_ids = (jnp.cumsum(attention_mask, axis=1) * attention_mask) + PAD_TOKEN_ID

    idspos = jnp.stack([input_ids.reshape(B * S).astype(jnp.int32),
                        pos_ids.reshape(B * S).astype(jnp.int32)], axis=1)
    bias = (1.0 - mask_f) * -1e9                          # (B, S) additive attn mask
    # masked mean-pooling matrix (B, B*S): pool[b, b*S+s] = mask[b,s]/max(Σmask,1)
    # (denominator clamp avoids NaN for an all-padding row; PyTorch would NaN.)
    denom = jnp.maximum(jnp.sum(mask_f, axis=1, keepdims=True), 1.0)
    eye = jnp.eye(B, dtype=jnp.float32)
    pool = (eye[:, :, None] * (mask_f / denom)[:, None, :]).reshape(B, B * S)

    inputs = [idspos, bias, pool, vecs, mats]             # 5 prologue DMAs total
    in_specs = [_full_spec(a.shape) for a in inputs]

    kernel = functools.partial(_fused_kernel, batch=B, seq=S)
    # Single fused, grid-less pallas_call: at this size the model is
    # launch/DMA-descriptor-overhead bound and fully VMEM-resident.
    return pl.pallas_call(
        kernel,
        out_shape=jax.ShapeDtypeStruct((B, N_CLASSES), jnp.float32),
        in_specs=in_specs,
        out_specs=_full_spec((B, N_CLASSES)),
    )(*inputs)


# ------------------------------- main -----------------------------------------
if __name__ == "__main__":
    key = jax.random.PRNGKey(0)
    pkey, ikey = jax.random.split(key)
    params = init_params(pkey)
    vecs, mats = pack_params(params)

    B, S = 2, 8
    input_ids = jax.random.randint(ikey, (B, S), minval=2, maxval=VOCAB,
                                   dtype=jnp.int32)
    # second example has two padding positions at the end
    attention_mask = jnp.array(
        [[1, 1, 1, 1, 1, 1, 1, 1],
         [1, 1, 1, 1, 1, 1, 0, 0]], dtype=jnp.int32)
    input_ids = jnp.where(attention_mask == 1, input_ids, PAD_TOKEN_ID)

    logits = roberta_sentiment_forward(vecs, mats, input_ids, attention_mask)
    jax.block_until_ready(logits)
    assert logits.shape == (B, N_CLASSES) and logits.dtype == jnp.float32
    assert bool(jnp.all(jnp.isfinite(logits)))
    print("KERNEL_OK")
</pallas_src>

<mosaic_0001>
module attributes {stable_mosaic.version = 11 : i64} {
  func.func @_fused_kernel(%arg0: memref<16x2xi32, #tpu.memory_space<vmem>>, %arg1: memref<2x8xf32, #tpu.memory_space<vmem>>, %arg2: memref<2x16xf32, #tpu.memory_space<vmem>>, %arg3: memref<24x128xf32, #tpu.memory_space<vmem>>, %arg4: memref<488x128xf32, #tpu.memory_space<vmem>>, %arg5: memref<2x3xf32, #tpu.memory_space<vmem>>) attributes {dimension_semantics = [], scalar_prefetch = 0 : i64, scratch_operands = 0 : i64, tpu.core_type = #tpu.core_type<tc>} {
    %c0 = arith.constant 0 : index
    %c0_0 = arith.constant 0 : index
    %0 = vector.load %arg0[%c0, %c0_0] : memref<16x2xi32, #tpu.memory_space<vmem>>, vector<16x2xi32>
    %1 = vector.extract_strided_slice %0 {offsets = [0, 0], sizes = [16, 1], strides = [1, 1]} : vector<16x2xi32> to vector<16x1xi32>
    %2 = vector.extract_strided_slice %0 {offsets = [0, 1], sizes = [16, 1], strides = [1, 1]} : vector<16x2xi32> to vector<16x1xi32>
    %3 = tpu.iota {dimensions = array<i32: 1>} : vector<16x100xi32>
    %4 = tpu.iota {dimensions = array<i32: 1>} : vector<16x16xi32>
    %5 = vector.broadcast %1 : vector<16x1xi32> to vector<16x100xi32>
    %6 = arith.cmpi eq, %5, %3 : vector<16x100xi32>
    %7 = arith.extui %6 : vector<16x100xi1> to vector<16x100xi32>
    %8 = arith.sitofp %7 : vector<16x100xi32> to vector<16x100xf32>
    %9 = vector.broadcast %2 : vector<16x1xi32> to vector<16x16xi32>
    %10 = arith.cmpi eq, %9, %4 : vector<16x16xi32>
    %11 = arith.extui %10 : vector<16x16xi1> to vector<16x16xi32>
    %12 = arith.sitofp %11 : vector<16x16xi32> to vector<16x16xf32>
    %c0_1 = arith.constant 0 : index
    %c0_2 = arith.constant 0 : index
    %13 = vector.load %arg4[%c0_1, %c0_2] : memref<488x128xf32, #tpu.memory_space<vmem>>, vector<100x32xf32>
    %cst = arith.constant dense<0.000000e+00> : vector<16x32xf32>
    %14 = tpu.matmul %8, %13, %cst {dimension_numbers = #tpu.dot_dimension_numbers<[1], [0], [0], [1], [0, 0, 1, 1], [], []>} : vector<16x100xf32>, vector<100x32xf32>, vector<16x32xf32> -> vector<16x32xf32>
    %c104 = arith.constant 104 : index
    %c0_3 = arith.constant 0 : index
    %15 = vector.load %arg4[%c104, %c0_3] : memref<488x128xf32, #tpu.memory_space<vmem>>, vector<16x32xf32>
    %cst_4 = arith.constant dense<0.000000e+00> : vector<16x32xf32>
    %16 = tpu.matmul %12, %15, %cst_4 {dimension_numbers = #tpu.dot_dimension_numbers<[1], [0], [0], [1], [0, 0, 1, 1], [], []>} : vector<16x16xf32>, vector<16x32xf32>, vector<16x32xf32> -> vector<16x32xf32>
    %17 = arith.addf %14, %16 : vector<16x32xf32>
    %c0_5 = arith.constant 0 : index
    %c0_6 = arith.constant 0 : index
    %18 = vector.load %arg3[%c0_5, %c0_6] : memref<24x128xf32, #tpu.memory_space<vmem>>, vector<1x32xf32>
    %19 = vector.broadcast %18 : vector<1x32xf32> to vector<16x32xf32>
    %20 = arith.addf %17, %19 : vector<16x32xf32>
    %c1 = arith.constant 1 : index
    %c0_7 = arith.constant 0 : index
    %21 = vector.load %arg3[%c1, %c0_7] : memref<24x128xf32, #tpu.memory_space<vmem>>, vector<1x32xf32>
    %c2 = arith.constant 2 : index
    %c0_8 = arith.constant 0 : index
    %22 = vector.load %arg3[%c2, %c0_8] : memref<24x128xf32, #tpu.memory_space<vmem>>, vector<1x32xf32>
    %cst_9 = arith.constant dense<0.000000e+00> : vector<16xf32>
    %23 = vector.multi_reduction <add>, %20, %cst_9 [1] : vector<16x32xf32> to vector<16xf32>
    %24 = vector.shape_cast %23 : vector<16xf32> to vector<16x1xf32>
    %cst_10 = arith.constant 3.200000e+01 : f32
    %25 = vector.broadcast %cst_10 : f32 to vector<16x1xf32>
    %26 = arith.divf %24, %25 : vector<16x1xf32>
    %27 = vector.broadcast %26 : vector<16x1xf32> to vector<16x32xf32>
    %28 = arith.subf %20, %27 : vector<16x32xf32>
    %29 = arith.mulf %28, %28 : vector<16x32xf32>
    %cst_11 = arith.constant dense<0.000000e+00> : vector<16xf32>
    %30 = vector.multi_reduction <add>, %29, %cst_11 [1] : vector<16x32xf32> to vector<16xf32>
    %31 = vector.shape_cast %30 : vector<16xf32> to vector<16x1xf32>
    %cst_12 = arith.constant 3.200000e+01 : f32
    %32 = vector.broadcast %cst_12 : f32 to vector<16x1xf32>
    %33 = arith.divf %31, %32 : vector<16x1xf32>
    %34 = vector.broadcast %26 : vector<16x1xf32> to vector<16x32xf32>
    %35 = arith.subf %20, %34 : vector<16x32xf32>
    %cst_13 = arith.constant 9.99999974E-6 : f32
    %36 = vector.broadcast %cst_13 : f32 to vector<16x1xf32>
    %37 = arith.addf %33, %36 : vector<16x1xf32>
    %38 = math.rsqrt %37 : vector<16x1xf32>
    %39 = vector.broadcast %38 : vector<16x1xf32> to vector<16x32xf32>
    %40 = arith.mulf %35, %39 : vector<16x32xf32>
    %41 = vector.broadcast %21 : vector<1x32xf32> to vector<16x32xf32>
    %42 = arith.mulf %40, %41 : vector<16x32xf32>
    %43 = vector.broadcast %22 : vector<1x32xf32> to vector<16x32xf32>
    %44 = arith.addf %42, %43 : vector<16x32xf32>
    %c0_14 = arith.constant 0 : index
    %c0_15 = arith.constant 0 : index
    %45 = vector.load %arg1[%c0_14, %c0_15] : memref<2x8xf32, #tpu.memory_space<vmem>>, vector<2x8xf32>
    %46 = vector.extract_strided_slice %45 {offsets = [0, 0], sizes = [1, 8], strides = [1, 1]} : vector<2x8xf32> to vector<1x8xf32>
    %47 = vector.extract_strided_slice %45 {offsets = [0, 0], sizes = [1, 8], strides = [1, 1]} : vector<2x8xf32> to vector<1x8xf32>
    %48 = vector.extract_strided_slice %45 {offsets = [1, 0], sizes = [1, 8], strides = [1, 1]} : vector<2x8xf32> to vector<1x8xf32>
    %49 = vector.extract_strided_slice %45 {offsets = [1, 0], sizes = [1, 8], strides = [1, 1]} : vector<2x8xf32> to vector<1x8xf32>
    %50 = vector.shape_cast %46 : vector<1x8xf32> to vector<1x1x8xf32>
    %51 = vector.shape_cast %47 : vector<1x8xf32> to vector<1x1x8xf32>
    %52 = vector.shape_cast %48 : vector<1x8xf32> to vector<1x1x8xf32>
    %53 = vector.shape_cast %49 : vector<1x8xf32> to vector<1x1x8xf32>
    %54 = tpu.concatenate %50, %51, %52, %53 in 0 : vector<1x1x8xf32>, vector<1x1x8xf32>, vector<1x1x8xf32>, vector<1x1x8xf32> -> vector<4x1x8xf32>
    %c120 = arith.constant 120 : index
    %c0_16 = arith.constant 0 : index
    %55 = vector.load %arg4[%c120, %c0_16] : memref<488x128xf32, #tpu.memory_space<vmem>>, vector<32x96xf32>
    %c152 = arith.constant 152 : index
    %c0_17 = arith.constant 0 : index
    %56 = vector.load %arg4[%c152, %c0_17] : memref<488x128xf32, #tpu.memory_space<vmem>>, vector<32x32xf32>
    %c184 = arith.constant 184 : index
    %c0_18 = arith.constant 0 : index
    %57 = vector.load %arg4[%c184, %c0_18] : memref<488x128xf32, #tpu.memory_space<vmem>>, vector<32x64xf32>
    %c216 = arith.constant 216 : index
    %c0_19 = arith.constant 0 : index
    %58 = vector.load %arg4[%c216, %c0_19] : memref<488x128xf32, #tpu.memory_space<vmem>>, vector<64x32xf32>
    %c3 = arith.constant 3 : index
    %c0_20 = arith.constant 0 : index
    %59 = vector.load %arg3[%c3, %c0_20] : memref<24x128xf32, #tpu.memory_space<vmem>>, vector<1x96xf32>
    %c4 = arith.constant 4 : index
    %c0_21 = arith.constant 0 : index
    %60 = vector.load %arg3[%c4, %c0_21] : memref<24x128xf32, #tpu.memory_space<vmem>>, vector<1x32xf32>
    %c5 = arith.constant 5 : index
    %c0_22 = arith.constant 0 : index
    %61 = vector.load %arg3[%c5, %c0_22] : memref<24x128xf32, #tpu.memory_space<vmem>>, vector<1x32xf32>
    %c6 = arith.constant 6 : index
    %c0_23 = arith.constant 0 : index
    %62 = vector.load %arg3[%c6, %c0_23] : memref<24x128xf32, #tpu.memory_space<vmem>>, vector<1x32xf32>
    %c7 = arith.constant 7 : index
    %c0_24 = arith.constant 0 : index
    %63 = vector.load %arg3[%c7, %c0_24] : memref<24x128xf32, #tpu.memory_space<vmem>>, vector<1x64xf32>
    %c8 = arith.constant 8 : index
    %c0_25 = arith.constant 0 : index
    %64 = vector.load %arg3[%c8, %c0_25] : memref<24x128xf32, #tpu.memory_space<vmem>>, vector<1x32xf32>
    %c9 = arith.constant 9 : index
    %c0_26 = arith.constant 0 : index
    %65 = vector.load %arg3[%c9, %c0_26] : memref<24x128xf32, #tpu.memory_space<vmem>>, vector<1x32xf32>
    %c10 = arith.constant 10 : index
    %c0_27 = arith.constant 0 : index
    %66 = vector.load %arg3[%c10, %c0_27] : memref<24x128xf32, #tpu.memory_space<vmem>>, vector<1x32xf32>
    %cst_28 = arith.constant dense<0.000000e+00> : vector<16x96xf32>
    %67 = tpu.matmul %44, %55, %cst_28 {dimension_numbers = #tpu.dot_dimension_numbers<[1], [0], [0], [1], [0, 0, 1, 1], [], []>} : vector<16x32xf32>, vector<32x96xf32>, vector<16x96xf32> -> vector<16x96xf32>
    %68 = vector.broadcast %59 : vector<1x96xf32> to vector<16x96xf32>
    %69 = arith.addf %67, %68 : vector<16x96xf32>
    %70 = vector.extract_strided_slice %69 {offsets = [0, 0], sizes = [8, 16], strides = [1, 1]} : vector<16x96xf32> to vector<8x16xf32>
    %71 = vector.extract_strided_slice %69 {offsets = [0, 16], sizes = [8, 16], strides = [1, 1]} : vector<16x96xf32> to vector<8x16xf32>
    %72 = vector.extract_strided_slice %69 {offsets = [8, 0], sizes = [8, 16], strides = [1, 1]} : vector<16x96xf32> to vector<8x16xf32>
    %73 = vector.extract_strided_slice %69 {offsets = [8, 16], sizes = [8, 16], strides = [1, 1]} : vector<16x96xf32> to vector<8x16xf32>
    %74 = vector.shape_cast %70 : vector<8x16xf32> to vector<1x8x16xf32>
    %75 = vector.shape_cast %71 : vector<8x16xf32> to vector<1x8x16xf32>
    %76 = vector.shape_cast %72 : vector<8x16xf32> to vector<1x8x16xf32>
    %77 = vector.shape_cast %73 : vector<8x16xf32> to vector<1x8x16xf32>
    %78 = tpu.concatenate %74, %75, %76, %77 in 0 : vector<1x8x16xf32>, vector<1x8x16xf32>, vector<1x8x16xf32>, vector<1x8x16xf32> -> vector<4x8x16xf32>
    %79 = vector.extract_strided_slice %69 {offsets = [0, 32], sizes = [8, 16], strides = [1, 1]} : vector<16x96xf32> to vector<8x16xf32>
    %80 = vector.extract_strided_slice %69 {offsets = [0, 48], sizes = [8, 16], strides = [1, 1]} : vector<16x96xf32> to vector<8x16xf32>
    %81 = vector.extract_strided_slice %69 {offsets = [8, 32], sizes = [8, 16], strides = [1, 1]} : vector<16x96xf32> to vector<8x16xf32>
    %82 = vector.extract_strided_slice %69 {offsets = [8, 48], sizes = [8, 16], strides = [1, 1]} : vector<16x96xf32> to vector<8x16xf32>
    %83 = vector.shape_cast %79 : vector<8x16xf32> to vector<1x8x16xf32>
    %84 = vector.shape_cast %80 : vector<8x16xf32> to vector<1x8x16xf32>
    %85 = vector.shape_cast %81 : vector<8x16xf32> to vector<1x8x16xf32>
    %86 = vector.shape_cast %82 : vector<8x16xf32> to vector<1x8x16xf32>
    %87 = tpu.concatenate %83, %84, %85, %86 in 0 : vector<1x8x16xf32>, vector<1x8x16xf32>, vector<1x8x16xf32>, vector<1x8x16xf32> -> vector<4x8x16xf32>
    %88 = vector.extract_strided_slice %69 {offsets = [0, 64], sizes = [8, 16], strides = [1, 1]} : vector<16x96xf32> to vector<8x16xf32>
    %89 = vector.extract_strided_slice %69 {offsets = [0, 80], sizes = [8, 16], strides = [1, 1]} : vector<16x96xf32> to vector<8x16xf32>
    %90 = vector.extract_strided_slice %69 {offsets = [8, 64], sizes = [8, 16], strides = [1, 1]} : vector<16x96xf32> to vector<8x16xf32>
    %91 = vector.extract_strided_slice %69 {offsets = [8, 80], sizes = [8, 16], strides = [1, 1]} : vector<16x96xf32> to vector<8x16xf32>
    %92 = vector.shape_cast %88 : vector<8x16xf32> to vector<1x8x16xf32>
    %93 = vector.shape_cast %89 : vector<8x16xf32> to vector<1x8x16xf32>
    %94 = vector.shape_cast %90 : vector<8x16xf32> to vector<1x8x16xf32>
    %95 = vector.shape_cast %91 : vector<8x16xf32> to vector<1x8x16xf32>
    %96 = tpu.concatenate %92, %93, %94, %95 in 0 : vector<1x8x16xf32>, vector<1x8x16xf32>, vector<1x8x16xf32>, vector<1x8x16xf32> -> vector<4x8x16xf32>
    "tpu.trace_start"() <{level = 10 : i32, message = "bqd,bkd->bqk"}> : () -> ()
    %cst_29 = arith.constant dense<0.000000e+00> : vector<4x8x8xf32>
    %97 = tpu.matmul %78, %87, %cst_29 {dimension_numbers = #tpu.dot_dimension_numbers<[2], [2], [1], [1], [0, 0, 0, 1, 1, 1], [0], [0]>} : vector<4x8x16xf32>, vector<4x8x16xf32>, vector<4x8x8xf32> -> vector<4x8x8xf32>
    "tpu.trace_stop"() : () -> ()
    %cst_30 = arith.constant 2.500000e-01 : f32
    %98 = vector.broadcast %cst_30 : f32 to vector<4x8x8xf32>
    %99 = arith.mulf %97, %98 : vector<4x8x8xf32>
    %100 = vector.broadcast %54 : vector<4x1x8xf32> to vector<4x8x8xf32>
    %101 = arith.addf %99, %100 : vector<4x8x8xf32>
    %cst_31 = arith.constant dense<0xFF800000> : vector<4x8xf32>
    %102 = vector.multi_reduction <maximumf>, %101, %cst_31 [2] : vector<4x8x8xf32> to vector<4x8xf32>
    %103 = vector.shape_cast %102 : vector<4x8xf32> to vector<4x8x1xf32>
    %104 = vector.broadcast %103 : vector<4x8x1xf32> to vector<4x8x8xf32>
    %105 = arith.subf %101, %104 : vector<4x8x8xf32>
    %106 = math.exp %105 : vector<4x8x8xf32>
    %cst_32 = arith.constant dense<0.000000e+00> : vector<4x8xf32>
    %107 = vector.multi_reduction <add>, %106, %cst_32 [2] : vector<4x8x8xf32> to vector<4x8xf32>
    %108 = vector.shape_cast %107 : vector<4x8xf32> to vector<4x8x1xf32>
    %109 = tpu.reciprocal %108 {approx = true} : vector<4x8x1xf32> -> vector<4x8x1xf32>
    %110 = vector.broadcast %109 : vector<4x8x1xf32> to vector<4x8x8xf32>
    %111 = arith.mulf %106, %110 : vector<4x8x8xf32>
    "tpu.trace_start"() <{level = 10 : i32, message = "bqk,bkd->bqd"}> : () -> ()
    %cst_33 = arith.constant dense<0.000000e+00> : vector<4x8x16xf32>
    %112 = tpu.matmul %111, %96, %cst_33 {dimension_numbers = #tpu.dot_dimension_numbers<[2], [1], [1], [2], [0, 0, 0, 1, 1, 2], [0], [0]>} : vector<4x8x8xf32>, vector<4x8x16xf32>, vector<4x8x16xf32> -> vector<4x8x16xf32>
    "tpu.trace_stop"() : () -> ()
    %113 = vector.extract_strided_slice %112 {offsets = [0, 0, 0], sizes = [1, 8, 16], strides = [1, 1, 1]} : vector<4x8x16xf32> to vector<1x8x16xf32>
    %114 = vector.shape_cast %113 : vector<1x8x16xf32> to vector<8x16xf32>
    %115 = vector.extract_strided_slice %112 {offsets = [1, 0, 0], sizes = [1, 8, 16], strides = [1, 1, 1]} : vector<4x8x16xf32> to vector<1x8x16xf32>
    %116 = vector.shape_cast %115 : vector<1x8x16xf32> to vector<8x16xf32>
    %117 = tpu.concatenate %114, %116 in 1 : vector<8x16xf32>, vector<8x16xf32> -> vector<8x32xf32>
    %118 = vector.extract_strided_slice %112 {offsets = [2, 0, 0], sizes = [1, 8, 16], strides = [1, 1, 1]} : vector<4x8x16xf32> to vector<1x8x16xf32>
    %119 = vector.shape_cast %118 : vector<1x8x16xf32> to vector<8x16xf32>
    %120 = vector.extract_strided_slice %112 {offsets = [3, 0, 0], sizes = [1, 8, 16], strides = [1, 1, 1]} : vector<4x8x16xf32> to vector<1x8x16xf32>
    %121 = vector.shape_cast %120 : vector<1x8x16xf32> to vector<8x16xf32>
    %122 = tpu.concatenate %119, %121 in 1 : vector<8x16xf32>, vector<8x16xf32> -> vector<8x32xf32>
    %123 = tpu.concatenate %117, %122 in 0 : vector<8x32xf32>, vector<8x32xf32> -> vector<16x32xf32>
    %cst_34 = arith.constant dense<0.000000e+00> : vector<16x32xf32>
    %124 = tpu.matmul %123, %56, %cst_34 {dimension_numbers = #tpu.dot_dimension_numbers<[1], [0], [0], [1], [0, 0, 1, 1], [], []>} : vector<16x32xf32>, vector<32x32xf32>, vector<16x32xf32> -> vector<16x32xf32>
    %125 = vector.broadcast %60 : vector<1x32xf32> to vector<16x32xf32>
    %126 = arith.addf %124, %125 : vector<16x32xf32>
    %127 = arith.addf %44, %126 : vector<16x32xf32>
    %cst_35 = arith.constant dense<0.000000e+00> : vector<16xf32>
    %128 = vector.multi_reduction <add>, %127, %cst_35 [1] : vector<16x32xf32> to vector<16xf32>
    %129 = vector.shape_cast %128 : vector<16xf32> to vector<16x1xf32>
    %cst_36 = arith.constant 3.200000e+01 : f32
    %130 = vector.broadcast %cst_36 : f32 to vector<16x1xf32>
    %131 = arith.divf %129, %130 : vector<16x1xf32>
    %132 = vector.broadcast %131 : vector<16x1xf32> to vector<16x32xf32>
    %133 = arith.subf %127, %132 : vector<16x32xf32>
    %134 = arith.mulf %133, %133 : vector<16x32xf32>
    %cst_37 = arith.constant dense<0.000000e+00> : vector<16xf32>
    %135 = vector.multi_reduction <add>, %134, %cst_37 [1] : vector<16x32xf32> to vector<16xf32>
    %136 = vector.shape_cast %135 : vector<16xf32> to vector<16x1xf32>
    %cst_38 = arith.constant 3.200000e+01 : f32
    %137 = vector.broadcast %cst_38 : f32 to vector<16x1xf32>
    %138 = arith.divf %136, %137 : vector<16x1xf32>
    %139 = vector.broadcast %131 : vector<16x1xf32> to vector<16x32xf32>
    %140 = arith.subf %127, %139 : vector<16x32xf32>
    %cst_39 = arith.constant 9.99999974E-6 : f32
    %141 = vector.broadcast %cst_39 : f32 to vector<16x1xf32>
    %142 = arith.addf %138, %141 : vector<16x1xf32>
    %143 = math.rsqrt %142 : vector<16x1xf32>
    %144 = vector.broadcast %143 : vector<16x1xf32> to vector<16x32xf32>
    %145 = arith.mulf %140, %144 : vector<16x32xf32>
    %146 = vector.broadcast %61 : vector<1x32xf32> to vector<16x32xf32>
    %147 = arith.mulf %145, %146 : vector<16x32xf32>
    %148 = vector.broadcast %62 : vector<1x32xf32> to vector<16x32xf32>
    %149 = arith.addf %147, %148 : vector<16x32xf32>
    %cst_40 = arith.constant dense<0.000000e+00> : vector<16x64xf32>
    %150 = tpu.matmul %149, %57, %cst_40 {dimension_numbers = #tpu.dot_dimension_numbers<[1], [0], [0], [1], [0, 0, 1, 1], [], []>} : vector<16x32xf32>, vector<32x64xf32>, vector<16x64xf32> -> vector<16x64xf32>
    %151 = vector.broadcast %63 : vector<1x64xf32> to vector<16x64xf32>
    %152 = arith.addf %150, %151 : vector<16x64xf32>
    %cst_41 = arith.constant 5.000000e-01 : f32
    %153 = vector.broadcast %cst_41 : f32 to vector<16x64xf32>
    %154 = arith.mulf %153, %152 : vector<16x64xf32>
    %cst_42 = arith.constant 0.707106769 : f32
    %155 = vector.broadcast %cst_42 : f32 to vector<16x64xf32>
    %156 = arith.mulf %152, %155 : vector<16x64xf32>
    %157 = math.absf %156 : vector<16x64xf32>
    %cst_43 = arith.constant 0.327591091 : f32
    %158 = vector.broadcast %cst_43 : f32 to vector<16x64xf32>
    %159 = arith.mulf %158, %157 : vector<16x64xf32>
    %cst_44 = arith.constant 1.000000e+00 : f32
    %160 = vector.broadcast %cst_44 : f32 to vector<16x64xf32>
    %161 = arith.addf %160, %159 : vector<16x64xf32>
    %cst_45 = arith.constant 1.000000e+00 : f32
    %162 = vector.broadcast %cst_45 : f32 to vector<16x64xf32>
    %163 = arith.divf %162, %161 : vector<16x64xf32>
    %cst_46 = arith.constant 1.06140542 : f32
    %164 = vector.broadcast %cst_46 : f32 to vector<16x64xf32>
    %165 = arith.mulf %164, %163 : vector<16x64xf32>
    %cst_47 = arith.constant -1.45315206 : f32
    %166 = vector.broadcast %cst_47 : f32 to vector<16x64xf32>
    %167 = arith.addf %165, %166 : vector<16x64xf32>
    %168 = arith.mulf %167, %163 : vector<16x64xf32>
    %cst_48 = arith.constant 1.42141378 : f32
    %169 = vector.broadcast %cst_48 : f32 to vector<16x64xf32>
    %170 = arith.addf %168, %169 : vector<16x64xf32>
    %171 = arith.mulf %170, %163 : vector<16x64xf32>
    %cst_49 = arith.constant -0.284496725 : f32
    %172 = vector.broadcast %cst_49 : f32 to vector<16x64xf32>
    %173 = arith.addf %171, %172 : vector<16x64xf32>
    %174 = arith.mulf %173, %163 : vector<16x64xf32>
    %cst_50 = arith.constant 0.254829586 : f32
    %175 = vector.broadcast %cst_50 : f32 to vector<16x64xf32>
    %176 = arith.addf %174, %175 : vector<16x64xf32>
    %177 = arith.mulf %176, %163 : vector<16x64xf32>
    %cst_51 = arith.constant 0.000000e+00 : f32
    %178 = vector.broadcast %cst_51 : f32 to vector<16x64xf32>
    %179 = arith.subf %178, %157 : vector<16x64xf32>
    %180 = arith.mulf %179, %157 : vector<16x64xf32>
    %181 = math.exp %180 : vector<16x64xf32>
    %182 = arith.mulf %177, %181 : vector<16x64xf32>
    %cst_52 = arith.constant 1.000000e+00 : f32
    %183 = vector.broadcast %cst_52 : f32 to vector<16x64xf32>
    %184 = arith.subf %183, %182 : vector<16x64xf32>
    %cst_53 = arith.constant 0.000000e+00 : f32
    %185 = vector.broadcast %cst_53 : f32 to vector<16x64xf32>
    %186 = arith.cmpf oge, %156, %185 : vector<16x64xf32>
    %cst_54 = arith.constant 0.000000e+00 : f32
    %187 = vector.broadcast %cst_54 : f32 to vector<16x64xf32>
    %188 = arith.subf %187, %184 : vector<16x64xf32>
    %189 = arith.select %186, %184, %188 : vector<16x64xi1>, vector<16x64xf32>
    %cst_55 = arith.constant 1.000000e+00 : f32
    %190 = vector.broadcast %cst_55 : f32 to vector<16x64xf32>
    %191 = arith.addf %190, %189 : vector<16x64xf32>
    %192 = arith.mulf %154, %191 : vector<16x64xf32>
    %cst_56 = arith.constant dense<0.000000e+00> : vector<16x32xf32>
    %193 = tpu.matmul %192, %58, %cst_56 {dimension_numbers = #tpu.dot_dimension_numbers<[1], [0], [0], [1], [0, 0, 1, 1], [], []>} : vector<16x64xf32>, vector<64x32xf32>, vector<16x32xf32> -> vector<16x32xf32>
    %194 = vector.broadcast %64 : vector<1x32xf32> to vector<16x32xf32>
    %195 = arith.addf %193, %194 : vector<16x32xf32>
    %196 = arith.addf %149, %195 : vector<16x32xf32>
    %cst_57 = arith.constant dense<0.000000e+00> : vector<16xf32>
    %197 = vector.multi_reduction <add>, %196, %cst_57 [1] : vector<16x32xf32> to vector<16xf32>
    %198 = vector.shape_cast %197 : vector<16xf32> to vector<16x1xf32>
    %cst_58 = arith.constant 3.200000e+01 : f32
    %199 = vector.broadcast %cst_58 : f32 to vector<16x1xf32>
    %200 = arith.divf %198, %199 : vector<16x1xf32>
    %201 = vector.broadcast %200 : vector<16x1xf32> to vector<16x32xf32>
    %202 = arith.subf %196, %201 : vector<16x32xf32>
    %203 = arith.mulf %202, %202 : vector<16x32xf32>
    %cst_59 = arith.constant dense<0.000000e+00> : vector<16xf32>
    %204 = vector.multi_reduction <add>, %203, %cst_59 [1] : vector<16x32xf32> to vector<16xf32>
    %205 = vector.shape_cast %204 : vector<16xf32> to vector<16x1xf32>
    %cst_60 = arith.constant 3.200000e+01 : f32
    %206 = vector.broadcast %cst_60 : f32 to vector<16x1xf32>
    %207 = arith.divf %205, %206 : vector<16x1xf32>
    %208 = vector.broadcast %200 : vector<16x1xf32> to vector<16x32xf32>
    %209 = arith.subf %196, %208 : vector<16x32xf32>
    %cst_61 = arith.constant 9.99999974E-6 : f32
    %210 = vector.broadcast %cst_61 : f32 to vector<16x1xf32>
    %211 = arith.addf %207, %210 : vector<16x1xf32>
    %212 = math.rsqrt %211 : vector<16x1xf32>
    %213 = vector.broadcast %212 : vector<16x1xf32> to vector<16x32xf32>
    %214 = arith.mulf %209, %213 : vector<16x32xf32>
    %215 = vector.broadcast %65 : vector<1x32xf32> to vector<16x32xf32>
    %216 = arith.mulf %214, %215 : vector<16x32xf32>
    %217 = vector.broadcast %66 : vector<1x32xf32> to vector<16x32xf32>
    %218 = arith.addf %216, %217 : vector<16x32xf32>
    %c280 = arith.constant 280 : index
    %c0_62 = arith.constant 0 : index
    %219 = vector.load %arg4[%c280, %c0_62] : memref<488x128xf32, #tpu.memory_space<vmem>>, vector<32x96xf32>
    %c312 = arith.constant 312 : index
    %c0_63 = arith.constant 0 : index
    %220 = vector.load %arg4[%c312, %c0_63] : memref<488x128xf32, #tpu.memory_space<vmem>>, vector<32x32xf32>
    %c344 = arith.constant 344 : index
    %c0_64 = arith.constant 0 : index
    %221 = vector.load %arg4[%c344, %c0_64] : memref<488x128xf32, #tpu.memory_space<vmem>>, vector<32x64xf32>
    %c376 = arith.constant 376 : index
    %c0_65 = arith.constant 0 : index
    %222 = vector.load %arg4[%c376, %c0_65] : memref<488x128xf32, #tpu.memory_space<vmem>>, vector<64x32xf32>
    %c11 = arith.constant 11 : index
    %c0_66 = arith.constant 0 : index
    %223 = vector.load %arg3[%c11, %c0_66] : memref<24x128xf32, #tpu.memory_space<vmem>>, vector<1x96xf32>
    %c12 = arith.constant 12 : index
    %c0_67 = arith.constant 0 : index
    %224 = vector.load %arg3[%c12, %c0_67] : memref<24x128xf32, #tpu.memory_space<vmem>>, vector<1x32xf32>
    %c13 = arith.constant 13 : index
    %c0_68 = arith.constant 0 : index
    %225 = vector.load %arg3[%c13, %c0_68] : memref<24x128xf32, #tpu.memory_space<vmem>>, vector<1x32xf32>
    %c14 = arith.constant 14 : index
    %c0_69 = arith.constant 0 : index
    %226 = vector.load %arg3[%c14, %c0_69] : memref<24x128xf32, #tpu.memory_space<vmem>>, vector<1x32xf32>
    %c15 = arith.constant 15 : index
    %c0_70 = arith.constant 0 : index
    %227 = vector.load %arg3[%c15, %c0_70] : memref<24x128xf32, #tpu.memory_space<vmem>>, vector<1x64xf32>
    %c16 = arith.constant 16 : index
    %c0_71 = arith.constant 0 : index
    %228 = vector.load %arg3[%c16, %c0_71] : memref<24x128xf32, #tpu.memory_space<vmem>>, vector<1x32xf32>
    %c17 = arith.constant 17 : index
    %c0_72 = arith.constant 0 : index
    %229 = vector.load %arg3[%c17, %c0_72] : memref<24x128xf32, #tpu.memory_space<vmem>>, vector<1x32xf32>
    %c18 = arith.constant 18 : index
    %c0_73 = arith.constant 0 : index
    %230 = vector.load %arg3[%c18, %c0_73] : memref<24x128xf32, #tpu.memory_space<vmem>>, vector<1x32xf32>
    %cst_74 = arith.constant dense<0.000000e+00> : vector<16x96xf32>
    %231 = tpu.matmul %218, %219, %cst_74 {dimension_numbers = #tpu.dot_dimension_numbers<[1], [0], [0], [1], [0, 0, 1, 1], [], []>} : vector<16x32xf32>, vector<32x96xf32>, vector<16x96xf32> -> vector<16x96xf32>
    %232 = vector.broadcast %223 : vector<1x96xf32> to vector<16x96xf32>
    %233 = arith.addf %231, %232 : vector<16x96xf32>
    %234 = vector.extract_strided_slice %233 {offsets = [0, 0], sizes = [8, 16], strides = [1, 1]} : vector<16x96xf32> to vector<8x16xf32>
    %235 = vector.extract_strided_slice %233 {offsets = [0, 16], sizes = [8, 16], strides = [1, 1]} : vector<16x96xf32> to vector<8x16xf32>
    %236 = vector.extract_strided_slice %233 {offsets = [8, 0], sizes = [8, 16], strides = [1, 1]} : vector<16x96xf32> to vector<8x16xf32>
    %237 = vector.extract_strided_slice %233 {offsets = [8, 16], sizes = [8, 16], strides = [1, 1]} : vector<16x96xf32> to vector<8x16xf32>
    %238 = vector.shape_cast %234 : vector<8x16xf32> to vector<1x8x16xf32>
    %239 = vector.shape_cast %235 : vector<8x16xf32> to vector<1x8x16xf32>
    %240 = vector.shape_cast %236 : vector<8x16xf32> to vector<1x8x16xf32>
    %241 = vector.shape_cast %237 : vector<8x16xf32> to vector<1x8x16xf32>
    %242 = tpu.concatenate %238, %239, %240, %241 in 0 : vector<1x8x16xf32>, vector<1x8x16xf32>, vector<1x8x16xf32>, vector<1x8x16xf32> -> vector<4x8x16xf32>
    %243 = vector.extract_strided_slice %233 {offsets = [0, 32], sizes = [8, 16], strides = [1, 1]} : vector<16x96xf32> to vector<8x16xf32>
    %244 = vector.extract_strided_slice %233 {offsets = [0, 48], sizes = [8, 16], strides = [1, 1]} : vector<16x96xf32> to vector<8x16xf32>
    %245 = vector.extract_strided_slice %233 {offsets = [8, 32], sizes = [8, 16], strides = [1, 1]} : vector<16x96xf32> to vector<8x16xf32>
    %246 = vector.extract_strided_slice %233 {offsets = [8, 48], sizes = [8, 16], strides = [1, 1]} : vector<16x96xf32> to vector<8x16xf32>
    %247 = vector.shape_cast %243 : vector<8x16xf32> to vector<1x8x16xf32>
    %248 = vector.shape_cast %244 : vector<8x16xf32> to vector<1x8x16xf32>
    %249 = vector.shape_cast %245 : vector<8x16xf32> to vector<1x8x16xf32>
    %250 = vector.shape_cast %246 : vector<8x16xf32> to vector<1x8x16xf32>
    %251 = tpu.concatenate %247, %248, %249, %250 in 0 : vector<1x8x16xf32>, vector<1x8x16xf32>, vector<1x8x16xf32>, vector<1x8x16xf32> -> vector<4x8x16xf32>
    %252 = vector.extract_strided_slice %233 {offsets = [0, 64], sizes = [8, 16], strides = [1, 1]} : vector<16x96xf32> to vector<8x16xf32>
    %253 = vector.extract_strided_slice %233 {offsets = [0, 80], sizes = [8, 16], strides = [1, 1]} : vector<16x96xf32> to vector<8x16xf32>
    %254 = vector.extract_strided_slice %233 {offsets = [8, 64], sizes = [8, 16], strides = [1, 1]} : vector<16x96xf32> to vector<8x16xf32>
    %255 = vector.extract_strided_slice %233 {offsets = [8, 80], sizes = [8, 16], strides = [1, 1]} : vector<16x96xf32> to vector<8x16xf32>
    %256 = vector.shape_cast %252 : vector<8x16xf32> to vector<1x8x16xf32>
    %257 = vector.shape_cast %253 : vector<8x16xf32> to vector<1x8x16xf32>
    %258 = vector.shape_cast %254 : vector<8x16xf32> to vector<1x8x16xf32>
    %259 = vector.shape_cast %255 : vector<8x16xf32> to vector<1x8x16xf32>
    %260 = tpu.concatenate %256, %257, %258, %259 in 0 : vector<1x8x16xf32>, vector<1x8x16xf32>, vector<1x8x16xf32>, vector<1x8x16xf32> -> vector<4x8x16xf32>
    "tpu.trace_start"() <{level = 10 : i32, message = "bqd,bkd->bqk"}> : () -> ()
    %cst_75 = arith.constant dense<0.000000e+00> : vector<4x8x8xf32>
    %261 = tpu.matmul %242, %251, %cst_75 {dimension_numbers = #tpu.dot_dimension_numbers<[2], [2], [1], [1], [0, 0, 0, 1, 1, 1], [0], [0]>} : vector<4x8x16xf32>, vector<4x8x16xf32>, vector<4x8x8xf32> -> vector<4x8x8xf32>
    "tpu.trace_stop"() : () -> ()
    %cst_76 = arith.constant 2.500000e-01 : f32
    %262 = vector.broadcast %cst_76 : f32 to vector<4x8x8xf32>
    %263 = arith.mulf %261, %262 : vector<4x8x8xf32>
    %264 = vector.broadcast %54 : vector<4x1x8xf32> to vector<4x8x8xf32>
    %265 = arith.addf %263, %264 : vector<4x8x8xf32>
    %cst_77 = arith.constant dense<0xFF800000> : vector<4x8xf32>
    %266 = vector.multi_reduction <maximumf>, %265, %cst_77 [2] : vector<4x8x8xf32> to vector<4x8xf32>
    %267 = vector.shape_cast %266 : vector<4x8xf32> to vector<4x8x1xf32>
    %268 = vector.broadcast %267 : vector<4x8x1xf32> to vector<4x8x8xf32>
    %269 = arith.subf %265, %268 : vector<4x8x8xf32>
    %270 = math.exp %269 : vector<4x8x8xf32>
    %cst_78 = arith.constant dense<0.000000e+00> : vector<4x8xf32>
    %271 = vector.multi_reduction <add>, %270, %cst_78 [2] : vector<4x8x8xf32> to vector<4x8xf32>
    %272 = vector.shape_cast %271 : vector<4x8xf32> to vector<4x8x1xf32>
    %273 = tpu.reciprocal %272 {approx = true} : vector<4x8x1xf32> -> vector<4x8x1xf32>
    %274 = vector.broadcast %273 : vector<4x8x1xf32> to vector<4x8x8xf32>
    %275 = arith.mulf %270, %274 : vector<4x8x8xf32>
    "tpu.trace_start"() <{level = 10 : i32, message = "bqk,bkd->bqd"}> : () -> ()
    %cst_79 = arith.constant dense<0.000000e+00> : vector<4x8x16xf32>
    %276 = tpu.matmul %275, %260, %cst_79 {dimension_numbers = #tpu.dot_dimension_numbers<[2], [1], [1], [2], [0, 0, 0, 1, 1, 2], [0], [0]>} : vector<4x8x8xf32>, vector<4x8x16xf32>, vector<4x8x16xf32> -> vector<4x8x16xf32>
    "tpu.trace_stop"() : () -> ()
    %277 = vector.extract_strided_slice %276 {offsets = [0, 0, 0], sizes = [1, 8, 16], strides = [1, 1, 1]} : vector<4x8x16xf32> to vector<1x8x16xf32>
    %278 = vector.shape_cast %277 : vector<1x8x16xf32> to vector<8x16xf32>
    %279 = vector.extract_strided_slice %276 {offsets = [1, 0, 0], sizes = [1, 8, 16], strides = [1, 1, 1]} : vector<4x8x16xf32> to vector<1x8x16xf32>
    %280 = vector.shape_cast %279 : vector<1x8x16xf32> to vector<8x16xf32>
    %281 = tpu.concatenate %278, %280 in 1 : vector<8x16xf32>, vector<8x16xf32> -> vector<8x32xf32>
    %282 = vector.extract_strided_slice %276 {offsets = [2, 0, 0], sizes = [1, 8, 16], strides = [1, 1, 1]} : vector<4x8x16xf32> to vector<1x8x16xf32>
    %283 = vector.shape_cast %282 : vector<1x8x16xf32> to vector<8x16xf32>
    %284 = vector.extract_strided_slice %276 {offsets = [3, 0, 0], sizes = [1, 8, 16], strides = [1, 1, 1]} : vector<4x8x16xf32> to vector<1x8x16xf32>
    %285 = vector.shape_cast %284 : vector<1x8x16xf32> to vector<8x16xf32>
    %286 = tpu.concatenate %283, %285 in 1 : vector<8x16xf32>, vector<8x16xf32> -> vector<8x32xf32>
    %287 = tpu.concatenate %281, %286 in 0 : vector<8x32xf32>, vector<8x32xf32> -> vector<16x32xf32>
    %cst_80 = arith.constant dense<0.000000e+00> : vector<16x32xf32>
    %288 = tpu.matmul %287, %220, %cst_80 {dimension_numbers = #tpu.dot_dimension_numbers<[1], [0], [0], [1], [0, 0, 1, 1], [], []>} : vector<16x32xf32>, vector<32x32xf32>, vector<16x32xf32> -> vector<16x32xf32>
    %289 = vector.broadcast %224 : vector<1x32xf32> to vector<16x32xf32>
    %290 = arith.addf %288, %289 : vector<16x32xf32>
    %291 = arith.addf %218, %290 : vector<16x32xf32>
    %cst_81 = arith.constant dense<0.000000e+00> : vector<16xf32>
    %292 = vector.multi_reduction <add>, %291, %cst_81 [1] : vector<16x32xf32> to vector<16xf32>
    %293 = vector.shape_cast %292 : vector<16xf32> to vector<16x1xf32>
    %cst_82 = arith.constant 3.200000e+01 : f32
    %294 = vector.broadcast %cst_82 : f32 to vector<16x1xf32>
    %295 = arith.divf %293, %294 : vector<16x1xf32>
    %296 = vector.broadcast %295 : vector<16x1xf32> to vector<16x32xf32>
    %297 = arith.subf %291, %296 : vector<16x32xf32>
    %298 = arith.mulf %297, %297 : vector<16x32xf32>
    %cst_83 = arith.constant dense<0.000000e+00> : vector<16xf32>
    %299 = vector.multi_reduction <add>, %298, %cst_83 [1] : vector<16x32xf32> to vector<16xf32>
    %300 = vector.shape_cast %299 : vector<16xf32> to vector<16x1xf32>
    %cst_84 = arith.constant 3.200000e+01 : f32
    %301 = vector.broadcast %cst_84 : f32 to vector<16x1xf32>
    %302 = arith.divf %300, %301 : vector<16x1xf32>
    %303 = vector.broadcast %295 : vector<16x1xf32> to vector<16x32xf32>
    %304 = arith.subf %291, %303 : vector<16x32xf32>
    %cst_85 = arith.constant 9.99999974E-6 : f32
    %305 = vector.broadcast %cst_85 : f32 to vector<16x1xf32>
    %306 = arith.addf %302, %305 : vector<16x1xf32>
    %307 = math.rsqrt %306 : vector<16x1xf32>
    %308 = vector.broadcast %307 : vector<16x1xf32> to vector<16x32xf32>
    %309 = arith.mulf %304, %308 : vector<16x32xf32>
    %310 = vector.broadcast %225 : vector<1x32xf32> to vector<16x32xf32>
    %311 = arith.mulf %309, %310 : vector<16x32xf32>
    %312 = vector.broadcast %226 : vector<1x32xf32> to vector<16x32xf32>
    %313 = arith.addf %311, %312 : vector<16x32xf32>
    %cst_86 = arith.constant dense<0.000000e+00> : vector<16x64xf32>
    %314 = tpu.matmul %313, %221, %cst_86 {dimension_numbers = #tpu.dot_dimension_numbers<[1], [0], [0], [1], [0, 0, 1, 1], [], []>} : vector<16x32xf32>, vector<32x64xf32>, vector<16x64xf32> -> vector<16x64xf32>
    %315 = vector.broadcast %227 : vector<1x64xf32> to vector<16x64xf32>
    %316 = arith.addf %314, %315 : vector<16x64xf32>
    %cst_87 = arith.constant 5.000000e-01 : f32
    %317 = vector.broadcast %cst_87 : f32 to vector<16x64xf32>
    %318 = arith.mulf %317, %316 : vector<16x64xf32>
    %cst_88 = arith.constant 0.707106769 : f32
    %319 = vector.broadcast %cst_88 : f32 to vector<16x64xf32>
    %320 = arith.mulf %316, %319 : vector<16x64xf32>
    %321 = math.absf %320 : vector<16x64xf32>
    %cst_89 = arith.constant 0.327591091 : f32
    %322 = vector.broadcast %cst_89 : f32 to vector<16x64xf32>
    %323 = arith.mulf %322, %321 : vector<16x64xf32>
    %cst_90 = arith.constant 1.000000e+00 : f32
    %324 = vector.broadcast %cst_90 : f32 to vector<16x64xf32>
    %325 = arith.addf %324, %323 : vector<16x64xf32>
    %cst_91 = arith.constant 1.000000e+00 : f32
    %326 = vector.broadcast %cst_91 : f32 to vector<16x64xf32>
    %327 = arith.divf %326, %325 : vector<16x64xf32>
    %cst_92 = arith.constant 1.06140542 : f32
    %328 = vector.broadcast %cst_92 : f32 to vector<16x64xf32>
    %329 = arith.mulf %328, %327 : vector<16x64xf32>
    %cst_93 = arith.constant -1.45315206 : f32
    %330 = vector.broadcast %cst_93 : f32 to vector<16x64xf32>
    %331 = arith.addf %329, %330 : vector<16x64xf32>
    %332 = arith.mulf %331, %327 : vector<16x64xf32>
    %cst_94 = arith.constant 1.42141378 : f32
    %333 = vector.broadcast %cst_94 : f32 to vector<16x64xf32>
    %334 = arith.addf %332, %333 : vector<16x64xf32>
    %335 = arith.mulf %334, %327 : vector<16x64xf32>
    %cst_95 = arith.constant -0.284496725 : f32
    %336 = vector.broadcast %cst_95 : f32 to vector<16x64xf32>
    %337 = arith.addf %335, %336 : vector<16x64xf32>
    %338 = arith.mulf %337, %327 : vector<16x64xf32>
    %cst_96 = arith.constant 0.254829586 : f32
    %339 = vector.broadcast %cst_96 : f32 to vector<16x64xf32>
    %340 = arith.addf %338, %339 : vector<16x64xf32>
    %341 = arith.mulf %340, %327 : vector<16x64xf32>
    %cst_97 = arith.constant 0.000000e+00 : f32
    %342 = vector.broadcast %cst_97 : f32 to vector<16x64xf32>
    %343 = arith.subf %342, %321 : vector<16x64xf32>
    %344 = arith.mulf %343, %321 : vector<16x64xf32>
    %345 = math.exp %344 : vector<16x64xf32>
    %346 = arith.mulf %341, %345 : vector<16x64xf32>
    %cst_98 = arith.constant 1.000000e+00 : f32
    %347 = vector.broadcast %cst_98 : f32 to vector<16x64xf32>
    %348 = arith.subf %347, %346 : vector<16x64xf32>
    %cst_99 = arith.constant 0.000000e+00 : f32
    %349 = vector.broadcast %cst_99 : f32 to vector<16x64xf32>
    %350 = arith.cmpf oge, %320, %349 : vector<16x64xf32>
    %cst_100 = arith.constant 0.000000e+00 : f32
    %351 = vector.broadcast %cst_100 : f32 to vector<16x64xf32>
    %352 = arith.subf %351, %348 : vector<16x64xf32>
    %353 = arith.select %350, %348, %352 : vector<16x64xi1>, vector<16x64xf32>
    %cst_101 = arith.constant 1.000000e+00 : f32
    %354 = vector.broadcast %cst_101 : f32 to vector<16x64xf32>
    %355 = arith.addf %354, %353 : vector<16x64xf32>
    %356 = arith.mulf %318, %355 : vector<16x64xf32>
    %cst_102 = arith.constant dense<0.000000e+00> : vector<16x32xf32>
    %357 = tpu.matmul %356, %222, %cst_102 {dimension_numbers = #tpu.dot_dimension_numbers<[1], [0], [0], [1], [0, 0, 1, 1], [], []>} : vector<16x64xf32>, vector<64x32xf32>, vector<16x32xf32> -> vector<16x32xf32>
    %358 = vector.broadcast %228 : vector<1x32xf32> to vector<16x32xf32>
    %359 = arith.addf %357, %358 : vector<16x32xf32>
    %360 = arith.addf %313, %359 : vector<16x32xf32>
    %cst_103 = arith.constant dense<0.000000e+00> : vector<16xf32>
    %361 = vector.multi_reduction <add>, %360, %cst_103 [1] : vector<16x32xf32> to vector<16xf32>
    %362 = vector.shape_cast %361 : vector<16xf32> to vector<16x1xf32>
    %cst_104 = arith.constant 3.200000e+01 : f32
    %363 = vector.broadcast %cst_104 : f32 to vector<16x1xf32>
    %364 = arith.divf %362, %363 : vector<16x1xf32>
    %365 = vector.broadcast %364 : vector<16x1xf32> to vector<16x32xf32>
    %366 = arith.subf %360, %365 : vector<16x32xf32>
    %367 = arith.mulf %366, %366 : vector<16x32xf32>
    %cst_105 = arith.constant dense<0.000000e+00> : vector<16xf32>
    %368 = vector.multi_reduction <add>, %367, %cst_105 [1] : vector<16x32xf32> to vector<16xf32>
    %369 = vector.shape_cast %368 : vector<16xf32> to vector<16x1xf32>
    %cst_106 = arith.constant 3.200000e+01 : f32
    %370 = vector.broadcast %cst_106 : f32 to vector<16x1xf32>
    %371 = arith.divf %369, %370 : vector<16x1xf32>
    %372 = vector.broadcast %364 : vector<16x1xf32> to vector<16x32xf32>
    %373 = arith.subf %360, %372 : vector<16x32xf32>
    %cst_107 = arith.constant 9.99999974E-6 : f32
    %374 = vector.broadcast %cst_107 : f32 to vector<16x1xf32>
    %375 = arith.addf %371, %374 : vector<16x1xf32>
    %376 = math.rsqrt %375 : vector<16x1xf32>
    %377 = vector.broadcast %376 : vector<16x1xf32> to vector<16x32xf32>
    %378 = arith.mulf %373, %377 : vector<16x32xf32>
    %379 = vector.broadcast %229 : vector<1x32xf32> to vector<16x32xf32>
    %380 = arith.mulf %378, %379 : vector<16x32xf32>
    %381 = vector.broadcast %230 : vector<1x32xf32> to vector<16x32xf32>
    %382 = arith.addf %380, %381 : vector<16x32xf32>
    %c440 = arith.constant 440 : index
    %c0_108 = arith.constant 0 : index
    %383 = vector.load %arg4[%c440, %c0_108] : memref<488x128xf32, #tpu.memory_space<vmem>>, vector<32x16xf32>
    %c19 = arith.constant 19 : index
    %c0_109 = arith.constant 0 : index
    %384 = vector.load %arg3[%c19, %c0_109] : memref<24x128xf32, #tpu.memory_space<vmem>>, vector<1x16xf32>
    %c472 = arith.constant 472 : index
    %c0_110 = arith.constant 0 : index
    %385 = vector.load %arg4[%c472, %c0_110] : memref<488x128xf32, #tpu.memory_space<vmem>>, vector<16x3xf32>
    %c20 = arith.constant 20 : index
    %c0_111 = arith.constant 0 : index
    %386 = vector.load %arg3[%c20, %c0_111] : memref<24x128xf32, #tpu.memory_space<vmem>>, vector<1x3xf32>
    %cst_112 = arith.constant dense<0.000000e+00> : vector<16x16xf32>
    %387 = tpu.matmul %382, %383, %cst_112 {dimension_numbers = #tpu.dot_dimension_numbers<[1], [0], [0], [1], [0, 0, 1, 1], [], []>} : vector<16x32xf32>, vector<32x16xf32>, vector<16x16xf32> -> vector<16x16xf32>
    %388 = vector.broadcast %384 : vector<1x16xf32> to vector<16x16xf32>
    %389 = arith.addf %387, %388 : vector<16x16xf32>
    %cst_113 = arith.constant 0.000000e+00 : f32
    %390 = vector.broadcast %cst_113 : f32 to vector<16x16xf32>
    %391 = arith.maximumf %389, %390 : vector<16x16xf32>
    %c0_114 = arith.constant 0 : index
    %c0_115 = arith.constant 0 : index
    %392 = vector.load %arg2[%c0_114, %c0_115] : memref<2x16xf32, #tpu.memory_space<vmem>>, vector<2x16xf32>
    %cst_116 = arith.constant dense<0.000000e+00> : vector<2x16xf32>
    %393 = tpu.matmul %392, %391, %cst_116 {dimension_numbers = #tpu.dot_dimension_numbers<[1], [0], [0], [1], [0, 0, 1, 1], [], []>} : vector<2x16xf32>, vector<16x16xf32>, vector<2x16xf32> -> vector<2x16xf32>
    %cst_117 = arith.constant dense<0.000000e+00> : vector<2x3xf32>
    %394 = tpu.matmul %393, %385, %cst_117 {dimension_numbers = #tpu.dot_dimension_numbers<[1], [0], [0], [1], [0, 0, 1, 1], [], []>} : vector<2x16xf32>, vector<16x3xf32>, vector<2x3xf32> -> vector<2x3xf32>
    %395 = vector.broadcast %386 : vector<1x3xf32> to vector<2x3xf32>
    %396 = arith.addf %394, %395 : vector<2x3xf32>
    %c0_118 = arith.constant 0 : index
    %c0_119 = arith.constant 0 : index
    %397 = vector.load %arg5[%c0_118, %c0_119] : memref<2x3xf32, #tpu.memory_space<vmem>>, vector<2x3xf32>
    tpu.vector_store %arg5[%c0_118, %c0_119], %396 {strides = array<i32>} : memref<2x3xf32, #tpu.memory_space<vmem>>, vector<2x3xf32>,
    return
  }
}

</mosaic_0001>

<llo_original>
// kernel: roberta_sentiment_forward.1
$region0: #{roberta_sentiment_forward.1}
  #allocation0 [shape = 'u32[]', space=smem, size = 0x4, offset = 0x4, fixed_abs, tag = 'smem constant byte address 0x4 - core index']
  #allocation1 [shape = 'u32[144,128]{1,0:T(1,128)}', space=vmem, size = 0x12000, scoped, tag = 'internal scratch']
  %s0 = inlined_call_operand.vmem [shape: s32[16,2], index: 0, kind: input, shape index: {}]
  %s1 = inlined_call_operand.vmem [shape: f32[2,8], index: 1, kind: input, shape index: {}]
  %s2 = inlined_call_operand.vmem [shape: f32[2,16], index: 2, kind: input, shape index: {}]
  %s3 = inlined_call_operand.vmem [shape: f32[24,128], index: 3, kind: input, shape index: {}]
  %s4 = inlined_call_operand.hbm [shape: f32[488,128], index: 4, kind: input, shape index: {}]
  %s5 = inlined_call_operand.hbm [shape: f32[2,3], index: 5, kind: output, shape index: {}]
  %s6 = sld [smem:[#allocation0]]
  $region34: #{roberta_sentiment_forward.1} parent=0
    _
  %s8 = ssub.s32 1, %s6
  %s9 = scalar_select 0, %s8, %s6
  $region1: #{roberta_sentiment_forward.1} parent=0
    #allocation2 [shape = 'u8[249856]{0}', space=vmem, size = 0x3d000, scoped, tag = 'input window, operand 4, single buffered']
    #allocation3 [shape = 's32[1]{0}', space=sflag, size = 0x4, scoped, tag = 'scoped memory for roberta_sentiment_forward.1']
    #allocation4 [shape = 's32[1]{0}', space=sflag, size = 0x4, scoped, tag = 'scoped memory for roberta_sentiment_forward.1']
    #allocation5 [shape = 'u8[1024]{0}', space=vmem, size = 0x400, scoped, tag = 'output window, operand 0, single buffered']
    %10 = vsyncpa [#allocation3], 0
    %11 = vsyncpa [#allocation4], 0
    // Predicated region
    $region2: #{roberta_sentiment_forward.1} parent=1 // pred_check
      _
    $region3: #{roberta_sentiment_forward.1} parent=1 // pred_check_branch
      %13 = sbr.rel (0) target = $region5
    $region4: #{roberta_sentiment_forward.1} parent=1 // pred_region
      _
    $region5: #{roberta_sentiment_forward.1} parent=1 // pred_fallthru
      _
    // Predicated region
    $region6: #{roberta_sentiment_forward.1} parent=1 // pred_check
      _
    $region7: #{roberta_sentiment_forward.1} parent=1 // pred_check_branch
      %15 = sbr.rel (0) target = $region9
    $region8: #{roberta_sentiment_forward.1} parent=1 // pred_region
      _
    $region9: #{roberta_sentiment_forward.1} parent=1 // pred_fallthru
      _
    // Predicated region
    $region10: #{roberta_sentiment_forward.1} parent=1 // pred_check
      _
    $region11: #{roberta_sentiment_forward.1} parent=1 // pred_check_branch
      %17 = sbr.rel (0) target = $region13
    $region12: #{roberta_sentiment_forward.1} parent=1 // pred_region
      _
    $region13: #{roberta_sentiment_forward.1} parent=1 // pred_fallthru
      _
    // Predicated region
    $region14: #{roberta_sentiment_forward.1} parent=1 // pred_check
      _
    $region15: #{roberta_sentiment_forward.1} parent=1 // pred_check_branch
      %19 = sbr.rel (0) target = $region17
    $region16: #{roberta_sentiment_forward.1} parent=1 // pred_region
      _
    $region17: #{roberta_sentiment_forward.1} parent=1 // pred_fallthru
      _
    // Predicated region
    $region18: #{roberta_sentiment_forward.1} parent=1 // pred_check
      _
    $region19: #{roberta_sentiment_forward.1} parent=1 // pred_check_branch
      %21 = sbr.rel (0) target = $region21
    $region20: #{roberta_sentiment_forward.1} parent=1 // pred_region
      %s23 = ssub.s32 7808, 7808
      %24 = vsyncadd [#allocation3], %s23
      %s25 = sshll.u32 [#allocation2], 4
      %s26 = int_to_ptr.vmem [resolvable:$true] %s25
      %31 = dma.hbm_to_vmem [thread:$0]  %s4, 7808, %s26, [#allocation3], 128, 128, 8
    $region21: #{roberta_sentiment_forward.1} parent=1 // pred_fallthru
      _
    // Predicated region
    $region22: #{roberta_sentiment_forward.1} parent=1 // pred_check
      _
    $region23: #{roberta_sentiment_forward.1} parent=1 // pred_check_branch
      %33 = sbr.rel (0) target = $region25
    $region24: #{roberta_sentiment_forward.1} parent=1 // pred_region
      %34 = dma.done [#allocation3], 7808
    $region25: #{roberta_sentiment_forward.1} parent=1 // pred_fallthru
      _
    %v35 = vld [vmem:[%s0] sm:$0xff]
    %v36 = vld [vmem:[%s0 + $0x8] sm:$0xff]
    %v37 = vlaneseq
    %v38 = vand.u32 %v37, 127
    %39 = vset.pattern.permute.xlu0 0
    %40 = vperm.xlu0 %39, %v35
    %v41 = vpop.permute.xlu0 %40
    %42 = vset.pattern.permute.xlu0 0
    %43 = vperm.xlu0 %42, %v36
    %v44 = vpop.permute.xlu0 %43
    %vm45 = vcmp.eq.s32.totalorder %v41, %v38
    %vm46 = vcmp.eq.s32.totalorder %v44, %v38
    %v47 = vsel %vm45, 1, 0
    %v48 = vsel %vm46, 1, 0
    %v49 = vcvt.s32.f32 %v47
    %v50 = vcvt.s32.f32 %v48
    %51 = vset.pattern.permute.xlu0 1
    %52 = vperm.xlu0 %51, %v35
    %v53 = vpop.permute.xlu0 %52
    %54 = vset.pattern.permute.xlu0 1
    %55 = vperm.xlu0 %54, %v36
    %v56 = vpop.permute.xlu0 %55
    %vm57 = vcmp.eq.s32.totalorder %v53, %v38
    %vm58 = vcmp.eq.s32.totalorder %v56, %v38
    %v59 = vsel %vm57, 1, 0
    %v60 = vsel %vm58, 1, 0
    %v61 = vcvt.s32.f32 %v59
    %v62 = vcvt.s32.f32 %v60
    %v63 = vld [vmem:[#allocation2] sm:$0xff]
    %v64 = vld [vmem:[#allocation2 + $0x8] sm:$0xff]
    %v65 = vld [vmem:[#allocation2 + $0x10] sm:$0xff]
    %v66 = vld [vmem:[#allocation2 + $0x18] sm:$0xff]
    %v67 = vld [vmem:[#allocation2 + $0x20] sm:$0xff]
    %v68 = vld [vmem:[#allocation2 + $0x28] sm:$0xff]
    %v69 = vld [vmem:[#allocation2 + $0x30] sm:$0xff]
    %v70 = vld [vmem:[#allocation2 + $0x38] sm:$0xff]
    %v71 = vld [vmem:[#allocation2 + $0x40] sm:$0xff]
    %v72 = vld [vmem:[#allocation2 + $0x48] sm:$0xff]
    %v73 = vld [vmem:[#allocation2 + $0x50] sm:$0xff]
    %v74 = vld [vmem:[#allocation2 + $0x58] sm:$0xff]
    %v75 = vld [vmem:[#allocation2 + $0x60] sm:$0xf]
    %v76 = vld [vmem:[#allocation2 + $0x68] sm:$0xff]
    %v77 = vld [vmem:[#allocation2 + $0x70] sm:$0xff]
    %vm78 = vcmask 130048
    %v80 = vsel %vm78, %v61, 0
    %v83 = vsel %vm78, %v62, 0
    %85 = vmatprep.subr.mxu0 0.0
    %86 = vmatpush1.msra.mxu0 %v76
    %87 = vmatprep.subr.mxu0 0.0
    %88 = vmatpush1.msra.mxu0 %v77
    %89 = vmatprep.subr.mxu0 0.0
    %90 = vmatpush1.msra.mxu0 0.0
    %91 = vmatprep.subr.mxu0 0.0
    %92 = vmatpush1.msra.mxu0 0.0
    %93 = vmatprep.subr.mxu0 0.0
    %94 = vmatpush1.msra.mxu0 0.0
    %95 = vmatprep.subr.mxu0 0.0
    %96 = vmatpush1.msra.mxu0 0.0
    %97 = vmatprep.subr.mxu0 0.0
    %98 = vmatpush1.msra.mxu0 0.0
    %99 = vmatprep.subr.mxu0 0.0
    %100 = vmatpush1.msra.mxu0 0.0
    %101 = vmatprep.subr.mxu0 0.0
    %102 = vmatpush1.msra.mxu0 0.0
    %103 = vmatprep.subr.mxu0 0.0
    %104 = vmatpush1.msra.mxu0 0.0
    %105 = vmatprep.subr.mxu0 0.0
    %106 = vmatpush1.msra.mxu0 0.0
    %107 = vmatprep.subr.mxu0 0.0
    %108 = vmatpush1.msra.mxu0 0.0
    %109 = vmatprep.subr.mxu0 0.0
    %110 = vmatpush1.msra.mxu0 0.0
    %111 = vmatprep.subr.mxu0 0.0
    %112 = vmatpush1.msra.mxu0 0.0
    %113 = vmatprep.subr.mxu0 0.0
    %114 = vmatpush1.msra.mxu0 0.0
    %115 = vmatprep.subr.mxu0 0.0
    %116 = vmatpush1.msra.mxu0 0.0
    %117 = vmatprep.subr.mxu0 0.0
    %118 = vmatpush1.msra.mxu0 0.0
    %119 = vmatprep.subr.mxu0 0.0
    %120 = vmatpush1.msra.mxu0 0.0
    %121 = vmatprep.subr.mxu0 0.0
    %122 = vmatpush1.msra.mxu0 0.0
    %123 = vmatprep.subr.mxu0 0.0
    %124 = vmatpush1.msra.mxu0 0.0
    %125 = vmatprep.subr.mxu0 0.0
    %126 = vmatpush1.msra.mxu0 0.0
    %127 = vmatprep.subr.mxu0 0.0
    %128 = vmatpush1.msra.mxu0 0.0
    %129 = vmatprep.subr.mxu0 0.0
    %130 = vmatpush1.msra.mxu0 0.0
    %131 = vmatprep.subr.mxu0 0.0
    %132 = vmatpush1.msra.mxu0 0.0
    %133 = vmatprep.subr.mxu0 0.0
    %134 = vmatpush1.msra.mxu0 0.0
    %135 = vmatprep.subr.mxu0 0.0
    %136 = vmatpush1.msra.mxu0 0.0
    %137 = vmatprep.subr.mxu0 0.0
    %138 = vmatpush1.msra.mxu0 0.0
    %139 = vmatprep.subr.mxu0 0.0
    %140 = vmatpush1.msra.mxu0 0.0
    %141 = vmatprep.subr.mxu0 0.0
    %142 = vmatpush1.msra.mxu0 0.0
    %143 = vmatprep.subr.mxu0 0.0
    %144 = vmatpush1.msra.mxu0 0.0
    %145 = vmatprep.subr.mxu0 0.0
    %146 = vmatpush1.msra.mxu0 0.0
    %147 = vmatprep.subr.mxu0 0.0
    %148 = vmatpush1.msra.mxu0 0.0
    %149 = vmatprep.mubr.f32.mxu0 0.0
    %150 = vmatmul.mubr.f32.gmra.mrb[0].mxu0 %v80
    %v151 = vpop.f32.mrb[0].mxu0
    %v152 = vadd.f32 0.0, %v151
    %v153 = vpop.f32.mrb[0].mxu0
    %154 = vmatprep.mubr.f32.mxu0 0.0
    %155 = vmatmul.mubr.f32.gmra.mrb[0].mxu0 %v83
    %v156 = vpop.f32.mrb[0].mxu0
    %v157 = vadd.f32 0.0, %v156
    %v158 = vpop.f32.mrb[0].mxu0
    %159 = vdwg.mxu0
    %vm160 = vcmask 818176
    %v162 = vsel %vm160, %v49, 0
    %v165 = vsel %vm160, %v50, 0
    %vm167 = vcmask 1043456
    %v169 = vsel %vm167, %v75, 0
    %171 = vmatprep.subr.mxu0 0.0
    %172 = vmatpush1.msra.mxu0 %v63
    %173 = vmatprep.subr.mxu0 0.0
    %174 = vmatpush1.msra.mxu0 %v64
    %175 = vmatprep.subr.mxu0 0.0
    %176 = vmatpush1.msra.mxu0 %v65
    %177 = vmatprep.subr.mxu0 0.0
    %178 = vmatpush1.msra.mxu0 %v66
    %179 = vmatprep.subr.mxu0 0.0
    %180 = vmatpush1.msra.mxu0 %v67
    %181 = vmatprep.subr.mxu0 0.0
    %182 = vmatpush1.msra.mxu0 %v68
    %183 = vmatprep.subr.mxu0 0.0
    %184 = vmatpush1.msra.mxu0 %v69
    %185 = vmatprep.subr.mxu0 0.0
    %186 = vmatpush1.msra.mxu0 %v70
    %187 = vmatprep.subr.mxu0 0.0
    %188 = vmatpush1.msra.mxu0 %v71
    %189 = vmatprep.subr.mxu0 0.0
    %190 = vmatpush1.msra.mxu0 %v72
    %191 = vmatprep.subr.mxu0 0.0
    %192 = vmatpush1.msra.mxu0 %v73
    %193 = vmatprep.subr.mxu0 0.0
    %194 = vmatpush1.msra.mxu0 %v74
    %195 = vmatprep.subr.mxu0 0.0
    %196 = vmatpush1.msra.mxu0 %v169
    %197 = vmatprep.subr.mxu0 0.0
    %198 = vmatpush1.msra.mxu0 0.0
    %199 = vmatprep.subr.mxu0 0.0
    %200 = vmatpush1.msra.mxu0 0.0
    %201 = vmatprep.subr.mxu0 0.0
    %202 = vmatpush1.msra.mxu0 0.0
    %203 = vmatprep.subr.mxu0 0.0
    %204 = vmatpush1.msra.mxu0 0.0
    %205 = vmatprep.subr.mxu0 0.0
    %206 = vmatpush1.msra.mxu0 0.0
    %207 = vmatprep.subr.mxu0 0.0
    %208 = vmatpush1.msra.mxu0 0.0
    %209 = vmatprep.subr.mxu0 0.0
    %210 = vmatpush1.msra.mxu0 0.0
    %211 = vmatprep.subr.mxu0 0.0
    %212 = vmatpush1.msra.mxu0 0.0
    %213 = vmatprep.subr.mxu0 0.0
    %214 = vmatpush1.msra.mxu0 0.0
    %215 = vmatprep.subr.mxu0 0.0
    %216 = vmatpush1.msra.mxu0 0.0
    %217 = vmatprep.subr.mxu0 0.0
    %218 = vmatpush1.msra.mxu0 0.0
    %219 = vmatprep.subr.mxu0 0.0
    %220 = vmatpush1.msra.mxu0 0.0
    %221 = vmatprep.subr.mxu0 0.0
    %222 = vmatpush1.msra.mxu0 0.0
    %223 = vmatprep.subr.mxu0 0.0
    %224 = vmatpush1.msra.mxu0 0.0
    %225 = vmatprep.subr.mxu0 0.0
    %226 = vmatpush1.msra.mxu0 0.0
    %227 = vmatprep.subr.mxu0 0.0
    %228 = vmatpush1.msra.mxu0 0.0
    %229 = vmatprep.subr.mxu0 0.0
    %230 = vmatpush1.msra.mxu0 0.0
    %231 = vmatprep.subr.mxu0 0.0
    %232 = vmatpush1.msra.mxu0 0.0
    %233 = vmatprep.subr.mxu0 0.0
    %234 = vmatpush1.msra.mxu0 0.0
    %235 = vmatprep.mubr.f32.mxu0 0.0
    %236 = vmatmul.mubr.f32.gmra.mrb[0].mxu0 %v162
    %v237 = vpop.f32.mrb[0].mxu0
    %v238 = vadd.f32 %v152, %v237
    %v239 = vpop.f32.mrb[0].mxu0
    %240 = vmatprep.mubr.f32.mxu0 0.0
    %241 = vmatmul.mubr.f32.gmra.mrb[0].mxu0 %v165
    %v242 = vpop.f32.mrb[0].mxu0
    %v243 = vadd.f32 %v157, %v242
    %v244 = vpop.f32.mrb[0].mxu0
    %245 = vdwg.mxu0
    %v246 = vld [vmem:[%s3] sm:$0x1]
    %v247 = vlaneseq
    %v248 = vshrl.u32 %v247, 7
    %v249 = vsub.s32 0, %v248
    %v250 = vrot.slane %v246, %v249
    %v251 = vadd.f32 %v238, %v250
    %v252 = vadd.f32 %v243, %v250
    %v253 = vld [vmem:[%s3 + $0x1] sm:$0x1]
    %v254 = vld [vmem:[%s3 + $0x2] sm:$0x1]
    %vm255 = vcmask 261120
    %v256 = vsel %vm255, %v251, 0.0
    %257 = vadd.xlane.f32.xlu0 %v256
    %v258 = vpop.xlane.xlu0 %257
    %v259 = vsel %vm255, %v252, 0.0
    %260 = vadd.xlane.f32.xlu0 %v259
    %v261 = vpop.xlane.xlu0 %260
    %v262 = vrcp.pop 32.0
    %v263 = vmul.f32 %v258, %v262
    %v264 = vmul.f32 %v261, %v262
    %v265 = vsub.f32 %v251, %v263
    %v266 = vsub.f32 %v252, %v264
    %v267 = vmul.f32 %v265, %v265
    %v268 = vmul.f32 %v266, %v266
    %v269 = vsel %vm255, %v267, 0.0
    %270 = vadd.xlane.f32.xlu0 %v269
    %v271 = vpop.xlane.xlu0 %270
    %v272 = vsel %vm255, %v268, 0.0
    %273 = vadd.xlane.f32.xlu0 %v272
    %v274 = vpop.xlane.xlu0 %273
    %v275 = vmul.f32 %v271, %v262
    %v276 = vmul.f32 %v274, %v262
    %v277 = vadd.f32 %v275, 1e-05
    %v278 = vadd.f32 %v276, 1e-05
    %v279 = vrsqrt.pop %v277
    %v280 = vrsqrt.pop %v278
    %v281 = vmul.f32 %v265, %v279
    %v282 = vmul.f32 %v266, %v280
    %v283 = vlaneseq
    %v284 = vshrl.u32 %v283, 7
    %v285 = vsub.s32 0, %v284
    %v286 = vrot.slane %v253, %v285
    %v287 = vmul.f32 %v281, %v286
    %v288 = vmul.f32 %v282, %v286
    %v289 = vlaneseq
    %v290 = vshrl.u32 %v289, 7
    %v291 = vsub.s32 0, %v290
    %v292 = vrot.slane %v254, %v291
    %v293 = vadd.f32 %v287, %v292
    %v294 = vadd.f32 %v288, %v292
    %v295 = vld [vmem:[%s1] sm:$0x3]
    %v297 = vrot.slane %v295, 1
    %v299 = vld [vmem:[#allocation2 + $0x78] sm:$0xff]
    %v300 = vld [vmem:[#allocation2 + $0x80] sm:$0xff]
    %v301 = vld [vmem:[#allocation2 + $0x88] sm:$0xff]
    %v302 = vld [vmem:[#allocation2 + $0x90] sm:$0xff]
    %v303 = vld [vmem:[#allocation2 + $0x98] sm:$0xff]
    %v304 = vld [vmem:[#allocation2 + $0xa0] sm:$0xff]
    %v305 = vld [vmem:[#allocation2 + $0xa8] sm:$0xff]
    %v306 = vld [vmem:[#allocation2 + $0xb0] sm:$0xff]
    %v307 = vld [vmem:[#allocation2 + $0xb8] sm:$0xff]
    %v308 = vld [vmem:[#allocation2 + $0xc0] sm:$0xff]
    %v309 = vld [vmem:[#allocation2 + $0xc8] sm:$0xff]
    %v310 = vld [vmem:[#allocation2 + $0xd0] sm:$0xff]
    %v311 = vld [vmem:[#allocation2 + $0xd8] sm:$0xff]
    %v312 = vld [vmem:[#allocation2 + $0xe0] sm:$0xff]
    %v313 = vld [vmem:[#allocation2 + $0xe8] sm:$0xff]
    %v314 = vld [vmem:[#allocation2 + $0xf0] sm:$0xff]
    %v315 = vld [vmem:[#allocation2 + $0xf8] sm:$0xff]
    %v316 = vld [vmem:[#allocation2 + $0x100] sm:$0xff]
    %v317 = vld [vmem:[#allocation2 + $0x108] sm:$0xff]
    %v318 = vld [vmem:[#allocation2 + $0x110] sm:$0xff]
    %v319 = vld [vmem:[%s3 + $0x3] sm:$0x1]
    %v320 = vld [vmem:[%s3 + $0x4] sm:$0x1]
    %v321 = vld [vmem:[%s3 + $0x5] sm:$0x1]
    %v322 = vld [vmem:[%s3 + $0x6] sm:$0x1]
    %v323 = vld [vmem:[%s3 + $0x7] sm:$0x1]
    %v324 = vld [vmem:[%s3 + $0x8] sm:$0x1]
    %v325 = vld [vmem:[%s3 + $0x9] sm:$0x1]
    %v326 = vld [vmem:[%s3 + $0xa] sm:$0x1]
    %v327 = vlaneseq
    %v328 = vshrl.u32 %v327, 7
    %v329 = vsub.s32 0, %v328
    %v330 = vrot.slane %v319, %v329
    %v332 = vsel %vm255, %v293, 0
    %v335 = vsel %vm255, %v294, 0
    %337 = vmatprep.subr.mxu0 0.0
    %338 = vmatpush1.msra.mxu0 %v299
    %339 = vmatprep.subr.mxu0 0.0
    %340 = vmatpush1.msra.mxu0 %v300
    %341 = vmatprep.subr.mxu0 0.0
    %342 = vmatpush1.msra.mxu0 %v301
    %343 = vmatprep.subr.mxu0 0.0
    %344 = vmatpush1.msra.mxu0 %v302
    %345 = vmatprep.subr.mxu0 0.0
    %346 = vmatpush1.msra.mxu0 0.0
    %347 = vmatprep.subr.mxu0 0.0
    %348 = vmatpush1.msra.mxu0 0.0
    %349 = vmatprep.subr.mxu0 0.0
    %350 = vmatpush1.msra.mxu0 0.0
    %351 = vmatprep.subr.mxu0 0.0
    %352 = vmatpush1.msra.mxu0 0.0
    %353 = vmatprep.subr.mxu0 0.0
    %354 = vmatpush1.msra.mxu0 0.0
    %355 = vmatprep.subr.mxu0 0.0
    %356 = vmatpush1.msra.mxu0 0.0
    %357 = vmatprep.subr.mxu0 0.0
    %358 = vmatpush1.msra.mxu0 0.0
    %359 = vmatprep.subr.mxu0 0.0
    %360 = vmatpush1.msra.mxu0 0.0
    %361 = vmatprep.subr.mxu0 0.0
    %362 = vmatpush1.msra.mxu0 0.0
    %363 = vmatprep.subr.mxu0 0.0
    %364 = vmatpush1.msra.mxu0 0.0
    %365 = vmatprep.subr.mxu0 0.0
    %366 = vmatpush1.msra.mxu0 0.0
    %367 = vmatprep.subr.mxu0 0.0
    %368 = vmatpush1.msra.mxu0 0.0
    %369 = vmatprep.subr.mxu0 0.0
    %370 = vmatpush1.msra.mxu0 0.0
    %371 = vmatprep.subr.mxu0 0.0
    %372 = vmatpush1.msra.mxu0 0.0
    %373 = vmatprep.subr.mxu0 0.0
    %374 = vmatpush1.msra.mxu0 0.0
    %375 = vmatprep.subr.mxu0 0.0
    %376 = vmatpush1.msra.mxu0 0.0
    %377 = vmatprep.subr.mxu0 0.0
    %378 = vmatpush1.msra.mxu0 0.0
    %379 = vmatprep.subr.mxu0 0.0
    %380 = vmatpush1.msra.mxu0 0.0
    %381 = vmatprep.subr.mxu0 0.0
    %382 = vmatpush1.msra.mxu0 0.0
    %383 = vmatprep.subr.mxu0 0.0
    %384 = vmatpush1.msra.mxu0 0.0
    %385 = vmatprep.subr.mxu0 0.0
    %386 = vmatpush1.msra.mxu0 0.0
    %387 = vmatprep.subr.mxu0 0.0
    %388 = vmatpush1.msra.mxu0 0.0
    %389 = vmatprep.subr.mxu0 0.0
    %390 = vmatpush1.msra.mxu0 0.0
    %391 = vmatprep.subr.mxu0 0.0
    %392 = vmatpush1.msra.mxu0 0.0
    %393 = vmatprep.subr.mxu0 0.0
    %394 = vmatpush1.msra.mxu0 0.0
    %395 = vmatprep.subr.mxu0 0.0
    %396 = vmatpush1.msra.mxu0 0.0
    %397 = vmatprep.subr.mxu0 0.0
    %398 = vmatpush1.msra.mxu0 0.0
    %399 = vmatprep.subr.mxu0 0.0
    %400 = vmatpush1.msra.mxu0 0.0
    %401 = vmatprep.mubr.f32.mxu0 0.0
    %402 = vmatmul.mubr.f32.gmra.mrb[0].mxu0 %v332
    %v403 = vpop.f32.mrb[0].mxu0
    %v404 = vadd.f32 %v330, %v403
    %v405 = vpop.f32.mrb[0].mxu0
    %406 = vmatprep.mubr.f32.mxu0 0.0
    %407 = vmatmul.mubr.f32.gmra.mrb[0].mxu0 %v335
    %v408 = vpop.f32.mrb[0].mxu0
    %v409 = vadd.f32 %v330, %v408
    %v410 = vpop.f32.mrb[0].mxu0
    %411 = vdwg.mxu0
    %413 = vrot.lane.b32.xlu0 %v404, 112
    %v414 = vpop.permute.xlu0 %413
    %416 = vrot.lane.b32.xlu0 %v409, 112
    %v417 = vpop.permute.xlu0 %416
    %418 = vrot.lane.b32.xlu0 %v404, 96
    %v419 = vpop.permute.xlu0 %418
    %v420 = vsel %vm78, %v404, 0
    %v422 = vsel %vm78, %v419, 0
    %424 = vmatprep.subr.mxu0 0.0
    %425 = vmatpush1.xpose.msra.mxu0 %v422
    %426 = vmatprep.subr.mxu0 0.0
    %427 = vmatpush1.xpose.msra.mxu0 0.0
    %428 = vmatprep.subr.mxu0 0.0
    %429 = vmatpush1.xpose.msra.mxu0 0.0
    %430 = vmatprep.subr.mxu0 0.0
    %431 = vmatpush1.xpose.msra.mxu0 0.0
    %432 = vmatprep.subr.mxu0 0.0
    %433 = vmatpush1.xpose.msra.mxu0 0.0
    %434 = vmatprep.subr.mxu0 0.0
    %435 = vmatpush1.xpose.msra.mxu0 0.0
    %436 = vmatprep.subr.mxu0 0.0
    %437 = vmatpush1.xpose.msra.mxu0 0.0
    %438 = vmatprep.subr.mxu0 0.0
    %439 = vmatpush1.xpose.msra.mxu0 0.0
    %440 = vmatprep.subr.mxu0 0.0
    %441 = vmatpush1.xpose.msra.mxu0 0.0
    %442 = vmatprep.subr.mxu0 0.0
    %443 = vmatpush1.xpose.msra.mxu0 0.0
    %444 = vmatprep.subr.mxu0 0.0
    %445 = vmatpush1.xpose.msra.mxu0 0.0
    %446 = vmatprep.subr.mxu0 0.0
    %447 = vmatpush1.xpose.msra.mxu0 0.0
    %448 = vmatprep.subr.mxu0 0.0
    %449 = vmatpush1.xpose.msra.mxu0 0.0
    %450 = vmatprep.subr.mxu0 0.0
    %451 = vmatpush1.xpose.msra.mxu0 0.0
    %452 = vmatprep.subr.mxu0 0.0
    %453 = vmatpush1.xpose.msra.mxu0 0.0
    %454 = vmatprep.subr.mxu0 0.0
    %455 = vmatpush1.xpose.msra.mxu0 0.0
    %456 = vmatprep.subr.mxu0 0.0
    %457 = vmatpush1.xpose.msra.mxu0 0.0
    %458 = vmatprep.subr.mxu0 0.0
    %459 = vmatpush1.xpose.msra.mxu0 0.0
    %460 = vmatprep.subr.mxu0 0.0
    %461 = vmatpush1.xpose.msra.mxu0 0.0
    %462 = vmatprep.subr.mxu0 0.0
    %463 = vmatpush1.xpose.msra.mxu0 0.0
    %464 = vmatprep.subr.mxu0 0.0
    %465 = vmatpush1.xpose.msra.mxu0 0.0
    %466 = vmatprep.subr.mxu0 0.0
    %467 = vmatpush1.xpose.msra.mxu0 0.0
    %468 = vmatprep.subr.mxu0 0.0
    %469 = vmatpush1.xpose.msra.mxu0 0.0
    %470 = vmatprep.subr.mxu0 0.0
    %471 = vmatpush1.xpose.msra.mxu0 0.0
    %472 = vmatprep.subr.mxu0 0.0
    %473 = vmatpush1.xpose.msra.mxu0 0.0
    %474 = vmatprep.subr.mxu0 0.0
    %475 = vmatpush1.xpose.msra.mxu0 0.0
    %476 = vmatprep.subr.mxu0 0.0
    %477 = vmatpush1.xpose.msra.mxu0 0.0
    %478 = vmatprep.subr.mxu0 0.0
    %479 = vmatpush1.xpose.msra.mxu0 0.0
    %480 = vmatprep.subr.mxu0 0.0
    %481 = vmatpush1.xpose.msra.mxu0 0.0
    %482 = vmatprep.subr.mxu0 0.0
    %483 = vmatpush1.xpose.msra.mxu0 0.0
    %484 = vmatprep.subr.mxu0 0.0
    %485 = vmatpush1.xpose.msra.mxu0 0.0
    %486 = vmatprep.subr.mxu0 0.0
    %487 = vmatpush1.xpose.msra.mxu0 0.0
    %488 = vmatprep.mubr.f32.mxu0 0.0
    %489 = vmatmul.mubr.f32.gmra.mrb[0].mxu0 %v420
    %v490 = vpop.f32.mrb[0].mxu0
    %v491 = vadd.f32 0.0, %v490
    %v492 = vpop.f32.mrb[0].mxu0
    %493 = vdwg.mxu0
    %494 = vrot.lane.b32.xlu0 %v414, 96
    %v495 = vpop.permute.xlu0 %494
    %v496 = vsel %vm78, %v414, 0
    %v498 = vsel %vm78, %v495, 0
    %500 = vmatprep.subr.mxu0 0.0
    %501 = vmatpush1.xpose.msra.mxu0 %v498
    %502 = vmatprep.subr.mxu0 0.0
    %503 = vmatpush1.xpose.msra.mxu0 0.0
    %504 = vmatprep.subr.mxu0 0.0
    %505 = vmatpush1.xpose.msra.mxu0 0.0
    %506 = vmatprep.subr.mxu0 0.0
    %507 = vmatpush1.xpose.msra.mxu0 0.0
    %508 = vmatprep.subr.mxu0 0.0
    %509 = vmatpush1.xpose.msra.mxu0 0.0
    %510 = vmatprep.subr.mxu0 0.0
    %511 = vmatpush1.xpose.msra.mxu0 0.0
    %512 = vmatprep.subr.mxu0 0.0
    %513 = vmatpush1.xpose.msra.mxu0 0.0
    %514 = vmatprep.subr.mxu0 0.0
    %515 = vmatpush1.xpose.msra.mxu0 0.0
    %516 = vmatprep.subr.mxu0 0.0
    %517 = vmatpush1.xpose.msra.mxu0 0.0
    %518 = vmatprep.subr.mxu0 0.0
    %519 = vmatpush1.xpose.msra.mxu0 0.0
    %520 = vmatprep.subr.mxu0 0.0
    %521 = vmatpush1.xpose.msra.mxu0 0.0
    %522 = vmatprep.subr.mxu0 0.0
    %523 = vmatpush1.xpose.msra.mxu0 0.0
    %524 = vmatprep.subr.mxu0 0.0
    %525 = vmatpush1.xpose.msra.mxu0 0.0
    %526 = vmatprep.subr.mxu0 0.0
    %527 = vmatpush1.xpose.msra.mxu0 0.0
    %528 = vmatprep.subr.mxu0 0.0
    %529 = vmatpush1.xpose.msra.mxu0 0.0
    %530 = vmatprep.subr.mxu0 0.0
    %531 = vmatpush1.xpose.msra.mxu0 0.0
    %532 = vmatprep.subr.mxu0 0.0
    %533 = vmatpush1.xpose.msra.mxu0 0.0
    %534 = vmatprep.subr.mxu0 0.0
    %535 = vmatpush1.xpose.msra.mxu0 0.0
    %536 = vmatprep.subr.mxu0 0.0
    %537 = vmatpush1.xpose.msra.mxu0 0.0
    %538 = vmatprep.subr.mxu0 0.0
    %539 = vmatpush1.xpose.msra.mxu0 0.0
    %540 = vmatprep.subr.mxu0 0.0
    %541 = vmatpush1.xpose.msra.mxu0 0.0
    %542 = vmatprep.subr.mxu0 0.0
    %543 = vmatpush1.xpose.msra.mxu0 0.0
    %544 = vmatprep.subr.mxu0 0.0
    %545 = vmatpush1.xpose.msra.mxu0 0.0
    %546 = vmatprep.subr.mxu0 0.0
    %547 = vmatpush1.xpose.msra.mxu0 0.0
    %548 = vmatprep.subr.mxu0 0.0
    %549 = vmatpush1.xpose.msra.mxu0 0.0
    %550 = vmatprep.subr.mxu0 0.0
    %551 = vmatpush1.xpose.msra.mxu0 0.0
    %552 = vmatprep.subr.mxu0 0.0
    %553 = vmatpush1.xpose.msra.mxu0 0.0
    %554 = vmatprep.subr.mxu0 0.0
    %555 = vmatpush1.xpose.msra.mxu0 0.0
    %556 = vmatprep.subr.mxu0 0.0
    %557 = vmatpush1.xpose.msra.mxu0 0.0
    %558 = vmatprep.subr.mxu0 0.0
    %559 = vmatpush1.xpose.msra.mxu0 0.0
    %560 = vmatprep.subr.mxu0 0.0
    %561 = vmatpush1.xpose.msra.mxu0 0.0
    %562 = vmatprep.subr.mxu0 0.0
    %563 = vmatpush1.xpose.msra.mxu0 0.0
    %564 = vmatprep.mubr.f32.mxu0 0.0
    %565 = vmatmul.mubr.f32.gmra.mrb[0].mxu0 %v496
    %v566 = vpop.f32.mrb[0].mxu0
    %v567 = vadd.f32 0.0, %v566
    %v568 = vpop.f32.mrb[0].mxu0
    %569 = vdwg.mxu0
    %570 = vrot.lane.b32.xlu0 %v409, 96
    %v571 = vpop.permute.xlu0 %570
    %v572 = vsel %vm78, %v409, 0
    %v574 = vsel %vm78, %v571, 0
    %576 = vmatprep.subr.mxu0 0.0
    %577 = vmatpush1.xpose.msra.mxu0 %v574
    %578 = vmatprep.subr.mxu0 0.0
    %579 = vmatpush1.xpose.msra.mxu0 0.0
    %580 = vmatprep.subr.mxu0 0.0
    %581 = vmatpush1.xpose.msra.mxu0 0.0
    %582 = vmatprep.subr.mxu0 0.0
    %583 = vmatpush1.xpose.msra.mxu0 0.0
    %584 = vmatprep.subr.mxu0 0.0
    %585 = vmatpush1.xpose.msra.mxu0 0.0
    %586 = vmatprep.subr.mxu0 0.0
    %587 = vmatpush1.xpose.msra.mxu0 0.0
    %588 = vmatprep.subr.mxu0 0.0
    %589 = vmatpush1.xpose.msra.mxu0 0.0
    %590 = vmatprep.subr.mxu0 0.0
    %591 = vmatpush1.xpose.msra.mxu0 0.0
    %592 = vmatprep.subr.mxu0 0.0
    %593 = vmatpush1.xpose.msra.mxu0 0.0
    %594 = vmatprep.subr.mxu0 0.0
    %595 = vmatpush1.xpose.msra.mxu0 0.0
    %596 = vmatprep.subr.mxu0 0.0
    %597 = vmatpush1.xpose.msra.mxu0 0.0
    %598 = vmatprep.subr.mxu0 0.0
    %599 = vmatpush1.xpose.msra.mxu0 0.0
    %600 = vmatprep.subr.mxu0 0.0
    %601 = vmatpush1.xpose.msra.mxu0 0.0
    %602 = vmatprep.subr.mxu0 0.0
    %603 = vmatpush1.xpose.msra.mxu0 0.0
    %604 = vmatprep.subr.mxu0 0.0
    %605 = vmatpush1.xpose.msra.mxu0 0.0
    %606 = vmatprep.subr.mxu0 0.0
    %607 = vmatpush1.xpose.msra.mxu0 0.0
    %608 = vmatprep.subr.mxu0 0.0
    %609 = vmatpush1.xpose.msra.mxu0 0.0
    %610 = vmatprep.subr.mxu0 0.0
    %611 = vmatpush1.xpose.msra.mxu0 0.0
    %612 = vmatprep.subr.mxu0 0.0
    %613 = vmatpush1.xpose.msra.mxu0 0.0
    %614 = vmatprep.subr.mxu0 0.0
    %615 = vmatpush1.xpose.msra.mxu0 0.0
    %616 = vmatprep.subr.mxu0 0.0
    %617 = vmatpush1.xpose.msra.mxu0 0.0
    %618 = vmatprep.subr.mxu0 0.0
    %619 = vmatpush1.xpose.msra.mxu0 0.0
    %620 = vmatprep.subr.mxu0 0.0
    %621 = vmatpush1.xpose.msra.mxu0 0.0
    %622 = vmatprep.subr.mxu0 0.0
    %623 = vmatpush1.xpose.msra.mxu0 0.0
    %624 = vmatprep.subr.mxu0 0.0
    %625 = vmatpush1.xpose.msra.mxu0 0.0
    %626 = vmatprep.subr.mxu0 0.0
    %627 = vmatpush1.xpose.msra.mxu0 0.0
    %628 = vmatprep.subr.mxu0 0.0
    %629 = vmatpush1.xpose.msra.mxu0 0.0
    %630 = vmatprep.subr.mxu0 0.0
    %631 = vmatpush1.xpose.msra.mxu0 0.0
    %632 = vmatprep.subr.mxu0 0.0
    %633 = vmatpush1.xpose.msra.mxu0 0.0
    %634 = vmatprep.subr.mxu0 0.0
    %635 = vmatpush1.xpose.msra.mxu0 0.0
    %636 = vmatprep.subr.mxu0 0.0
    %637 = vmatpush1.xpose.msra.mxu0 0.0
    %638 = vmatprep.subr.mxu0 0.0
    %639 = vmatpush1.xpose.msra.mxu0 0.0
    %640 = vmatprep.mubr.f32.mxu0 0.0
    %641 = vmatmul.mubr.f32.gmra.mrb[0].mxu0 %v572
    %v642 = vpop.f32.mrb[0].mxu0
    %v643 = vadd.f32 0.0, %v642
    %v644 = vpop.f32.mrb[0].mxu0
    %645 = vdwg.mxu0
    %646 = vrot.lane.b32.xlu0 %v417, 96
    %v647 = vpop.permute.xlu0 %646
    %v648 = vsel %vm78, %v417, 0
    %v650 = vsel %vm78, %v647, 0
    %652 = vmatprep.subr.mxu0 0.0
    %653 = vmatpush1.xpose.msra.mxu0 %v650
    %654 = vmatprep.subr.mxu0 0.0
    %655 = vmatpush1.xpose.msra.mxu0 0.0
    %656 = vmatprep.subr.mxu0 0.0
    %657 = vmatpush1.xpose.msra.mxu0 0.0
    %658 = vmatprep.subr.mxu0 0.0
    %659 = vmatpush1.xpose.msra.mxu0 0.0
    %660 = vmatprep.subr.mxu0 0.0
    %661 = vmatpush1.xpose.msra.mxu0 0.0
    %662 = vmatprep.subr.mxu0 0.0
    %663 = vmatpush1.xpose.msra.mxu0 0.0
    %664 = vmatprep.subr.mxu0 0.0
    %665 = vmatpush1.xpose.msra.mxu0 0.0
    %666 = vmatprep.subr.mxu0 0.0
    %667 = vmatpush1.xpose.msra.mxu0 0.0
    %668 = vmatprep.subr.mxu0 0.0
    %669 = vmatpush1.xpose.msra.mxu0 0.0
    %670 = vmatprep.subr.mxu0 0.0
    %671 = vmatpush1.xpose.msra.mxu0 0.0
    %672 = vmatprep.subr.mxu0 0.0
    %673 = vmatpush1.xpose.msra.mxu0 0.0
    %674 = vmatprep.subr.mxu0 0.0
    %675 = vmatpush1.xpose.msra.mxu0 0.0
    %676 = vmatprep.subr.mxu0 0.0
    %677 = vmatpush1.xpose.msra.mxu0 0.0
    %678 = vmatprep.subr.mxu0 0.0
    %679 = vmatpush1.xpose.msra.mxu0 0.0
    %680 = vmatprep.subr.mxu0 0.0
    %681 = vmatpush1.xpose.msra.mxu0 0.0
    %682 = vmatprep.subr.mxu0 0.0
    %683 = vmatpush1.xpose.msra.mxu0 0.0
    %684 = vmatprep.subr.mxu0 0.0
    %685 = vmatpush1.xpose.msra.mxu0 0.0
    %686 = vmatprep.subr.mxu0 0.0
    %687 = vmatpush1.xpose.msra.mxu0 0.0
    %688 = vmatprep.subr.mxu0 0.0
    %689 = vmatpush1.xpose.msra.mxu0 0.0
    %690 = vmatprep.subr.mxu0 0.0
    %691 = vmatpush1.xpose.msra.mxu0 0.0
    %692 = vmatprep.subr.mxu0 0.0
    %693 = vmatpush1.xpose.msra.mxu0 0.0
    %694 = vmatprep.subr.mxu0 0.0
    %695 = vmatpush1.xpose.msra.mxu0 0.0
    %696 = vmatprep.subr.mxu0 0.0
    %697 = vmatpush1.xpose.msra.mxu0 0.0
    %698 = vmatprep.subr.mxu0 0.0
    %699 = vmatpush1.xpose.msra.mxu0 0.0
    %700 = vmatprep.subr.mxu0 0.0
    %701 = vmatpush1.xpose.msra.mxu0 0.0
    %702 = vmatprep.subr.mxu0 0.0
    %703 = vmatpush1.xpose.msra.mxu0 0.0
    %704 = vmatprep.subr.mxu0 0.0
    %705 = vmatpush1.xpose.msra.mxu0 0.0
    %706 = vmatprep.subr.mxu0 0.0
    %707 = vmatpush1.xpose.msra.mxu0 0.0
    %708 = vmatprep.subr.mxu0 0.0
    %709 = vmatpush1.xpose.msra.mxu0 0.0
    %710 = vmatprep.subr.mxu0 0.0
    %711 = vmatpush1.xpose.msra.mxu0 0.0
    %712 = vmatprep.subr.mxu0 0.0
    %713 = vmatpush1.xpose.msra.mxu0 0.0
    %714 = vmatprep.subr.mxu0 0.0
    %715 = vmatpush1.xpose.msra.mxu0 0.0
    %716 = vmatprep.mubr.f32.mxu0 0.0
    %717 = vmatmul.mubr.f32.gmra.mrb[0].mxu0 %v648
    %v718 = vpop.f32.mrb[0].mxu0
    %v719 = vadd.f32 0.0, %v718
    %v720 = vpop.f32.mrb[0].mxu0
    %721 = vdwg.mxu0
    %v722 = vmul.f32 %v491, 0.25
    %v723 = vmul.f32 %v567, 0.25
    %v724 = vmul.f32 %v643, 0.25
    %v725 = vmul.f32 %v719, 0.25
    %v726 = vlaneseq
    %v727 = vshrl.u32 %v726, 7
    %v728 = vsub.s32 0, %v727
    %v729 = vrot.slane %v295, %v728
    %v730 = vlaneseq
    %v731 = vshrl.u32 %v730, 7
    %v732 = vsub.s32 0, %v731
    %v733 = vrot.slane %v297, %v732
    %v734 = vadd.f32 %v722, %v729
    %v735 = vadd.f32 %v723, %v729
    %v736 = vadd.f32 %v724, %v733
    %v737 = vadd.f32 %v725, %v733
    %vm738 = vcmask 64512
    %v739 = vsel %vm738, %v734, -inf
    %740 = vmax.xlane.f32.xlu0 %v739
    %v741 = vpop.xlane.xlu0 %740
    %v742 = vsel %vm738, %v735, -inf
    %743 = vmax.xlane.f32.xlu0 %v742
    %v744 = vpop.xlane.xlu0 %743
    %v745 = vsel %vm738, %v736, -inf
    %746 = vmax.xlane.f32.xlu0 %v745
    %v747 = vpop.xlane.xlu0 %746
    %v748 = vsel %vm738, %v737, -inf
    %749 = vmax.xlane.f32.xlu0 %v748
    %v750 = vpop.xlane.xlu0 %749
    %v751 = vsub.f32 %v734, %v741
    %v752 = vsub.f32 %v735, %v744
    %v753 = vsub.f32 %v736, %v747
    %v754 = vsub.f32 %v737, %v750
    %v755 = vmul.f32 %v751, 1.442695
    %v756 = vpow.pop %v755
    %v757 = vmul.f32 %v752, 1.442695
    %v758 = vpow.pop %v757
    %v759 = vmul.f32 %v753, 1.442695
    %v760 = vpow.pop %v759
    %v761 = vmul.f32 %v754, 1.442695
    %v762 = vpow.pop %v761
    %v763 = vsel %vm738, %v756, 0.0
    %764 = vadd.xlane.f32.xlu0 %v763
    %v765 = vpop.xlane.xlu0 %764
    %v766 = vsel %vm738, %v758, 0.0
    %767 = vadd.xlane.f32.xlu0 %v766
    %v768 = vpop.xlane.xlu0 %767
    %v769 = vsel %vm738, %v760, 0.0
    %770 = vadd.xlane.f32.xlu0 %v769
    %v771 = vpop.xlane.xlu0 %770
    %v772 = vsel %vm738, %v762, 0.0
    %773 = vadd.xlane.f32.xlu0 %v772
    %v774 = vpop.xlane.xlu0 %773
    %v775 = vrcp.pop %v765
    %v776 = vrcp.pop %v768
    %v777 = vrcp.pop %v771
    %v778 = vrcp.pop %v774
    %v779 = vmul.f32 %v756, %v775
    %v780 = vmul.f32 %v758, %v776
    %v781 = vmul.f32 %v760, %v777
    %v782 = vmul.f32 %v762, %v778
    %783 = vrot.lane.b32.xlu0 %v404, 64
    %v784 = vpop.permute.xlu0 %783
    %v787 = vsel %vm738, %v779, 0
    %789 = vmatprep.subr.mxu0 0.0
    %790 = vmatpush1.msra.mxu0 %v784
    %791 = vmatprep.subr.mxu0 0.0
    %792 = vmatpush1.msra.mxu0 0.0
    %793 = vmatprep.subr.mxu0 0.0
    %794 = vmatpush1.msra.mxu0 0.0
    %795 = vmatprep.subr.mxu0 0.0
    %796 = vmatpush1.msra.mxu0 0.0
    %797 = vmatprep.subr.mxu0 0.0
    %798 = vmatpush1.msra.mxu0 0.0
    %799 = vmatprep.subr.mxu0 0.0
    %800 = vmatpush1.msra.mxu0 0.0
    %801 = vmatprep.subr.mxu0 0.0
    %802 = vmatpush1.msra.mxu0 0.0
    %803 = vmatprep.subr.mxu0 0.0
    %804 = vmatpush1.msra.mxu0 0.0
    %805 = vmatprep.subr.mxu0 0.0
    %806 = vmatpush1.msra.mxu0 0.0
    %807 = vmatprep.subr.mxu0 0.0
    %808 = vmatpush1.msra.mxu0 0.0
    %809 = vmatprep.subr.mxu0 0.0
    %810 = vmatpush1.msra.mxu0 0.0
    %811 = vmatprep.subr.mxu0 0.0
    %812 = vmatpush1.msra.mxu0 0.0
    %813 = vmatprep.subr.mxu0 0.0
    %814 = vmatpush1.msra.mxu0 0.0
    %815 = vmatprep.subr.mxu0 0.0
    %816 = vmatpush1.msra.mxu0 0.0
    %817 = vmatprep.subr.mxu0 0.0
    %818 = vmatpush1.msra.mxu0 0.0
    %819 = vmatprep.subr.mxu0 0.0
    %820 = vmatpush1.msra.mxu0 0.0
    %821 = vmatprep.subr.mxu0 0.0
    %822 = vmatpush1.msra.mxu0 0.0
    %823 = vmatprep.subr.mxu0 0.0
    %824 = vmatpush1.msra.mxu0 0.0
    %825 = vmatprep.subr.mxu0 0.0
    %826 = vmatpush1.msra.mxu0 0.0
    %827 = vmatprep.subr.mxu0 0.0
    %828 = vmatpush1.msra.mxu0 0.0
    %829 = vmatprep.subr.mxu0 0.0
    %830 = vmatpush1.msra.mxu0 0.0
    %831 = vmatprep.subr.mxu0 0.0
    %832 = vmatpush1.msra.mxu0 0.0
    %833 = vmatprep.subr.mxu0 0.0
    %834 = vmatpush1.msra.mxu0 0.0
    %835 = vmatprep.subr.mxu0 0.0
    %836 = vmatpush1.msra.mxu0 0.0
    %837 = vmatprep.subr.mxu0 0.0
    %838 = vmatpush1.msra.mxu0 0.0
    %839 = vmatprep.subr.mxu0 0.0
    %840 = vmatpush1.msra.mxu0 0.0
    %841 = vmatprep.subr.mxu0 0.0
    %842 = vmatpush1.msra.mxu0 0.0
    %843 = vmatprep.subr.mxu0 0.0
    %844 = vmatpush1.msra.mxu0 0.0
    %845 = vmatprep.subr.mxu0 0.0
    %846 = vmatpush1.msra.mxu0 0.0
    %847 = vmatprep.subr.mxu0 0.0
    %848 = vmatpush1.msra.mxu0 0.0
    %849 = vmatprep.subr.mxu0 0.0
    %850 = vmatpush1.msra.mxu0 0.0
    %851 = vmatprep.subr.mxu0 0.0
    %852 = vmatpush1.msra.mxu0 0.0
    %853 = vmatprep.mubr.f32.mxu0 0.0
    %854 = vmatmul.mubr.f32.gmra.mrb[0].mxu0 %v787
    %v855 = vpop.f32.mrb[0].mxu0
    %v856 = vadd.f32 0.0, %v855
    %v857 = vpop.f32.mrb[0].mxu0
    %858 = vdwg.mxu0
    %859 = vrot.lane.b32.xlu0 %v414, 64
    %v860 = vpop.permute.xlu0 %859
    %v863 = vsel %vm738, %v780, 0
    %865 = vmatprep.subr.mxu0 0.0
    %866 = vmatpush1.msra.mxu0 %v860
    %867 = vmatprep.subr.mxu0 0.0
    %868 = vmatpush1.msra.mxu0 0.0
    %869 = vmatprep.subr.mxu0 0.0
    %870 = vmatpush1.msra.mxu0 0.0
    %871 = vmatprep.subr.mxu0 0.0
    %872 = vmatpush1.msra.mxu0 0.0
    %873 = vmatprep.subr.mxu0 0.0
    %874 = vmatpush1.msra.mxu0 0.0
    %875 = vmatprep.subr.mxu0 0.0
    %876 = vmatpush1.msra.mxu0 0.0
    %877 = vmatprep.subr.mxu0 0.0
    %878 = vmatpush1.msra.mxu0 0.0
    %879 = vmatprep.subr.mxu0 0.0
    %880 = vmatpush1.msra.mxu0 0.0
    %881 = vmatprep.subr.mxu0 0.0
    %882 = vmatpush1.msra.mxu0 0.0
    %883 = vmatprep.subr.mxu0 0.0
    %884 = vmatpush1.msra.mxu0 0.0
    %885 = vmatprep.subr.mxu0 0.0
    %886 = vmatpush1.msra.mxu0 0.0
    %887 = vmatprep.subr.mxu0 0.0
    %888 = vmatpush1.msra.mxu0 0.0
    %889 = vmatprep.subr.mxu0 0.0
    %890 = vmatpush1.msra.mxu0 0.0
    %891 = vmatprep.subr.mxu0 0.0
    %892 = vmatpush1.msra.mxu0 0.0
    %893 = vmatprep.subr.mxu0 0.0
    %894 = vmatpush1.msra.mxu0 0.0
    %895 = vmatprep.subr.mxu0 0.0
    %896 = vmatpush1.msra.mxu0 0.0
    %897 = vmatprep.subr.mxu0 0.0
    %898 = vmatpush1.msra.mxu0 0.0
    %899 = vmatprep.subr.mxu0 0.0
    %900 = vmatpush1.msra.mxu0 0.0
    %901 = vmatprep.subr.mxu0 0.0
    %902 = vmatpush1.msra.mxu0 0.0
    %903 = vmatprep.subr.mxu0 0.0
    %904 = vmatpush1.msra.mxu0 0.0
    %905 = vmatprep.subr.mxu0 0.0
    %906 = vmatpush1.msra.mxu0 0.0
    %907 = vmatprep.subr.mxu0 0.0
    %908 = vmatpush1.msra.mxu0 0.0
    %909 = vmatprep.subr.mxu0 0.0
    %910 = vmatpush1.msra.mxu0 0.0
    %911 = vmatprep.subr.mxu0 0.0
    %912 = vmatpush1.msra.mxu0 0.0
    %913 = vmatprep.subr.mxu0 0.0
    %914 = vmatpush1.msra.mxu0 0.0
    %915 = vmatprep.subr.mxu0 0.0
    %916 = vmatpush1.msra.mxu0 0.0
    %917 = vmatprep.subr.mxu0 0.0
    %918 = vmatpush1.msra.mxu0 0.0
    %919 = vmatprep.subr.mxu0 0.0
    %920 = vmatpush1.msra.mxu0 0.0
    %921 = vmatprep.subr.mxu0 0.0
    %922 = vmatpush1.msra.mxu0 0.0
    %923 = vmatprep.subr.mxu0 0.0
    %924 = vmatpush1.msra.mxu0 0.0
    %925 = vmatprep.subr.mxu0 0.0
    %926 = vmatpush1.msra.mxu0 0.0
    %927 = vmatprep.subr.mxu0 0.0
    %928 = vmatpush1.msra.mxu0 0.0
    %929 = vmatprep.mubr.f32.mxu0 0.0
    %930 = vmatmul.mubr.f32.gmra.mrb[0].mxu0 %v863
    %v931 = vpop.f32.mrb[0].mxu0
    %v932 = vadd.f32 0.0, %v931
    %v933 = vpop.f32.mrb[0].mxu0
    %934 = vdwg.mxu0
    %935 = vrot.lane.b32.xlu0 %v409, 64
    %v936 = vpop.permute.xlu0 %935
    %v939 = vsel %vm738, %v781, 0
    %941 = vmatprep.subr.mxu0 0.0
    %942 = vmatpush1.msra.mxu0 %v936
    %943 = vmatprep.subr.mxu0 0.0
    %944 = vmatpush1.msra.mxu0 0.0
    %945 = vmatprep.subr.mxu0 0.0
    %946 = vmatpush1.msra.mxu0 0.0
    %947 = vmatprep.subr.mxu0 0.0
    %948 = vmatpush1.msra.mxu0 0.0
    %949 = vmatprep.subr.mxu0 0.0
    %950 = vmatpush1.msra.mxu0 0.0
    %951 = vmatprep.subr.mxu0 0.0
    %952 = vmatpush1.msra.mxu0 0.0
    %953 = vmatprep.subr.mxu0 0.0
    %954 = vmatpush1.msra.mxu0 0.0
    %955 = vmatprep.subr.mxu0 0.0
    %956 = vmatpush1.msra.mxu0 0.0
    %957 = vmatprep.subr.mxu0 0.0
    %958 = vmatpush1.msra.mxu0 0.0
    %959 = vmatprep.subr.mxu0 0.0
    %960 = vmatpush1.msra.mxu0 0.0
    %961 = vmatprep.subr.mxu0 0.0
    %962 = vmatpush1.msra.mxu0 0.0
    %963 = vmatprep.subr.mxu0 0.0
    %964 = vmatpush1.msra.mxu0 0.0
    %965 = vmatprep.subr.mxu0 0.0
    %966 = vmatpush1.msra.mxu0 0.0
    %967 = vmatprep.subr.mxu0 0.0
    %968 = vmatpush1.msra.mxu0 0.0
    %969 = vmatprep.subr.mxu0 0.0
    %970 = vmatpush1.msra.mxu0 0.0
    %971 = vmatprep.subr.mxu0 0.0
    %972 = vmatpush1.msra.mxu0 0.0
    %973 = vmatprep.subr.mxu0 0.0
    %974 = vmatpush1.msra.mxu0 0.0
    %975 = vmatprep.subr.mxu0 0.0
    %976 = vmatpush1.msra.mxu0 0.0
    %977 = vmatprep.subr.mxu0 0.0
    %978 = vmatpush1.msra.mxu0 0.0
    %979 = vmatprep.subr.mxu0 0.0
    %980 = vmatpush1.msra.mxu0 0.0
    %981 = vmatprep.subr.mxu0 0.0
    %982 = vmatpush1.msra.mxu0 0.0
    %983 = vmatprep.subr.mxu0 0.0
    %984 = vmatpush1.msra.mxu0 0.0
    %985 = vmatprep.subr.mxu0 0.0
    %986 = vmatpush1.msra.mxu0 0.0
    %987 = vmatprep.subr.mxu0 0.0
    %988 = vmatpush1.msra.mxu0 0.0
    %989 = vmatprep.subr.mxu0 0.0
    %990 = vmatpush1.msra.mxu0 0.0
    %991 = vmatprep.subr.mxu0 0.0
    %992 = vmatpush1.msra.mxu0 0.0
    %993 = vmatprep.subr.mxu0 0.0
    %994 = vmatpush1.msra.mxu0 0.0
    %995 = vmatprep.subr.mxu0 0.0
    %996 = vmatpush1.msra.mxu0 0.0
    %997 = vmatprep.subr.mxu0 0.0
    %998 = vmatpush1.msra.mxu0 0.0
    %999 = vmatprep.subr.mxu0 0.0
    %1000 = vmatpush1.msra.mxu0 0.0
    %1001 = vmatprep.subr.mxu0 0.0
    %1002 = vmatpush1.msra.mxu0 0.0
    %1003 = vmatprep.subr.mxu0 0.0
    %1004 = vmatpush1.msra.mxu0 0.0
    %1005 = vmatprep.mubr.f32.mxu0 0.0
    %1006 = vmatmul.mubr.f32.gmra.mrb[0].mxu0 %v939
    %v1007 = vpop.f32.mrb[0].mxu0
    %v1008 = vadd.f32 0.0, %v1007
    %v1009 = vpop.f32.mrb[0].mxu0
    %1010 = vdwg.mxu0
    %1011 = vrot.lane.b32.xlu0 %v417, 64
    %v1012 = vpop.permute.xlu0 %1011
    %v1015 = vsel %vm738, %v782, 0
    %1017 = vmatprep.subr.mxu0 0.0
    %1018 = vmatpush1.msra.mxu0 %v1012
    %1019 = vmatprep.subr.mxu0 0.0
    %1020 = vmatpush1.msra.mxu0 0.0
    %1021 = vmatprep.subr.mxu0 0.0
    %1022 = vmatpush1.msra.mxu0 0.0
    %1023 = vmatprep.subr.mxu0 0.0
    %1024 = vmatpush1.msra.mxu0 0.0
    %1025 = vmatprep.subr.mxu0 0.0
    %1026 = vmatpush1.msra.mxu0 0.0
    %1027 = vmatprep.subr.mxu0 0.0
    %1028 = vmatpush1.msra.mxu0 0.0
    %1029 = vmatprep.subr.mxu0 0.0
    %1030 = vmatpush1.msra.mxu0 0.0
    %1031 = vmatprep.subr.mxu0 0.0
    %1032 = vmatpush1.msra.mxu0 0.0
    %1033 = vmatprep.subr.mxu0 0.0
    %1034 = vmatpush1.msra.mxu0 0.0
    %1035 = vmatprep.subr.mxu0 0.0
    %1036 = vmatpush1.msra.mxu0 0.0
    %1037 = vmatprep.subr.mxu0 0.0
    %1038 = vmatpush1.msra.mxu0 0.0
    %1039 = vmatprep.subr.mxu0 0.0
    %1040 = vmatpush1.msra.mxu0 0.0
    %1041 = vmatprep.subr.mxu0 0.0
    %1042 = vmatpush1.msra.mxu0 0.0
    %1043 = vmatprep.subr.mxu0 0.0
    %1044 = vmatpush1.msra.mxu0 0.0
    %1045 = vmatprep.subr.mxu0 0.0
    %1046 = vmatpush1.msra.mxu0 0.0
    %1047 = vmatprep.subr.mxu0 0.0
    %1048 = vmatpush1.msra.mxu0 0.0
    %1049 = vmatprep.subr.mxu0 0.0
    %1050 = vmatpush1.msra.mxu0 0.0
    %1051 = vmatprep.subr.mxu0 0.0
    %1052 = vmatpush1.msra.mxu0 0.0
    %1053 = vmatprep.subr.mxu0 0.0
    %1054 = vmatpush1.msra.mxu0 0.0
    %1055 = vmatprep.subr.mxu0 0.0
    %1056 = vmatpush1.msra.mxu0 0.0
    %1057 = vmatprep.subr.mxu0 0.0
    %1058 = vmatpush1.msra.mxu0 0.0
    %1059 = vmatprep.subr.mxu0 0.0
    %1060 = vmatpush1.msra.mxu0 0.0
    %1061 = vmatprep.subr.mxu0 0.0
    %1062 = vmatpush1.msra.mxu0 0.0
    %1063 = vmatprep.subr.mxu0 0.0
    %1064 = vmatpush1.msra.mxu0 0.0
    %1065 = vmatprep.subr.mxu0 0.0
    %1066 = vmatpush1.msra.mxu0 0.0
    %1067 = vmatprep.subr.mxu0 0.0
    %1068 = vmatpush1.msra.mxu0 0.0
    %1069 = vmatprep.subr.mxu0 0.0
    %1070 = vmatpush1.msra.mxu0 0.0
    %1071 = vmatprep.subr.mxu0 0.0
    %1072 = vmatpush1.msra.mxu0 0.0
    %1073 = vmatprep.subr.mxu0 0.0
    %1074 = vmatpush1.msra.mxu0 0.0
    %1075 = vmatprep.subr.mxu0 0.0
    %1076 = vmatpush1.msra.mxu0 0.0
    %1077 = vmatprep.subr.mxu0 0.0
    %1078 = vmatpush1.msra.mxu0 0.0
    %1079 = vmatprep.subr.mxu0 0.0
    %1080 = vmatpush1.msra.mxu0 0.0
    %1081 = vmatprep.mubr.f32.mxu0 0.0
    %1082 = vmatmul.mubr.f32.gmra.mrb[0].mxu0 %v1015
    %v1083 = vpop.f32.mrb[0].mxu0
    %v1084 = vadd.f32 0.0, %v1083
    %v1085 = vpop.f32.mrb[0].mxu0
    %1086 = vdwg.mxu0
    %1088 = vrot.lane.b32.xlu0 %v932, 16
    %v1089 = vpop.permute.xlu0 %1088
    %v1091 = vsel %vm78, %v856, %v1089
    %1093 = vrot.lane.b32.xlu0 %v1084, 16
    %v1094 = vpop.permute.xlu0 %1093
    %v1096 = vsel %vm78, %v1008, %v1094
    %v1097 = vlaneseq
    %v1098 = vshrl.u32 %v1097, 7
    %v1099 = vsub.s32 0, %v1098
    %v1100 = vrot.slane %v320, %v1099
    %v1102 = vsel %vm255, %v1091, 0
    %v1105 = vsel %vm255, %v1096, 0
    %1107 = vmatprep.subr.mxu0 0.0
    %1108 = vmatpush1.msra.mxu0 %v303
    %1109 = vmatprep.subr.mxu0 0.0
    %1110 = vmatpush1.msra.mxu0 %v304
    %1111 = vmatprep.subr.mxu0 0.0
    %1112 = vmatpush1.msra.mxu0 %v305
    %1113 = vmatprep.subr.mxu0 0.0
    %1114 = vmatpush1.msra.mxu0 %v306
    %1115 = vmatprep.subr.mxu0 0.0
    %1116 = vmatpush1.msra.mxu0 0.0
    %1117 = vmatprep.subr.mxu0 0.0
    %1118 = vmatpush1.msra.mxu0 0.0
    %1119 = vmatprep.subr.mxu0 0.0
    %1120 = vmatpush1.msra.mxu0 0.0
    %1121 = vmatprep.subr.mxu0 0.0
    %1122 = vmatpush1.msra.mxu0 0.0
    %1123 = vmatprep.subr.mxu0 0.0
    %1124 = vmatpush1.msra.mxu0 0.0
    %1125 = vmatprep.subr.mxu0 0.0
    %1126 = vmatpush1.msra.mxu0 0.0
    %1127 = vmatprep.subr.mxu0 0.0
    %1128 = vmatpush1.msra.mxu0 0.0
    %1129 = vmatprep.subr.mxu0 0.0
    %1130 = vmatpush1.msra.mxu0 0.0
    %1131 = vmatprep.subr.mxu0 0.0
    %1132 = vmatpush1.msra.mxu0 0.0
    %1133 = vmatprep.subr.mxu0 0.0
    %1134 = vmatpush1.msra.mxu0 0.0
    %1135 = vmatprep.subr.mxu0 0.0
    %1136 = vmatpush1.msra.mxu0 0.0
    %1137 = vmatprep.subr.mxu0 0.0
    %1138 = vmatpush1.msra.mxu0 0.0
    %1139 = vmatprep.subr.mxu0 0.0
    %1140 = vmatpush1.msra.mxu0 0.0
    %1141 = vmatprep.subr.mxu0 0.0
    %1142 = vmatpush1.msra.mxu0 0.0
    %1143 = vmatprep.subr.mxu0 0.0
    %1144 = vmatpush1.msra.mxu0 0.0
    %1145 = vmatprep.subr.mxu0 0.0
    %1146 = vmatpush1.msra.mxu0 0.0
    %1147 = vmatprep.subr.mxu0 0.0
    %1148 = vmatpush1.msra.mxu0 0.0
    %1149 = vmatprep.subr.mxu0 0.0
    %1150 = vmatpush1.msra.mxu0 0.0
    %1151 = vmatprep.subr.mxu0 0.0
    %1152 = vmatpush1.msra.mxu0 0.0
    %1153 = vmatprep.subr.mxu0 0.0
    %1154 = vmatpush1.msra.mxu0 0.0
    %1155 = vmatprep.subr.mxu0 0.0
    %1156 = vmatpush1.msra.mxu0 0.0
    %1157 = vmatprep.subr.mxu0 0.0
    %1158 = vmatpush1.msra.mxu0 0.0
    %1159 = vmatprep.subr.mxu0 0.0
    %1160 = vmatpush1.msra.mxu0 0.0
    %1161 = vmatprep.subr.mxu0 0.0
    %1162 = vmatpush1.msra.mxu0 0.0
    %1163 = vmatprep.subr.mxu0 0.0
    %1164 = vmatpush1.msra.mxu0 0.0
    %1165 = vmatprep.subr.mxu0 0.0
    %1166 = vmatpush1.msra.mxu0 0.0
    %1167 = vmatprep.subr.mxu0 0.0
    %1168 = vmatpush1.msra.mxu0 0.0
    %1169 = vmatprep.subr.mxu0 0.0
    %1170 = vmatpush1.msra.mxu0 0.0
    %1171 = vmatprep.mubr.f32.mxu0 0.0
    %1172 = vmatmul.mubr.f32.gmra.mrb[0].mxu0 %v1102
    %v1173 = vpop.f32.mrb[0].mxu0
    %v1174 = vadd.f32 %v1100, %v1173
    %v1175 = vpop.f32.mrb[0].mxu0
    %1176 = vmatprep.mubr.f32.mxu0 0.0
    %1177 = vmatmul.mubr.f32.gmra.mrb[0].mxu0 %v1105
    %v1178 = vpop.f32.mrb[0].mxu0
    %v1179 = vadd.f32 %v1100, %v1178
    %v1180 = vpop.f32.mrb[0].mxu0
    %1181 = vdwg.mxu0
    %v1182 = vadd.f32 %v293, %v1174
    %v1183 = vadd.f32 %v294, %v1179
    %v1184 = vsel %vm255, %v1182, 0.0
    %1185 = vadd.xlane.f32.xlu0 %v1184
    %v1186 = vpop.xlane.xlu0 %1185
    %v1187 = vsel %vm255, %v1183, 0.0
    %1188 = vadd.xlane.f32.xlu0 %v1187
    %v1189 = vpop.xlane.xlu0 %1188
    %v1190 = vmul.f32 %v1186, %v262
    %v1191 = vmul.f32 %v1189, %v262
    %v1192 = vsub.f32 %v1182, %v1190
    %v1193 = vsub.f32 %v1183, %v1191
    %v1194 = vmul.f32 %v1192, %v1192
    %v1195 = vmul.f32 %v1193, %v1193
    %v1196 = vsel %vm255, %v1194, 0.0
    %1197 = vadd.xlane.f32.xlu0 %v1196
    %v1198 = vpop.xlane.xlu0 %1197
    %v1199 = vsel %vm255, %v1195, 0.0
    %1200 = vadd.xlane.f32.xlu0 %v1199
    %v1201 = vpop.xlane.xlu0 %1200
    %v1202 = vmul.f32 %v1198, %v262
    %v1203 = vmul.f32 %v1201, %v262
    %v1204 = vadd.f32 %v1202, 1e-05
    %v1205 = vadd.f32 %v1203, 1e-05
    %v1206 = vrsqrt.pop %v1204
    %v1207 = vrsqrt.pop %v1205
    %v1208 = vmul.f32 %v1192, %v1206
    %v1209 = vmul.f32 %v1193, %v1207
    %v1210 = vlaneseq
    %v1211 = vshrl.u32 %v1210, 7
    %v1212 = vsub.s32 0, %v1211
    %v1213 = vrot.slane %v321, %v1212
    %v1214 = vmul.f32 %v1208, %v1213
    %v1215 = vmul.f32 %v1209, %v1213
    %v1216 = vlaneseq
    %v1217 = vshrl.u32 %v1216, 7
    %v1218 = vsub.s32 0, %v1217
    %v1219 = vrot.slane %v322, %v1218
    %v1220 = vadd.f32 %v1214, %v1219
    %v1221 = vadd.f32 %v1215, %v1219
    %v1222 = vlaneseq
    %v1223 = vshrl.u32 %v1222, 7
    %v1224 = vsub.s32 0, %v1223
    %v1225 = vrot.slane %v323, %v1224
    %v1227 = vsel %vm255, %v1220, 0
    %v1230 = vsel %vm255, %v1221, 0
    %1232 = vmatprep.subr.mxu0 0.0
    %1233 = vmatpush1.msra.mxu0 %v307
    %1234 = vmatprep.subr.mxu0 0.0
    %1235 = vmatpush1.msra.mxu0 %v308
    %1236 = vmatprep.subr.mxu0 0.0
    %1237 = vmatpush1.msra.mxu0 %v309
    %1238 = vmatprep.subr.mxu0 0.0
    %1239 = vmatpush1.msra.mxu0 %v310
    %1240 = vmatprep.subr.mxu0 0.0
    %1241 = vmatpush1.msra.mxu0 0.0
    %1242 = vmatprep.subr.mxu0 0.0
    %1243 = vmatpush1.msra.mxu0 0.0
    %1244 = vmatprep.subr.mxu0 0.0
    %1245 = vmatpush1.msra.mxu0 0.0
    %1246 = vmatprep.subr.mxu0 0.0
    %1247 = vmatpush1.msra.mxu0 0.0
    %1248 = vmatprep.subr.mxu0 0.0
    %1249 = vmatpush1.msra.mxu0 0.0
    %1250 = vmatprep.subr.mxu0 0.0
    %1251 = vmatpush1.msra.mxu0 0.0
    %1252 = vmatprep.subr.mxu0 0.0
    %1253 = vmatpush1.msra.mxu0 0.0
    %1254 = vmatprep.subr.mxu0 0.0
    %1255 = vmatpush1.msra.mxu0 0.0
    %1256 = vmatprep.subr.mxu0 0.0
    %1257 = vmatpush1.msra.mxu0 0.0
    %1258 = vmatprep.subr.mxu0 0.0
    %1259 = vmatpush1.msra.mxu0 0.0
    %1260 = vmatprep.subr.mxu0 0.0
    %1261 = vmatpush1.msra.mxu0 0.0
    %1262 = vmatprep.subr.mxu0 0.0
    %1263 = vmatpush1.msra.mxu0 0.0
    %1264 = vmatprep.subr.mxu0 0.0
    %1265 = vmatpush1.msra.mxu0 0.0
    %1266 = vmatprep.subr.mxu0 0.0
    %1267 = vmatpush1.msra.mxu0 0.0
    %1268 = vmatprep.subr.mxu0 0.0
    %1269 = vmatpush1.msra.mxu0 0.0
    %1270 = vmatprep.subr.mxu0 0.0
    %1271 = vmatpush1.msra.mxu0 0.0
    %1272 = vmatprep.subr.mxu0 0.0
    %1273 = vmatpush1.msra.mxu0 0.0
    %1274 = vmatprep.subr.mxu0 0.0
    %1275 = vmatpush1.msra.mxu0 0.0
    %1276 = vmatprep.subr.mxu0 0.0
    %1277 = vmatpush1.msra.mxu0 0.0
    %1278 = vmatprep.subr.mxu0 0.0
    %1279 = vmatpush1.msra.mxu0 0.0
    %1280 = vmatprep.subr.mxu0 0.0
    %1281 = vmatpush1.msra.mxu0 0.0
    %1282 = vmatprep.subr.mxu0 0.0
    %1283 = vmatpush1.msra.mxu0 0.0
    %1284 = vmatprep.subr.mxu0 0.0
    %1285 = vmatpush1.msra.mxu0 0.0
    %1286 = vmatprep.subr.mxu0 0.0
    %1287 = vmatpush1.msra.mxu0 0.0
    %1288 = vmatprep.subr.mxu0 0.0
    %1289 = vmatpush1.msra.mxu0 0.0
    %1290 = vmatprep.subr.mxu0 0.0
    %1291 = vmatpush1.msra.mxu0 0.0
    %1292 = vmatprep.subr.mxu0 0.0
    %1293 = vmatpush1.msra.mxu0 0.0
    %1294 = vmatprep.subr.mxu0 0.0
    %1295 = vmatpush1.msra.mxu0 0.0
    %1296 = vmatprep.mubr.f32.mxu0 0.0
    %1297 = vmatmul.mubr.f32.gmra.mrb[0].mxu0 %v1227
    %v1298 = vpop.f32.mrb[0].mxu0
    %v1299 = vadd.f32 %v1225, %v1298
    %v1300 = vpop.f32.mrb[0].mxu0
    %1301 = vmatprep.mubr.f32.mxu0 0.0
    %1302 = vmatmul.mubr.f32.gmra.mrb[0].mxu0 %v1230
    %v1303 = vpop.f32.mrb[0].mxu0
    %v1304 = vadd.f32 %v1225, %v1303
    %v1305 = vpop.f32.mrb[0].mxu0
    %1306 = vdwg.mxu0
    %v1307 = vmul.f32 %v1299, 0.5
    %v1308 = vmul.f32 %v1304, 0.5
    %v1309 = vmul.f32 %v1299, 0.70710677
    %v1310 = vmul.f32 %v1304, 0.70710677
    %v1311 = vand.u32 2147483647, %v1309
    %v1312 = vand.u32 2147483647, %v1310
    %v1313 = vmul.f32 %v1311, 0.3275911
    %v1314 = vmul.f32 %v1312, 0.3275911
    %v1315 = vadd.f32 %v1313, 1.0
    %v1316 = vadd.f32 %v1314, 1.0
    %v1317 = vrcp.pop %v1315
    %v1318 = vmul.f32 1.0, %v1317
    %v1319 = vrcp.pop %v1316
    %v1320 = vmul.f32 1.0, %v1319
    %v1321 = vmul.f32 %v1318, 1.0614054
    %v1322 = vmul.f32 %v1320, 1.0614054
    %v1323 = vadd.f32 %v1321, -1.4531521
    %v1324 = vadd.f32 %v1322, -1.4531521
    %v1325 = vmul.f32 %v1323, %v1318
    %v1326 = vmul.f32 %v1324, %v1320
    %v1327 = vadd.f32 %v1325, 1.4214138
    %v1328 = vadd.f32 %v1326, 1.4214138
    %v1329 = vmul.f32 %v1327, %v1318
    %v1330 = vmul.f32 %v1328, %v1320
    %v1331 = vadd.f32 %v1329, -0.28449672
    %v1332 = vadd.f32 %v1330, -0.28449672
    %v1333 = vmul.f32 %v1331, %v1318
    %v1334 = vmul.f32 %v1332, %v1320
    %v1335 = vadd.f32 %v1333, 0.2548296
    %v1336 = vadd.f32 %v1334, 0.2548296
    %v1337 = vmul.f32 %v1335, %v1318
    %v1338 = vmul.f32 %v1336, %v1320
    %v1339 = vsub.f32 0.0, %v1311
    %v1340 = vsub.f32 0.0, %v1312
    %v1341 = vmul.f32 %v1339, %v1311
    %v1342 = vmul.f32 %v1340, %v1312
    %v1343 = vmul.f32 %v1341, 1.442695
    %v1344 = vpow.pop %v1343
    %v1345 = vmul.f32 %v1342, 1.442695
    %v1346 = vpow.pop %v1345
    %v1347 = vmul.f32 %v1337, %v1344
    %v1348 = vmul.f32 %v1338, %v1346
    %v1349 = vsub.f32 1.0, %v1347
    %v1350 = vsub.f32 1.0, %v1348
    %vm1351 = vcmp.ge.f32.partialorder %v1309, 0.0
    %vm1352 = vcmp.ge.f32.partialorder %v1310, 0.0
    %v1353 = vsub.f32 0.0, %v1349
    %v1354 = vsub.f32 0.0, %v1350
    %v1355 = vsel %vm1351, %v1349, %v1353
    %v1356 = vsel %vm1352, %v1350, %v1354
    %v1357 = vadd.f32 %v1355, 1.0
    %v1358 = vadd.f32 %v1356, 1.0
    %v1359 = vmul.f32 %v1307, %v1357
    %v1360 = vmul.f32 %v1308, %v1358
    %v1361 = vlaneseq
    %v1362 = vshrl.u32 %v1361, 7
    %v1363 = vsub.s32 0, %v1362
    %v1364 = vrot.slane %v324, %v1363
    %vm1365 = vcmask 523264
    %v1367 = vsel %vm1365, %v1359, 0
    %v1370 = vsel %vm1365, %v1360, 0
    %1372 = vmatprep.subr.mxu0 0.0
    %1373 = vmatpush1.msra.mxu0 %v311
    %1374 = vmatprep.subr.mxu0 0.0
    %1375 = vmatpush1.msra.mxu0 %v312
    %1376 = vmatprep.subr.mxu0 0.0
    %1377 = vmatpush1.msra.mxu0 %v313
    %1378 = vmatprep.subr.mxu0 0.0
    %1379 = vmatpush1.msra.mxu0 %v314
    %1380 = vmatprep.subr.mxu0 0.0
    %1381 = vmatpush1.msra.mxu0 %v315
    %1382 = vmatprep.subr.mxu0 0.0
    %1383 = vmatpush1.msra.mxu0 %v316
    %1384 = vmatprep.subr.mxu0 0.0
    %1385 = vmatpush1.msra.mxu0 %v317
    %1386 = vmatprep.subr.mxu0 0.0
    %1387 = vmatpush1.msra.mxu0 %v318
    %1388 = vmatprep.subr.mxu0 0.0
    %1389 = vmatpush1.msra.mxu0 0.0
    %1390 = vmatprep.subr.mxu0 0.0
    %1391 = vmatpush1.msra.mxu0 0.0
    %1392 = vmatprep.subr.mxu0 0.0
    %1393 = vmatpush1.msra.mxu0 0.0
    %1394 = vmatprep.subr.mxu0 0.0
    %1395 = vmatpush1.msra.mxu0 0.0
    %1396 = vmatprep.subr.mxu0 0.0
    %1397 = vmatpush1.msra.mxu0 0.0
    %1398 = vmatprep.subr.mxu0 0.0
    %1399 = vmatpush1.msra.mxu0 0.0
    %1400 = vmatprep.subr.mxu0 0.0
    %1401 = vmatpush1.msra.mxu0 0.0
    %1402 = vmatprep.subr.mxu0 0.0
    %1403 = vmatpush1.msra.mxu0 0.0
    %1404 = vmatprep.subr.mxu0 0.0
    %1405 = vmatpush1.msra.mxu0 0.0
    %1406 = vmatprep.subr.mxu0 0.0
    %1407 = vmatpush1.msra.mxu0 0.0
    %1408 = vmatprep.subr.mxu0 0.0
    %1409 = vmatpush1.msra.mxu0 0.0
    %1410 = vmatprep.subr.mxu0 0.0
    %1411 = vmatpush1.msra.mxu0 0.0
    %1412 = vmatprep.subr.mxu0 0.0
    %1413 = vmatpush1.msra.mxu0 0.0
    %1414 = vmatprep.subr.mxu0 0.0
    %1415 = vmatpush1.msra.mxu0 0.0
    %1416 = vmatprep.subr.mxu0 0.0
    %1417 = vmatpush1.msra.mxu0 0.0
    %1418 = vmatprep.subr.mxu0 0.0
    %1419 = vmatpush1.msra.mxu0 0.0
    %1420 = vmatprep.subr.mxu0 0.0
    %1421 = vmatpush1.msra.mxu0 0.0
    %1422 = vmatprep.subr.mxu0 0.0
    %1423 = vmatpush1.msra.mxu0 0.0
    %1424 = vmatprep.subr.mxu0 0.0
    %1425 = vmatpush1.msra.mxu0 0.0
    %1426 = vmatprep.subr.mxu0 0.0
    %1427 = vmatpush1.msra.mxu0 0.0
    %1428 = vmatprep.subr.mxu0 0.0
    %1429 = vmatpush1.msra.mxu0 0.0
    %1430 = vmatprep.subr.mxu0 0.0
    %1431 = vmatpush1.msra.mxu0 0.0
    %1432 = vmatprep.subr.mxu0 0.0
    %1433 = vmatpush1.msra.mxu0 0.0
    %1434 = vmatprep.subr.mxu0 0.0
    %1435 = vmatpush1.msra.mxu0 0.0
    %1436 = vmatprep.mubr.f32.mxu0 0.0
    %1437 = vmatmul.mubr.f32.gmra.mrb[0].mxu0 %v1367
    %v1438 = vpop.f32.mrb[0].mxu0
    %v1439 = vadd.f32 %v1364, %v1438
    %v1440 = vpop.f32.mrb[0].mxu0
    %1441 = vmatprep.mubr.f32.mxu0 0.0
    %1442 = vmatmul.mubr.f32.gmra.mrb[0].mxu0 %v1370
    %v1443 = vpop.f32.mrb[0].mxu0
    %v1444 = vadd.f32 %v1364, %v1443
    %v1445 = vpop.f32.mrb[0].mxu0
    %1446 = vdwg.mxu0
    %v1447 = vadd.f32 %v1220, %v1439
    %v1448 = vadd.f32 %v1221, %v1444
    %v1449 = vsel %vm255, %v1447, 0.0
    %1450 = vadd.xlane.f32.xlu0 %v1449
    %v1451 = vpop.xlane.xlu0 %1450
    %v1452 = vsel %vm255, %v1448, 0.0
    %1453 = vadd.xlane.f32.xlu0 %v1452
    %v1454 = vpop.xlane.xlu0 %1453
    %v1455 = vmul.f32 %v1451, %v262
    %v1456 = vmul.f32 %v1454, %v262
    %v1457 = vsub.f32 %v1447, %v1455
    %v1458 = vsub.f32 %v1448, %v1456
    %v1459 = vmul.f32 %v1457, %v1457
    %v1460 = vmul.f32 %v1458, %v1458
    %v1461 = vsel %vm255, %v1459, 0.0
    %1462 = vadd.xlane.f32.xlu0 %v1461
    %v1463 = vpop.xlane.xlu0 %1462
    %v1464 = vsel %vm255, %v1460, 0.0
    %1465 = vadd.xlane.f32.xlu0 %v1464
    %v1466 = vpop.xlane.xlu0 %1465
    %v1467 = vmul.f32 %v1463, %v262
    %v1468 = vmul.f32 %v1466, %v262
    %v1469 = vadd.f32 %v1467, 1e-05
    %v1470 = vadd.f32 %v1468, 1e-05
    %v1471 = vrsqrt.pop %v1469
    %v1472 = vrsqrt.pop %v1470
    %v1473 = vmul.f32 %v1457, %v1471
    %v1474 = vmul.f32 %v1458, %v1472
    %v1475 = vlaneseq
    %v1476 = vshrl.u32 %v1475, 7
    %v1477 = vsub.s32 0, %v1476
    %v1478 = vrot.slane %v325, %v1477
    %v1479 = vmul.f32 %v1473, %v1478
    %v1480 = vmul.f32 %v1474, %v1478
    %v1481 = vlaneseq
    %v1482 = vshrl.u32 %v1481, 7
    %v1483 = vsub.s32 0, %v1482
    %v1484 = vrot.slane %v326, %v1483
    %v1485 = vadd.f32 %v1479, %v1484
    %v1486 = vadd.f32 %v1480, %v1484
    %v1487 = vld [vmem:[#allocation2 + $0x118] sm:$0xff]
    %v1488 = vld [vmem:[#allocation2 + $0x120] sm:$0xff]
    %v1489 = vld [vmem:[#allocation2 + $0x128] sm:$0xff]
    %v1490 = vld [vmem:[#allocation2 + $0x130] sm:$0xff]
    %v1491 = vld [vmem:[#allocation2 + $0x138] sm:$0xff]
    %v1492 = vld [vmem:[#allocation2 + $0x140] sm:$0xff]
    %v1493 = vld [vmem:[#allocation2 + $0x148] sm:$0xff]
    %v1494 = vld [vmem:[#allocation2 + $0x150] sm:$0xff]
    %v1495 = vld [vmem:[#allocation2 + $0x158] sm:$0xff]
    %v1496 = vld [vmem:[#allocation2 + $0x160] sm:$0xff]
    %v1497 = vld [vmem:[#allocation2 + $0x168] sm:$0xff]
    %v1498 = vld [vmem:[#allocation2 + $0x170] sm:$0xff]
    %v1499 = vld [vmem:[#allocation2 + $0x178] sm:$0xff]
    %v1500 = vld [vmem:[#allocation2 + $0x180] sm:$0xff]
    %v1501 = vld [vmem:[#allocation2 + $0x188] sm:$0xff]
    %v1502 = vld [vmem:[#allocation2 + $0x190] sm:$0xff]
    %v1503 = vld [vmem:[#allocation2 + $0x198] sm:$0xff]
    %v1504 = vld [vmem:[#allocation2 + $0x1a0] sm:$0xff]
    %v1505 = vld [vmem:[#allocation2 + $0x1a8] sm:$0xff]
    %v1506 = vld [vmem:[#allocation2 + $0x1b0] sm:$0xff]
    %v1507 = vld [vmem:[%s3 + $0xb] sm:$0x1]
    %v1508 = vld [vmem:[%s3 + $0xc] sm:$0x1]
    %v1509 = vld [vmem:[%s3 + $0xd] sm:$0x1]
    %v1510 = vld [vmem:[%s3 + $0xe] sm:$0x1]
    %v1511 = vld [vmem:[%s3 + $0xf] sm:$0x1]
    %v1512 = vld [vmem:[%s3 + $0x10] sm:$0x1]
    %v1513 = vld [vmem:[%s3 + $0x11] sm:$0x1]
    %v1514 = vld [vmem:[%s3 + $0x12] sm:$0x1]
    %v1515 = vlaneseq
    %v1516 = vshrl.u32 %v1515, 7
    %v1517 = vsub.s32 0, %v1516
    %v1518 = vrot.slane %v1507, %v1517
    %v1520 = vsel %vm255, %v1485, 0
    %v1523 = vsel %vm255, %v1486, 0
    %1525 = vmatprep.subr.mxu0 0.0
    %1526 = vmatpush1.msra.mxu0 %v1487
    %1527 = vmatprep.subr.mxu0 0.0
    %1528 = vmatpush1.msra.mxu0 %v1488
    %1529 = vmatprep.subr.mxu0 0.0
    %1530 = vmatpush1.msra.mxu0 %v1489
    %1531 = vmatprep.subr.mxu0 0.0
    %1532 = vmatpush1.msra.mxu0 %v1490
    %1533 = vmatprep.subr.mxu0 0.0
    %1534 = vmatpush1.msra.mxu0 0.0
    %1535 = vmatprep.subr.mxu0 0.0
    %1536 = vmatpush1.msra.mxu0 0.0
    %1537 = vmatprep.subr.mxu0 0.0
    %1538 = vmatpush1.msra.mxu0 0.0
    %1539 = vmatprep.subr.mxu0 0.0
    %1540 = vmatpush1.msra.mxu0 0.0
    %1541 = vmatprep.subr.mxu0 0.0
    %1542 = vmatpush1.msra.mxu0 0.0
    %1543 = vmatprep.subr.mxu0 0.0
    %1544 = vmatpush1.msra.mxu0 0.0
    %1545 = vmatprep.subr.mxu0 0.0
    %1546 = vmatpush1.msra.mxu0 0.0
    %1547 = vmatprep.subr.mxu0 0.0
    %1548 = vmatpush1.msra.mxu0 0.0
    %1549 = vmatprep.subr.mxu0 0.0
    %1550 = vmatpush1.msra.mxu0 0.0
    %1551 = vmatprep.subr.mxu0 0.0
    %1552 = vmatpush1.msra.mxu0 0.0
    %1553 = vmatprep.subr.mxu0 0.0
    %1554 = vmatpush1.msra.mxu0 0.0
    %1555 = vmatprep.subr.mxu0 0.0
    %1556 = vmatpush1.msra.mxu0 0.0
    %1557 = vmatprep.subr.mxu0 0.0
    %1558 = vmatpush1.msra.mxu0 0.0
    %1559 = vmatprep.subr.mxu0 0.0
    %1560 = vmatpush1.msra.mxu0 0.0
    %1561 = vmatprep.subr.mxu0 0.0
    %1562 = vmatpush1.msra.mxu0 0.0
    %1563 = vmatprep.subr.mxu0 0.0
    %1564 = vmatpush1.msra.mxu0 0.0
    %1565 = vmatprep.subr.mxu0 0.0
    %1566 = vmatpush1.msra.mxu0 0.0
    %1567 = vmatprep.subr.mxu0 0.0
    %1568 = vmatpush1.msra.mxu0 0.0
    %1569 = vmatprep.subr.mxu0 0.0
    %1570 = vmatpush1.msra.mxu0 0.0
    %1571 = vmatprep.subr.mxu0 0.0
    %1572 = vmatpush1.msra.mxu0 0.0
    %1573 = vmatprep.subr.mxu0 0.0
    %1574 = vmatpush1.msra.mxu0 0.0
    %1575 = vmatprep.subr.mxu0 0.0
    %1576 = vmatpush1.msra.mxu0 0.0
    %1577 = vmatprep.subr.mxu0 0.0
    %1578 = vmatpush1.msra.mxu0 0.0
    %1579 = vmatprep.subr.mxu0 0.0
    %1580 = vmatpush1.msra.mxu0 0.0
    %1581 = vmatprep.subr.mxu0 0.0
    %1582 = vmatpush1.msra.mxu0 0.0
    %1583 = vmatprep.subr.mxu0 0.0
    %1584 = vmatpush1.msra.mxu0 0.0
    %1585 = vmatprep.subr.mxu0 0.0
    %1586 = vmatpush1.msra.mxu0 0.0
    %1587 = vmatprep.subr.mxu0 0.0
    %1588 = vmatpush1.msra.mxu0 0.0
    %1589 = vmatprep.mubr.f32.mxu0 0.0
    %1590 = vmatmul.mubr.f32.gmra.mrb[0].mxu0 %v1520
    %v1591 = vpop.f32.mrb[0].mxu0
    %v1592 = vadd.f32 %v1518, %v1591
    %v1593 = vpop.f32.mrb[0].mxu0
    %1594 = vmatprep.mubr.f32.mxu0 0.0
    %1595 = vmatmul.mubr.f32.gmra.mrb[0].mxu0 %v1523
    %v1596 = vpop.f32.mrb[0].mxu0
    %v1597 = vadd.f32 %v1518, %v1596
    %v1598 = vpop.f32.mrb[0].mxu0
    %1599 = vdwg.mxu0
    %1601 = vrot.lane.b32.xlu0 %v1592, 112
    %v1602 = vpop.permute.xlu0 %1601
    %1604 = vrot.lane.b32.xlu0 %v1597, 112
    %v1605 = vpop.permute.xlu0 %1604
    %1606 = vrot.lane.b32.xlu0 %v1592, 96
    %v1607 = vpop.permute.xlu0 %1606
    %v1608 = vsel %vm78, %v1592, 0
    %v1610 = vsel %vm78, %v1607, 0
    %1612 = vmatprep.subr.mxu0 0.0
    %1613 = vmatpush1.xpose.msra.mxu0 %v1610
    %1614 = vmatprep.subr.mxu0 0.0
    %1615 = vmatpush1.xpose.msra.mxu0 0.0
    %1616 = vmatprep.subr.mxu0 0.0
    %1617 = vmatpush1.xpose.msra.mxu0 0.0
    %1618 = vmatprep.subr.mxu0 0.0
    %1619 = vmatpush1.xpose.msra.mxu0 0.0
    %1620 = vmatprep.subr.mxu0 0.0
    %1621 = vmatpush1.xpose.msra.mxu0 0.0
    %1622 = vmatprep.subr.mxu0 0.0
    %1623 = vmatpush1.xpose.msra.mxu0 0.0
    %1624 = vmatprep.subr.mxu0 0.0
    %1625 = vmatpush1.xpose.msra.mxu0 0.0
    %1626 = vmatprep.subr.mxu0 0.0
    %1627 = vmatpush1.xpose.msra.mxu0 0.0
    %1628 = vmatprep.subr.mxu0 0.0
    %1629 = vmatpush1.xpose.msra.mxu0 0.0
    %1630 = vmatprep.subr.mxu0 0.0
    %1631 = vmatpush1.xpose.msra.mxu0 0.0
    %1632 = vmatprep.subr.mxu0 0.0
    %1633 = vmatpush1.xpose.msra.mxu0 0.0
    %1634 = vmatprep.subr.mxu0 0.0
    %1635 = vmatpush1.xpose.msra.mxu0 0.0
    %1636 = vmatprep.subr.mxu0 0.0
    %1637 = vmatpush1.xpose.msra.mxu0 0.0
    %1638 = vmatprep.subr.mxu0 0.0
    %1639 = vmatpush1.xpose.msra.mxu0 0.0
    %1640 = vmatprep.subr.mxu0 0.0
    %1641 = vmatpush1.xpose.msra.mxu0 0.0
    %1642 = vmatprep.subr.mxu0 0.0
    %1643 = vmatpush1.xpose.msra.mxu0 0.0
    %1644 = vmatprep.subr.mxu0 0.0
    %1645 = vmatpush1.xpose.msra.mxu0 0.0
    %1646 = vmatprep.subr.mxu0 0.0
    %1647 = vmatpush1.xpose.msra.mxu0 0.0
    %1648 = vmatprep.subr.mxu0 0.0
    %1649 = vmatpush1.xpose.msra.mxu0 0.0
    %1650 = vmatprep.subr.mxu0 0.0
    %1651 = vmatpush1.xpose.msra.mxu0 0.0
    %1652 = vmatprep.subr.mxu0 0.0
    %1653 = vmatpush1.xpose.msra.mxu0 0.0
    %1654 = vmatprep.subr.mxu0 0.0
    %1655 = vmatpush1.xpose.msra.mxu0 0.0
    %1656 = vmatprep.subr.mxu0 0.0
    %1657 = vmatpush1.xpose.msra.mxu0 0.0
    %1658 = vmatprep.subr.mxu0 0.0
    %1659 = vmatpush1.xpose.msra.mxu0 0.0
    %1660 = vmatprep.subr.mxu0 0.0
    %1661 = vmatpush1.xpose.msra.mxu0 0.0
    %1662 = vmatprep.subr.mxu0 0.0
    %1663 = vmatpush1.xpose.msra.mxu0 0.0
    %1664 = vmatprep.subr.mxu0 0.0
    %1665 = vmatpush1.xpose.msra.mxu0 0.0
    %1666 = vmatprep.subr.mxu0 0.0
    %1667 = vmatpush1.xpose.msra.mxu0 0.0
    %1668 = vmatprep.subr.mxu0 0.0
    %1669 = vmatpush1.xpose.msra.mxu0 0.0
    %1670 = vmatprep.subr.mxu0 0.0
    %1671 = vmatpush1.xpose.msra.mxu0 0.0
    %1672 = vmatprep.subr.mxu0 0.0
    %1673 = vmatpush1.xpose.msra.mxu0 0.0
    %1674 = vmatprep.subr.mxu0 0.0
    %1675 = vmatpush1.xpose.msra.mxu0 0.0
    %1676 = vmatprep.mubr.f32.mxu0 0.0
    %1677 = vmatmul.mubr.f32.gmra.mrb[0].mxu0 %v1608
    %v1678 = vpop.f32.mrb[0].mxu0
    %v1679 = vadd.f32 0.0, %v1678
    %v1680 = vpop.f32.mrb[0].mxu0
    %1681 = vdwg.mxu0
    %1682 = vrot.lane.b32.xlu0 %v1602, 96
    %v1683 = vpop.permute.xlu0 %1682
    %v1684 = vsel %vm78, %v1602, 0
    %v1686 = vsel %vm78, %v1683, 0
    %1688 = vmatprep.subr.mxu0 0.0
    %1689 = vmatpush1.xpose.msra.mxu0 %v1686
    %1690 = vmatprep.subr.mxu0 0.0
    %1691 = vmatpush1.xpose.msra.mxu0 0.0
    %1692 = vmatprep.subr.mxu0 0.0
    %1693 = vmatpush1.xpose.msra.mxu0 0.0
    %1694 = vmatprep.subr.mxu0 0.0
    %1695 = vmatpush1.xpose.msra.mxu0 0.0
    %1696 = vmatprep.subr.mxu0 0.0
    %1697 = vmatpush1.xpose.msra.mxu0 0.0
    %1698 = vmatprep.subr.mxu0 0.0
    %1699 = vmatpush1.xpose.msra.mxu0 0.0
    %1700 = vmatprep.subr.mxu0 0.0
    %1701 = vmatpush1.xpose.msra.mxu0 0.0
    %1702 = vmatprep.subr.mxu0 0.0
    %1703 = vmatpush1.xpose.msra.mxu0 0.0
    %1704 = vmatprep.subr.mxu0 0.0
    %1705 = vmatpush1.xpose.msra.mxu0 0.0
    %1706 = vmatprep.subr.mxu0 0.0
    %1707 = vmatpush1.xpose.msra.mxu0 0.0
    %1708 = vmatprep.subr.mxu0 0.0
    %1709 = vmatpush1.xpose.msra.mxu0 0.0
    %1710 = vmatprep.subr.mxu0 0.0
    %1711 = vmatpush1.xpose.msra.mxu0 0.0
    %1712 = vmatprep.subr.mxu0 0.0
    %1713 = vmatpush1.xpose.msra.mxu0 0.0
    %1714 = vmatprep.subr.mxu0 0.0
    %1715 = vmatpush1.xpose.msra.mxu0 0.0
    %1716 = vmatprep.subr.mxu0 0.0
    %1717 = vmatpush1.xpose.msra.mxu0 0.0
    %1718 = vmatprep.subr.mxu0 0.0
    %1719 = vmatpush1.xpose.msra.mxu0 0.0
    %1720 = vmatprep.subr.mxu0 0.0
    %1721 = vmatpush1.xpose.msra.mxu0 0.0
    %1722 = vmatprep.subr.mxu0 0.0
    %1723 = vmatpush1.xpose.msra.mxu0 0.0
    %1724 = vmatprep.subr.mxu0 0.0
    %1725 = vmatpush1.xpose.msra.mxu0 0.0
    %1726 = vmatprep.subr.mxu0 0.0
    %1727 = vmatpush1.xpose.msra.mxu0 0.0
    %1728 = vmatprep.subr.mxu0 0.0
    %1729 = vmatpush1.xpose.msra.mxu0 0.0
    %1730 = vmatprep.subr.mxu0 0.0
    %1731 = vmatpush1.xpose.msra.mxu0 0.0
    %1732 = vmatprep.subr.mxu0 0.0
    %1733 = vmatpush1.xpose.msra.mxu0 0.0
    %1734 = vmatprep.subr.mxu0 0.0
    %1735 = vmatpush1.xpose.msra.mxu0 0.0
    %1736 = vmatprep.subr.mxu0 0.0
    %1737 = vmatpush1.xpose.msra.mxu0 0.0
    %1738 = vmatprep.subr.mxu0 0.0
    %1739 = vmatpush1.xpose.msra.mxu0 0.0
    %1740 = vmatprep.subr.mxu0 0.0
    %1741 = vmatpush1.xpose.msra.mxu0 0.0
    %1742 = vmatprep.subr.mxu0 0.0
    %1743 = vmatpush1.xpose.msra.mxu0 0.0
    %1744 = vmatprep.subr.mxu0 0.0
    %1745 = vmatpush1.xpose.msra.mxu0 0.0
    %1746 = vmatprep.subr.mxu0 0.0
    %1747 = vmatpush1.xpose.msra.mxu0 0.0
    %1748 = vmatprep.subr.mxu0 0.0
    %1749 = vmatpush1.xpose.msra.mxu0 0.0
    %1750 = vmatprep.subr.mxu0 0.0
    %1751 = vmatpush1.xpose.msra.mxu0 0.0
    %1752 = vmatprep.mubr.f32.mxu0 0.0
    %1753 = vmatmul.mubr.f32.gmra.mrb[0].mxu0 %v1684
    %v1754 = vpop.f32.mrb[0].mxu0
    %v1755 = vadd.f32 0.0, %v1754
    %v1756 = vpop.f32.mrb[0].mxu0
    %1757 = vdwg.mxu0
    %1758 = vrot.lane.b32.xlu0 %v1597, 96
    %v1759 = vpop.permute.xlu0 %1758
    %v1760 = vsel %vm78, %v1597, 0
    %v1762 = vsel %vm78, %v1759, 0
    %1764 = vmatprep.subr.mxu0 0.0
    %1765 = vmatpush1.xpose.msra.mxu0 %v1762
    %1766 = vmatprep.subr.mxu0 0.0
    %1767 = vmatpush1.xpose.msra.mxu0 0.0
    %1768 = vmatprep.subr.mxu0 0.0
    %1769 = vmatpush1.xpose.msra.mxu0 0.0
    %1770 = vmatprep.subr.mxu0 0.0
    %1771 = vmatpush1.xpose.msra.mxu0 0.0
    %1772 = vmatprep.subr.mxu0 0.0
    %1773 = vmatpush1.xpose.msra.mxu0 0.0
    %1774 = vmatprep.subr.mxu0 0.0
    %1775 = vmatpush1.xpose.msra.mxu0 0.0
    %1776 = vmatprep.subr.mxu0 0.0
    %1777 = vmatpush1.xpose.msra.mxu0 0.0
    %1778 = vmatprep.subr.mxu0 0.0
    %1779 = vmatpush1.xpose.msra.mxu0 0.0
    %1780 = vmatprep.subr.mxu0 0.0
    %1781 = vmatpush1.xpose.msra.mxu0 0.0
    %1782 = vmatprep.subr.mxu0 0.0
    %1783 = vmatpush1.xpose.msra.mxu0 0.0
    %1784 = vmatprep.subr.mxu0 0.0
    %1785 = vmatpush1.xpose.msra.mxu0 0.0
    %1786 = vmatprep.subr.mxu0 0.0
    %1787 = vmatpush1.xpose.msra.mxu0 0.0
    %1788 = vmatprep.subr.mxu0 0.0
    %1789 = vmatpush1.xpose.msra.mxu0 0.0
    %1790 = vmatprep.subr.mxu0 0.0
    %1791 = vmatpush1.xpose.msra.mxu0 0.0
    %1792 = vmatprep.subr.mxu0 0.0
    %1793 = vmatpush1.xpose.msra.mxu0 0.0
    %1794 = vmatprep.subr.mxu0 0.0
    %1795 = vmatpush1.xpose.msra.mxu0 0.0
    %1796 = vmatprep.subr.mxu0 0.0
    %1797 = vmatpush1.xpose.msra.mxu0 0.0
    %1798 = vmatprep.subr.mxu0 0.0
    %1799 = vmatpush1.xpose.msra.mxu0 0.0
    %1800 = vmatprep.subr.mxu0 0.0
    %1801 = vmatpush1.xpose.msra.mxu0 0.0
    %1802 = vmatprep.subr.mxu0 0.0
    %1803 = vmatpush1.xpose.msra.mxu0 0.0
    %1804 = vmatprep.subr.mxu0 0.0
    %1805 = vmatpush1.xpose.msra.mxu0 0.0
    %1806 = vmatprep.subr.mxu0 0.0
    %1807 = vmatpush1.xpose.msra.mxu0 0.0
    %1808 = vmatprep.subr.mxu0 0.0
    %1809 = vmatpush1.xpose.msra.mxu0 0.0
    %1810 = vmatprep.subr.mxu0 0.0
    %1811 = vmatpush1.xpose.msra.mxu0 0.0
    %1812 = vmatprep.subr.mxu0 0.0
    %1813 = vmatpush1.xpose.msra.mxu0 0.0
    %1814 = vmatprep.subr.mxu0 0.0
    %1815 = vmatpush1.xpose.msra.mxu0 0.0
    %1816 = vmatprep.subr.mxu0 0.0
    %1817 = vmatpush1.xpose.msra.mxu0 0.0
    %1818 = vmatprep.subr.mxu0 0.0
    %1819 = vmatpush1.xpose.msra.mxu0 0.0
    %1820 = vmatprep.subr.mxu0 0.0
    %1821 = vmatpush1.xpose.msra.mxu0 0.0
    %1822 = vmatprep.subr.mxu0 0.0
    %1823 = vmatpush1.xpose.msra.mxu0 0.0
    %1824 = vmatprep.subr.mxu0 0.0
    %1825 = vmatpush1.xpose.msra.mxu0 0.0
    %1826 = vmatprep.subr.mxu0 0.0
    %1827 = vmatpush1.xpose.msra.mxu0 0.0
    %1828 = vmatprep.mubr.f32.mxu0 0.0
    %1829 = vmatmul.mubr.f32.gmra.mrb[0].mxu0 %v1760
    %v1830 = vpop.f32.mrb[0].mxu0
    %v1831 = vadd.f32 0.0, %v1830
    %v1832 = vpop.f32.mrb[0].mxu0
    %1833 = vdwg.mxu0
    %1834 = vrot.lane.b32.xlu0 %v1605, 96
    %v1835 = vpop.permute.xlu0 %1834
    %v1836 = vsel %vm78, %v1605, 0
    %v1838 = vsel %vm78, %v1835, 0
    %1840 = vmatprep.subr.mxu0 0.0
    %1841 = vmatpush1.xpose.msra.mxu0 %v1838
    %1842 = vmatprep.subr.mxu0 0.0
    %1843 = vmatpush1.xpose.msra.mxu0 0.0
    %1844 = vmatprep.subr.mxu0 0.0
    %1845 = vmatpush1.xpose.msra.mxu0 0.0
    %1846 = vmatprep.subr.mxu0 0.0
    %1847 = vmatpush1.xpose.msra.mxu0 0.0
    %1848 = vmatprep.subr.mxu0 0.0
    %1849 = vmatpush1.xpose.msra.mxu0 0.0
    %1850 = vmatprep.subr.mxu0 0.0
    %1851 = vmatpush1.xpose.msra.mxu0 0.0
    %1852 = vmatprep.subr.mxu0 0.0
    %1853 = vmatpush1.xpose.msra.mxu0 0.0
    %1854 = vmatprep.subr.mxu0 0.0
    %1855 = vmatpush1.xpose.msra.mxu0 0.0
    %1856 = vmatprep.subr.mxu0 0.0
    %1857 = vmatpush1.xpose.msra.mxu0 0.0
    %1858 = vmatprep.subr.mxu0 0.0
    %1859 = vmatpush1.xpose.msra.mxu0 0.0
    %1860 = vmatprep.subr.mxu0 0.0
    %1861 = vmatpush1.xpose.msra.mxu0 0.0
    %1862 = vmatprep.subr.mxu0 0.0
    %1863 = vmatpush1.xpose.msra.mxu0 0.0
    %1864 = vmatprep.subr.mxu0 0.0
    %1865 = vmatpush1.xpose.msra.mxu0 0.0
    %1866 = vmatprep.subr.mxu0 0.0
    %1867 = vmatpush1.xpose.msra.mxu0 0.0
    %1868 = vmatprep.subr.mxu0 0.0
    %1869 = vmatpush1.xpose.msra.mxu0 0.0
    %1870 = vmatprep.subr.mxu0 0.0
    %1871 = vmatpush1.xpose.msra.mxu0 0.0
    %1872 = vmatprep.subr.mxu0 0.0
    %1873 = vmatpush1.xpose.msra.mxu0 0.0
    %1874 = vmatprep.subr.mxu0 0.0
    %1875 = vmatpush1.xpose.msra.mxu0 0.0
    %1876 = vmatprep.subr.mxu0 0.0
    %1877 = vmatpush1.xpose.msra.mxu0 0.0
    %1878 = vmatprep.subr.mxu0 0.0
    %1879 = vmatpush1.xpose.msra.mxu0 0.0
    %1880 = vmatprep.subr.mxu0 0.0
    %1881 = vmatpush1.xpose.msra.mxu0 0.0
    %1882 = vmatprep.subr.mxu0 0.0
    %1883 = vmatpush1.xpose.msra.mxu0 0.0
    %1884 = vmatprep.subr.mxu0 0.0
    %1885 = vmatpush1.xpose.msra.mxu0 0.0
    %1886 = vmatprep.subr.mxu0 0.0
    %1887 = vmatpush1.xpose.msra.mxu0 0.0
    %1888 = vmatprep.subr.mxu0 0.0
    %1889 = vmatpush1.xpose.msra.mxu0 0.0
    %1890 = vmatprep.subr.mxu0 0.0
    %1891 = vmatpush1.xpose.msra.mxu0 0.0
    %1892 = vmatprep.subr.mxu0 0.0
    %1893 = vmatpush1.xpose.msra.mxu0 0.0
    %1894 = vmatprep.subr.mxu0 0.0
    %1895 = vmatpush1.xpose.msra.mxu0 0.0
    %1896 = vmatprep.subr.mxu0 0.0
    %1897 = vmatpush1.xpose.msra.mxu0 0.0
    %1898 = vmatprep.subr.mxu0 0.0
    %1899 = vmatpush1.xpose.msra.mxu0 0.0
    %1900 = vmatprep.subr.mxu0 0.0
    %1901 = vmatpush1.xpose.msra.mxu0 0.0
    %1902 = vmatprep.subr.mxu0 0.0
    %1903 = vmatpush1.xpose.msra.mxu0 0.0
    %1904 = vmatprep.mubr.f32.mxu0 0.0
    %1905 = vmatmul.mubr.f32.gmra.mrb[0].mxu0 %v1836
    %v1906 = vpop.f32.mrb[0].mxu0
    %v1907 = vadd.f32 0.0, %v1906
    %v1908 = vpop.f32.mrb[0].mxu0
    %1909 = vdwg.mxu0
    %v1910 = vmul.f32 %v1679, 0.25
    %v1911 = vmul.f32 %v1755, 0.25
    %v1912 = vmul.f32 %v1831, 0.25
    %v1913 = vmul.f32 %v1907, 0.25
    %v1914 = vadd.f32 %v1910, %v729
    %v1915 = vadd.f32 %v1911, %v729
    %v1916 = vadd.f32 %v1912, %v733
    %v1917 = vadd.f32 %v1913, %v733
    %v1918 = vsel %vm738, %v1914, -inf
    %1919 = vmax.xlane.f32.xlu0 %v1918
    %v1920 = vpop.xlane.xlu0 %1919
    %v1921 = vsel %vm738, %v1915, -inf
    %1922 = vmax.xlane.f32.xlu0 %v1921
    %v1923 = vpop.xlane.xlu0 %1922
    %v1924 = vsel %vm738, %v1916, -inf
    %1925 = vmax.xlane.f32.xlu0 %v1924
    %v1926 = vpop.xlane.xlu0 %1925
    %v1927 = vsel %vm738, %v1917, -inf
    %1928 = vmax.xlane.f32.xlu0 %v1927
    %v1929 = vpop.xlane.xlu0 %1928
    %v1930 = vsub.f32 %v1914, %v1920
    %v1931 = vsub.f32 %v1915, %v1923
    %v1932 = vsub.f32 %v1916, %v1926
    %v1933 = vsub.f32 %v1917, %v1929
    %v1934 = vmul.f32 %v1930, 1.442695
    %v1935 = vpow.pop %v1934
    %v1936 = vmul.f32 %v1931, 1.442695
    %v1937 = vpow.pop %v1936
    %v1938 = vmul.f32 %v1932, 1.442695
    %v1939 = vpow.pop %v1938
    %v1940 = vmul.f32 %v1933, 1.442695
    %v1941 = vpow.pop %v1940
    %v1942 = vsel %vm738, %v1935, 0.0
    %1943 = vadd.xlane.f32.xlu0 %v1942
    %v1944 = vpop.xlane.xlu0 %1943
    %v1945 = vsel %vm738, %v1937, 0.0
    %1946 = vadd.xlane.f32.xlu0 %v1945
    %v1947 = vpop.xlane.xlu0 %1946
    %v1948 = vsel %vm738, %v1939, 0.0
    %1949 = vadd.xlane.f32.xlu0 %v1948
    %v1950 = vpop.xlane.xlu0 %1949
    %v1951 = vsel %vm738, %v1941, 0.0
    %1952 = vadd.xlane.f32.xlu0 %v1951
    %v1953 = vpop.xlane.xlu0 %1952
    %v1954 = vrcp.pop %v1944
    %v1955 = vrcp.pop %v1947
    %v1956 = vrcp.pop %v1950
    %v1957 = vrcp.pop %v1953
    %v1958 = vmul.f32 %v1935, %v1954
    %v1959 = vmul.f32 %v1937, %v1955
    %v1960 = vmul.f32 %v1939, %v1956
    %v1961 = vmul.f32 %v1941, %v1957
    %1962 = vrot.lane.b32.xlu0 %v1592, 64
    %v1963 = vpop.permute.xlu0 %1962
    %v1966 = vsel %vm738, %v1958, 0
    %1968 = vmatprep.subr.mxu0 0.0
    %1969 = vmatpush1.msra.mxu0 %v1963
    %1970 = vmatprep.subr.mxu0 0.0
    %1971 = vmatpush1.msra.mxu0 0.0
    %1972 = vmatprep.subr.mxu0 0.0
    %1973 = vmatpush1.msra.mxu0 0.0
    %1974 = vmatprep.subr.mxu0 0.0
    %1975 = vmatpush1.msra.mxu0 0.0
    %1976 = vmatprep.subr.mxu0 0.0
    %1977 = vmatpush1.msra.mxu0 0.0
    %1978 = vmatprep.subr.mxu0 0.0
    %1979 = vmatpush1.msra.mxu0 0.0
    %1980 = vmatprep.subr.mxu0 0.0
    %1981 = vmatpush1.msra.mxu0 0.0
    %1982 = vmatprep.subr.mxu0 0.0
    %1983 = vmatpush1.msra.mxu0 0.0
    %1984 = vmatprep.subr.mxu0 0.0
    %1985 = vmatpush1.msra.mxu0 0.0
    %1986 = vmatprep.subr.mxu0 0.0
    %1987 = vmatpush1.msra.mxu0 0.0
    %1988 = vmatprep.subr.mxu0 0.0
    %1989 = vmatpush1.msra.mxu0 0.0
    %1990 = vmatprep.subr.mxu0 0.0
    %1991 = vmatpush1.msra.mxu0 0.0
    %1992 = vmatprep.subr.mxu0 0.0
    %1993 = vmatpush1.msra.mxu0 0.0
    %1994 = vmatprep.subr.mxu0 0.0
    %1995 = vmatpush1.msra.mxu0 0.0
    %1996 = vmatprep.subr.mxu0 0.0
    %1997 = vmatpush1.msra.mxu0 0.0
    %1998 = vmatprep.subr.mxu0 0.0
    %1999 = vmatpush1.msra.mxu0 0.0
    %2000 = vmatprep.subr.mxu0 0.0
    %2001 = vmatpush1.msra.mxu0 0.0
    %2002 = vmatprep.subr.mxu0 0.0
    %2003 = vmatpush1.msra.mxu0 0.0
    %2004 = vmatprep.subr.mxu0 0.0
    %2005 = vmatpush1.msra.mxu0 0.0
    %2006 = vmatprep.subr.mxu0 0.0
    %2007 = vmatpush1.msra.mxu0 0.0
    %2008 = vmatprep.subr.mxu0 0.0
    %2009 = vmatpush1.msra.mxu0 0.0
    %2010 = vmatprep.subr.mxu0 0.0
    %2011 = vmatpush1.msra.mxu0 0.0
    %2012 = vmatprep.subr.mxu0 0.0
    %2013 = vmatpush1.msra.mxu0 0.0
    %2014 = vmatprep.subr.mxu0 0.0
    %2015 = vmatpush1.msra.mxu0 0.0
    %2016 = vmatprep.subr.mxu0 0.0
    %2017 = vmatpush1.msra.mxu0 0.0
    %2018 = vmatprep.subr.mxu0 0.0
    %2019 = vmatpush1.msra.mxu0 0.0
    %2020 = vmatprep.subr.mxu0 0.0
    %2021 = vmatpush1.msra.mxu0 0.0
    %2022 = vmatprep.subr.mxu0 0.0
    %2023 = vmatpush1.msra.mxu0 0.0
    %2024 = vmatprep.subr.mxu0 0.0
    %2025 = vmatpush1.msra.mxu0 0.0
    %2026 = vmatprep.subr.mxu0 0.0
    %2027 = vmatpush1.msra.mxu0 0.0
    %2028 = vmatprep.subr.mxu0 0.0
    %2029 = vmatpush1.msra.mxu0 0.0
    %2030 = vmatprep.subr.mxu0 0.0
    %2031 = vmatpush1.msra.mxu0 0.0
    %2032 = vmatprep.mubr.f32.mxu0 0.0
    %2033 = vmatmul.mubr.f32.gmra.mrb[0].mxu0 %v1966
    %v2034 = vpop.f32.mrb[0].mxu0
    %v2035 = vadd.f32 0.0, %v2034
    %v2036 = vpop.f32.mrb[0].mxu0
    %2037 = vdwg.mxu0
    %2038 = vrot.lane.b32.xlu0 %v1602, 64
    %v2039 = vpop.permute.xlu0 %2038
    %v2042 = vsel %vm738, %v1959, 0
    %2044 = vmatprep.subr.mxu0 0.0
    %2045 = vmatpush1.msra.mxu0 %v2039
    %2046 = vmatprep.subr.mxu0 0.0
    %2047 = vmatpush1.msra.mxu0 0.0
    %2048 = vmatprep.subr.mxu0 0.0
    %2049 = vmatpush1.msra.mxu0 0.0
    %2050 = vmatprep.subr.mxu0 0.0
    %2051 = vmatpush1.msra.mxu0 0.0
    %2052 = vmatprep.subr.mxu0 0.0
    %2053 = vmatpush1.msra.mxu0 0.0
    %2054 = vmatprep.subr.mxu0 0.0
    %2055 = vmatpush1.msra.mxu0 0.0
    %2056 = vmatprep.subr.mxu0 0.0
    %2057 = vmatpush1.msra.mxu0 0.0
    %2058 = vmatprep.subr.mxu0 0.0
    %2059 = vmatpush1.msra.mxu0 0.0
    %2060 = vmatprep.subr.mxu0 0.0
    %2061 = vmatpush1.msra.mxu0 0.0
    %2062 = vmatprep.subr.mxu0 0.0
    %2063 = vmatpush1.msra.mxu0 0.0
    %2064 = vmatprep.subr.mxu0 0.0
    %2065 = vmatpush1.msra.mxu0 0.0
    %2066 = vmatprep.subr.mxu0 0.0
    %2067 = vmatpush1.msra.mxu0 0.0
    %2068 = vmatprep.subr.mxu0 0.0
    %2069 = vmatpush1.msra.mxu0 0.0
    %2070 = vmatprep.subr.mxu0 0.0
    %2071 = vmatpush1.msra.mxu0 0.0
    %2072 = vmatprep.subr.mxu0 0.0
    %2073 = vmatpush1.msra.mxu0 0.0
    %2074 = vmatprep.subr.mxu0 0.0
    %2075 = vmatpush1.msra.mxu0 0.0
    %2076 = vmatprep.subr.mxu0 0.0
    %2077 = vmatpush1.msra.mxu0 0.0
    %2078 = vmatprep.subr.mxu0 0.0
    %2079 = vmatpush1.msra.mxu0 0.0
    %2080 = vmatprep.subr.mxu0 0.0
    %2081 = vmatpush1.msra.mxu0 0.0
    %2082 = vmatprep.subr.mxu0 0.0
    %2083 = vmatpush1.msra.mxu0 0.0
    %2084 = vmatprep.subr.mxu0 0.0
    %2085 = vmatpush1.msra.mxu0 0.0
    %2086 = vmatprep.subr.mxu0 0.0
    %2087 = vmatpush1.msra.mxu0 0.0
    %2088 = vmatprep.subr.mxu0 0.0
    %2089 = vmatpush1.msra.mxu0 0.0
    %2090 = vmatprep.subr.mxu0 0.0
    %2091 = vmatpush1.msra.mxu0 0.0
    %2092 = vmatprep.subr.mxu0 0.0
    %2093 = vmatpush1.msra.mxu0 0.0
    %2094 = vmatprep.subr.mxu0 0.0
    %2095 = vmatpush1.msra.mxu0 0.0
    %2096 = vmatprep.subr.mxu0 0.0
    %2097 = vmatpush1.msra.mxu0 0.0
    %2098 = vmatprep.subr.mxu0 0.0
    %2099 = vmatpush1.msra.mxu0 0.0
    %2100 = vmatprep.subr.mxu0 0.0
    %2101 = vmatpush1.msra.mxu0 0.0
    %2102 = vmatprep.subr.mxu0 0.0
    %2103 = vmatpush1.msra.mxu0 0.0
    %2104 = vmatprep.subr.mxu0 0.0
    %2105 = vmatpush1.msra.mxu0 0.0
    %2106 = vmatprep.subr.mxu0 0.0
    %2107 = vmatpush1.msra.mxu0 0.0
    %2108 = vmatprep.mubr.f32.mxu0 0.0
    %2109 = vmatmul.mubr.f32.gmra.mrb[0].mxu0 %v2042
    %v2110 = vpop.f32.mrb[0].mxu0
    %v2111 = vadd.f32 0.0, %v2110
    %v2112 = vpop.f32.mrb[0].mxu0
    %2113 = vdwg.mxu0
    %2114 = vrot.lane.b32.xlu0 %v1597, 64
    %v2115 = vpop.permute.xlu0 %2114
    %v2118 = vsel %vm738, %v1960, 0
    %2120 = vmatprep.subr.mxu0 0.0
    %2121 = vmatpush1.msra.mxu0 %v2115
    %2122 = vmatprep.subr.mxu0 0.0
    %2123 = vmatpush1.msra.mxu0 0.0
    %2124 = vmatprep.subr.mxu0 0.0
    %2125 = vmatpush1.msra.mxu0 0.0
    %2126 = vmatprep.subr.mxu0 0.0
    %2127 = vmatpush1.msra.mxu0 0.0
    %2128 = vmatprep.subr.mxu0 0.0
    %2129 = vmatpush1.msra.mxu0 0.0
    %2130 = vmatprep.subr.mxu0 0.0
    %2131 = vmatpush1.msra.mxu0 0.0
    %2132 = vmatprep.subr.mxu0 0.0
    %2133 = vmatpush1.msra.mxu0 0.0
    %2134 = vmatprep.subr.mxu0 0.0
    %2135 = vmatpush1.msra.mxu0 0.0
    %2136 = vmatprep.subr.mxu0 0.0
    %2137 = vmatpush1.msra.mxu0 0.0
    %2138 = vmatprep.subr.mxu0 0.0
    %2139 = vmatpush1.msra.mxu0 0.0
    %2140 = vmatprep.subr.mxu0 0.0
    %2141 = vmatpush1.msra.mxu0 0.0
    %2142 = vmatprep.subr.mxu0 0.0
    %2143 = vmatpush1.msra.mxu0 0.0
    %2144 = vmatprep.subr.mxu0 0.0
    %2145 = vmatpush1.msra.mxu0 0.0
    %2146 = vmatprep.subr.mxu0 0.0
    %2147 = vmatpush1.msra.mxu0 0.0
    %2148 = vmatprep.subr.mxu0 0.0
    %2149 = vmatpush1.msra.mxu0 0.0
    %2150 = vmatprep.subr.mxu0 0.0
    %2151 = vmatpush1.msra.mxu0 0.0
    %2152 = vmatprep.subr.mxu0 0.0
    %2153 = vmatpush1.msra.mxu0 0.0
    %2154 = vmatprep.subr.mxu0 0.0
    %2155 = vmatpush1.msra.mxu0 0.0
    %2156 = vmatprep.subr.mxu0 0.0
    %2157 = vmatpush1.msra.mxu0 0.0
    %2158 = vmatprep.subr.mxu0 0.0
    %2159 = vmatpush1.msra.mxu0 0.0
    %2160 = vmatprep.subr.mxu0 0.0
    %2161 = vmatpush1.msra.mxu0 0.0
    %2162 = vmatprep.subr.mxu0 0.0
    %2163 = vmatpush1.msra.mxu0 0.0
    %2164 = vmatprep.subr.mxu0 0.0
    %2165 = vmatpush1.msra.mxu0 0.0
    %2166 = vmatprep.subr.mxu0 0.0
    %2167 = vmatpush1.msra.mxu0 0.0
    %2168 = vmatprep.subr.mxu0 0.0
    %2169 = vmatpush1.msra.mxu0 0.0
    %2170 = vmatprep.subr.mxu0 0.0
    %2171 = vmatpush1.msra.mxu0 0.0
    %2172 = vmatprep.subr.mxu0 0.0
    %2173 = vmatpush1.msra.mxu0 0.0
    %2174 = vmatprep.subr.mxu0 0.0
    %2175 = vmatpush1.msra.mxu0 0.0
    %2176 = vmatprep.subr.mxu0 0.0
    %2177 = vmatpush1.msra.mxu0 0.0
    %2178 = vmatprep.subr.mxu0 0.0
    %2179 = vmatpush1.msra.mxu0 0.0
    %2180 = vmatprep.subr.mxu0 0.0
    %2181 = vmatpush1.msra.mxu0 0.0
    %2182 = vmatprep.subr.mxu0 0.0
    %2183 = vmatpush1.msra.mxu0 0.0
    %2184 = vmatprep.mubr.f32.mxu0 0.0
    %2185 = vmatmul.mubr.f32.gmra.mrb[0].mxu0 %v2118
    %v2186 = vpop.f32.mrb[0].mxu0
    %v2187 = vadd.f32 0.0, %v2186
    %v2188 = vpop.f32.mrb[0].mxu0
    %2189 = vdwg.mxu0
    %2190 = vrot.lane.b32.xlu0 %v1605, 64
    %v2191 = vpop.permute.xlu0 %2190
    %v2194 = vsel %vm738, %v1961, 0
    %2196 = vmatprep.subr.mxu0 0.0
    %2197 = vmatpush1.msra.mxu0 %v2191
    %2198 = vmatprep.subr.mxu0 0.0
    %2199 = vmatpush1.msra.mxu0 0.0
    %2200 = vmatprep.subr.mxu0 0.0
    %2201 = vmatpush1.msra.mxu0 0.0
    %2202 = vmatprep.subr.mxu0 0.0
    %2203 = vmatpush1.msra.mxu0 0.0
    %2204 = vmatprep.subr.mxu0 0.0
    %2205 = vmatpush1.msra.mxu0 0.0
    %2206 = vmatprep.subr.mxu0 0.0
    %2207 = vmatpush1.msra.mxu0 0.0
    %2208 = vmatprep.subr.mxu0 0.0
    %2209 = vmatpush1.msra.mxu0 0.0
    %2210 = vmatprep.subr.mxu0 0.0
    %2211 = vmatpush1.msra.mxu0 0.0
    %2212 = vmatprep.subr.mxu0 0.0
    %2213 = vmatpush1.msra.mxu0 0.0
    %2214 = vmatprep.subr.mxu0 0.0
    %2215 = vmatpush1.msra.mxu0 0.0
    %2216 = vmatprep.subr.mxu0 0.0
    %2217 = vmatpush1.msra.mxu0 0.0
    %2218 = vmatprep.subr.mxu0 0.0
    %2219 = vmatpush1.msra.mxu0 0.0
    %2220 = vmatprep.subr.mxu0 0.0
    %2221 = vmatpush1.msra.mxu0 0.0
    %2222 = vmatprep.subr.mxu0 0.0
    %2223 = vmatpush1.msra.mxu0 0.0
    %2224 = vmatprep.subr.mxu0 0.0
    %2225 = vmatpush1.msra.mxu0 0.0
    %2226 = vmatprep.subr.mxu0 0.0
    %2227 = vmatpush1.msra.mxu0 0.0
    %2228 = vmatprep.subr.mxu0 0.0
    %2229 = vmatpush1.msra.mxu0 0.0
    %2230 = vmatprep.subr.mxu0 0.0
    %2231 = vmatpush1.msra.mxu0 0.0
    %2232 = vmatprep.subr.mxu0 0.0
    %2233 = vmatpush1.msra.mxu0 0.0
    %2234 = vmatprep.subr.mxu0 0.0
    %2235 = vmatpush1.msra.mxu0 0.0
    %2236 = vmatprep.subr.mxu0 0.0
    %2237 = vmatpush1.msra.mxu0 0.0
    %2238 = vmatprep.subr.mxu0 0.0
    %2239 = vmatpush1.msra.mxu0 0.0
    %2240 = vmatprep.subr.mxu0 0.0
    %2241 = vmatpush1.msra.mxu0 0.0
    %2242 = vmatprep.subr.mxu0 0.0
    %2243 = vmatpush1.msra.mxu0 0.0
    %2244 = vmatprep.subr.mxu0 0.0
    %2245 = vmatpush1.msra.mxu0 0.0
    %2246 = vmatprep.subr.mxu0 0.0
    %2247 = vmatpush1.msra.mxu0 0.0
    %2248 = vmatprep.subr.mxu0 0.0
    %2249 = vmatpush1.msra.mxu0 0.0
    %2250 = vmatprep.subr.mxu0 0.0
    %2251 = vmatpush1.msra.mxu0 0.0
    %2252 = vmatprep.subr.mxu0 0.0
    %2253 = vmatpush1.msra.mxu0 0.0
    %2254 = vmatprep.subr.mxu0 0.0
    %2255 = vmatpush1.msra.mxu0 0.0
    %2256 = vmatprep.subr.mxu0 0.0
    %2257 = vmatpush1.msra.mxu0 0.0
    %2258 = vmatprep.subr.mxu0 0.0
    %2259 = vmatpush1.msra.mxu0 0.0
    %2260 = vmatprep.mubr.f32.mxu0 0.0
    %2261 = vmatmul.mubr.f32.gmra.mrb[0].mxu0 %v2194
    %v2262 = vpop.f32.mrb[0].mxu0
    %v2263 = vadd.f32 0.0, %v2262
    %v2264 = vpop.f32.mrb[0].mxu0
    %2265 = vdwg.mxu0
    %2267 = vrot.lane.b32.xlu0 %v2111, 16
    %v2268 = vpop.permute.xlu0 %2267
    %v2270 = vsel %vm78, %v2035, %v2268
    %2272 = vrot.lane.b32.xlu0 %v2263, 16
    %v2273 = vpop.permute.xlu0 %2272
    %v2275 = vsel %vm78, %v2187, %v2273
    %v2276 = vlaneseq
    %v2277 = vshrl.u32 %v2276, 7
    %v2278 = vsub.s32 0, %v2277
    %v2279 = vrot.slane %v1508, %v2278
    %v2281 = vsel %vm255, %v2270, 0
    %v2284 = vsel %vm255, %v2275, 0
    %2286 = vmatprep.subr.mxu0 0.0
    %2287 = vmatpush1.msra.mxu0 %v1491
    %2288 = vmatprep.subr.mxu0 0.0
    %2289 = vmatpush1.msra.mxu0 %v1492
    %2290 = vmatprep.subr.mxu0 0.0
    %2291 = vmatpush1.msra.mxu0 %v1493
    %2292 = vmatprep.subr.mxu0 0.0
    %2293 = vmatpush1.msra.mxu0 %v1494
    %2294 = vmatprep.subr.mxu0 0.0
    %2295 = vmatpush1.msra.mxu0 0.0
    %2296 = vmatprep.subr.mxu0 0.0
    %2297 = vmatpush1.msra.mxu0 0.0
    %2298 = vmatprep.subr.mxu0 0.0
    %2299 = vmatpush1.msra.mxu0 0.0
    %2300 = vmatprep.subr.mxu0 0.0
    %2301 = vmatpush1.msra.mxu0 0.0
    %2302 = vmatprep.subr.mxu0 0.0
    %2303 = vmatpush1.msra.mxu0 0.0
    %2304 = vmatprep.subr.mxu0 0.0
    %2305 = vmatpush1.msra.mxu0 0.0
    %2306 = vmatprep.subr.mxu0 0.0
    %2307 = vmatpush1.msra.mxu0 0.0
    %2308 = vmatprep.subr.mxu0 0.0
    %2309 = vmatpush1.msra.mxu0 0.0
    %2310 = vmatprep.subr.mxu0 0.0
    %2311 = vmatpush1.msra.mxu0 0.0
    %2312 = vmatprep.subr.mxu0 0.0
    %2313 = vmatpush1.msra.mxu0 0.0
    %2314 = vmatprep.subr.mxu0 0.0
    %2315 = vmatpush1.msra.mxu0 0.0
    %2316 = vmatprep.subr.mxu0 0.0
    %2317 = vmatpush1.msra.mxu0 0.0
    %2318 = vmatprep.subr.mxu0 0.0
    %2319 = vmatpush1.msra.mxu0 0.0
    %2320 = vmatprep.subr.mxu0 0.0
    %2321 = vmatpush1.msra.mxu0 0.0
    %2322 = vmatprep.subr.mxu0 0.0
    %2323 = vmatpush1.msra.mxu0 0.0
    %2324 = vmatprep.subr.mxu0 0.0
    %2325 = vmatpush1.msra.mxu0 0.0
    %2326 = vmatprep.subr.mxu0 0.0
    %2327 = vmatpush1.msra.mxu0 0.0
    %2328 = vmatprep.subr.mxu0 0.0
    %2329 = vmatpush1.msra.mxu0 0.0
    %2330 = vmatprep.subr.mxu0 0.0
    %2331 = vmatpush1.msra.mxu0 0.0
    %2332 = vmatprep.subr.mxu0 0.0
    %2333 = vmatpush1.msra.mxu0 0.0
    %2334 = vmatprep.subr.mxu0 0.0
    %2335 = vmatpush1.msra.mxu0 0.0
    %2336 = vmatprep.subr.mxu0 0.0
    %2337 = vmatpush1.msra.mxu0 0.0
    %2338 = vmatprep.subr.mxu0 0.0
    %2339 = vmatpush1.msra.mxu0 0.0
    %2340 = vmatprep.subr.mxu0 0.0
    %2341 = vmatpush1.msra.mxu0 0.0
    %2342 = vmatprep.subr.mxu0 0.0
    %2343 = vmatpush1.msra.mxu0 0.0
    %2344 = vmatprep.subr.mxu0 0.0
    %2345 = vmatpush1.msra.mxu0 0.0
    %2346 = vmatprep.subr.mxu0 0.0
    %2347 = vmatpush1.msra.mxu0 0.0
    %2348 = vmatprep.subr.mxu0 0.0
    %2349 = vmatpush1.msra.mxu0 0.0
    %2350 = vmatprep.mubr.f32.mxu0 0.0
    %2351 = vmatmul.mubr.f32.gmra.mrb[0].mxu0 %v2281
    %v2352 = vpop.f32.mrb[0].mxu0
    %v2353 = vadd.f32 %v2279, %v2352
    %v2354 = vpop.f32.mrb[0].mxu0
    %2355 = vmatprep.mubr.f32.mxu0 0.0
    %2356 = vmatmul.mubr.f32.gmra.mrb[0].mxu0 %v2284
    %v2357 = vpop.f32.mrb[0].mxu0
    %v2358 = vadd.f32 %v2279, %v2357
    %v2359 = vpop.f32.mrb[0].mxu0
    %2360 = vdwg.mxu0
    %v2361 = vadd.f32 %v1485, %v2353
    %v2362 = vadd.f32 %v1486, %v2358
    %v2363 = vsel %vm255, %v2361, 0.0
    %2364 = vadd.xlane.f32.xlu0 %v2363
    %v2365 = vpop.xlane.xlu0 %2364
    %v2366 = vsel %vm255, %v2362, 0.0
    %2367 = vadd.xlane.f32.xlu0 %v2366
    %v2368 = vpop.xlane.xlu0 %2367
    %v2369 = vmul.f32 %v2365, %v262
    %v2370 = vmul.f32 %v2368, %v262
    %v2371 = vsub.f32 %v2361, %v2369
    %v2372 = vsub.f32 %v2362, %v2370
    %v2373 = vmul.f32 %v2371, %v2371
    %v2374 = vmul.f32 %v2372, %v2372
    %v2375 = vsel %vm255, %v2373, 0.0
    %2376 = vadd.xlane.f32.xlu0 %v2375
    %v2377 = vpop.xlane.xlu0 %2376
    %v2378 = vsel %vm255, %v2374, 0.0
    %2379 = vadd.xlane.f32.xlu0 %v2378
    %v2380 = vpop.xlane.xlu0 %2379
    %v2381 = vmul.f32 %v2377, %v262
    %v2382 = vmul.f32 %v2380, %v262
    %v2383 = vadd.f32 %v2381, 1e-05
    %v2384 = vadd.f32 %v2382, 1e-05
    %v2385 = vrsqrt.pop %v2383
    %v2386 = vrsqrt.pop %v2384
    %v2387 = vmul.f32 %v2371, %v2385
    %v2388 = vmul.f32 %v2372, %v2386
    %v2389 = vlaneseq
    %v2390 = vshrl.u32 %v2389, 7
    %v2391 = vsub.s32 0, %v2390
    %v2392 = vrot.slane %v1509, %v2391
    %v2393 = vmul.f32 %v2387, %v2392
    %v2394 = vmul.f32 %v2388, %v2392
    %v2395 = vlaneseq
    %v2396 = vshrl.u32 %v2395, 7
    %v2397 = vsub.s32 0, %v2396
    %v2398 = vrot.slane %v1510, %v2397
    %v2399 = vadd.f32 %v2393, %v2398
    %v2400 = vadd.f32 %v2394, %v2398
    %v2401 = vlaneseq
    %v2402 = vshrl.u32 %v2401, 7
    %v2403 = vsub.s32 0, %v2402
    %v2404 = vrot.slane %v1511, %v2403
    %v2406 = vsel %vm255, %v2399, 0
    %v2409 = vsel %vm255, %v2400, 0
    %2411 = vmatprep.subr.mxu0 0.0
    %2412 = vmatpush1.msra.mxu0 %v1495
    %2413 = vmatprep.subr.mxu0 0.0
    %2414 = vmatpush1.msra.mxu0 %v1496
    %2415 = vmatprep.subr.mxu0 0.0
    %2416 = vmatpush1.msra.mxu0 %v1497
    %2417 = vmatprep.subr.mxu0 0.0
    %2418 = vmatpush1.msra.mxu0 %v1498
    %2419 = vmatprep.subr.mxu0 0.0
    %2420 = vmatpush1.msra.mxu0 0.0
    %2421 = vmatprep.subr.mxu0 0.0
    %2422 = vmatpush1.msra.mxu0 0.0
    %2423 = vmatprep.subr.mxu0 0.0
    %2424 = vmatpush1.msra.mxu0 0.0
    %2425 = vmatprep.subr.mxu0 0.0
    %2426 = vmatpush1.msra.mxu0 0.0
    %2427 = vmatprep.subr.mxu0 0.0
    %2428 = vmatpush1.msra.mxu0 0.0
    %2429 = vmatprep.subr.mxu0 0.0
    %2430 = vmatpush1.msra.mxu0 0.0
    %2431 = vmatprep.subr.mxu0 0.0
    %2432 = vmatpush1.msra.mxu0 0.0
    %2433 = vmatprep.subr.mxu0 0.0
    %2434 = vmatpush1.msra.mxu0 0.0
    %2435 = vmatprep.subr.mxu0 0.0
    %2436 = vmatpush1.msra.mxu0 0.0
    %2437 = vmatprep.subr.mxu0 0.0
    %2438 = vmatpush1.msra.mxu0 0.0
    %2439 = vmatprep.subr.mxu0 0.0
    %2440 = vmatpush1.msra.mxu0 0.0
    %2441 = vmatprep.subr.mxu0 0.0
    %2442 = vmatpush1.msra.mxu0 0.0
    %2443 = vmatprep.subr.mxu0 0.0
    %2444 = vmatpush1.msra.mxu0 0.0
    %2445 = vmatprep.subr.mxu0 0.0
    %2446 = vmatpush1.msra.mxu0 0.0
    %2447 = vmatprep.subr.mxu0 0.0
    %2448 = vmatpush1.msra.mxu0 0.0
    %2449 = vmatprep.subr.mxu0 0.0
    %2450 = vmatpush1.msra.mxu0 0.0
    %2451 = vmatprep.subr.mxu0 0.0
    %2452 = vmatpush1.msra.mxu0 0.0
    %2453 = vmatprep.subr.mxu0 0.0
    %2454 = vmatpush1.msra.mxu0 0.0
    %2455 = vmatprep.subr.mxu0 0.0
    %2456 = vmatpush1.msra.mxu0 0.0
    %2457 = vmatprep.subr.mxu0 0.0
    %2458 = vmatpush1.msra.mxu0 0.0
    %2459 = vmatprep.subr.mxu0 0.0
    %2460 = vmatpush1.msra.mxu0 0.0
    %2461 = vmatprep.subr.mxu0 0.0
    %2462 = vmatpush1.msra.mxu0 0.0
    %2463 = vmatprep.subr.mxu0 0.0
    %2464 = vmatpush1.msra.mxu0 0.0
    %2465 = vmatprep.subr.mxu0 0.0
    %2466 = vmatpush1.msra.mxu0 0.0
    %2467 = vmatprep.subr.mxu0 0.0
    %2468 = vmatpush1.msra.mxu0 0.0
    %2469 = vmatprep.subr.mxu0 0.0
    %2470 = vmatpush1.msra.mxu0 0.0
    %2471 = vmatprep.subr.mxu0 0.0
    %2472 = vmatpush1.msra.mxu0 0.0
    %2473 = vmatprep.subr.mxu0 0.0
    %2474 = vmatpush1.msra.mxu0 0.0
    %2475 = vmatprep.mubr.f32.mxu0 0.0
    %2476 = vmatmul.mubr.f32.gmra.mrb[0].mxu0 %v2406
    %v2477 = vpop.f32.mrb[0].mxu0
    %v2478 = vadd.f32 %v2404, %v2477
    %v2479 = vpop.f32.mrb[0].mxu0
    %2480 = vmatprep.mubr.f32.mxu0 0.0
    %2481 = vmatmul.mubr.f32.gmra.mrb[0].mxu0 %v2409
    %v2482 = vpop.f32.mrb[0].mxu0
    %v2483 = vadd.f32 %v2404, %v2482
    %v2484 = vpop.f32.mrb[0].mxu0
    %2485 = vdwg.mxu0
    %v2486 = vmul.f32 %v2478, 0.5
    %v2487 = vmul.f32 %v2483, 0.5
    %v2488 = vmul.f32 %v2478, 0.70710677
    %v2489 = vmul.f32 %v2483, 0.70710677
    %v2490 = vand.u32 2147483647, %v2488
    %v2491 = vand.u32 2147483647, %v2489
    %v2492 = vmul.f32 %v2490, 0.3275911
    %v2493 = vmul.f32 %v2491, 0.3275911
    %v2494 = vadd.f32 %v2492, 1.0
    %v2495 = vadd.f32 %v2493, 1.0
    %v2496 = vrcp.pop %v2494
    %v2497 = vmul.f32 1.0, %v2496
    %v2498 = vrcp.pop %v2495
    %v2499 = vmul.f32 1.0, %v2498
    %v2500 = vmul.f32 %v2497, 1.0614054
    %v2501 = vmul.f32 %v2499, 1.0614054
    %v2502 = vadd.f32 %v2500, -1.4531521
    %v2503 = vadd.f32 %v2501, -1.4531521
    %v2504 = vmul.f32 %v2502, %v2497
    %v2505 = vmul.f32 %v2503, %v2499
    %v2506 = vadd.f32 %v2504, 1.4214138
    %v2507 = vadd.f32 %v2505, 1.4214138
    %v2508 = vmul.f32 %v2506, %v2497
    %v2509 = vmul.f32 %v2507, %v2499
    %v2510 = vadd.f32 %v2508, -0.28449672
    %v2511 = vadd.f32 %v2509, -0.28449672
    %v2512 = vmul.f32 %v2510, %v2497
    %v2513 = vmul.f32 %v2511, %v2499
    %v2514 = vadd.f32 %v2512, 0.2548296
    %v2515 = vadd.f32 %v2513, 0.2548296
    %v2516 = vmul.f32 %v2514, %v2497
    %v2517 = vmul.f32 %v2515, %v2499
    %v2518 = vsub.f32 0.0, %v2490
    %v2519 = vsub.f32 0.0, %v2491
    %v2520 = vmul.f32 %v2518, %v2490
    %v2521 = vmul.f32 %v2519, %v2491
    %v2522 = vmul.f32 %v2520, 1.442695
    %v2523 = vpow.pop %v2522
    %v2524 = vmul.f32 %v2521, 1.442695
    %v2525 = vpow.pop %v2524
    %v2526 = vmul.f32 %v2516, %v2523
    %v2527 = vmul.f32 %v2517, %v2525
    %v2528 = vsub.f32 1.0, %v2526
    %v2529 = vsub.f32 1.0, %v2527
    %vm2530 = vcmp.ge.f32.partialorder %v2488, 0.0
    %vm2531 = vcmp.ge.f32.partialorder %v2489, 0.0
    %v2532 = vsub.f32 0.0, %v2528
    %v2533 = vsub.f32 0.0, %v2529
    %v2534 = vsel %vm2530, %v2528, %v2532
    %v2535 = vsel %vm2531, %v2529, %v2533
    %v2536 = vadd.f32 %v2534, 1.0
    %v2537 = vadd.f32 %v2535, 1.0
    %v2538 = vmul.f32 %v2486, %v2536
    %v2539 = vmul.f32 %v2487, %v2537
    %v2540 = vlaneseq
    %v2541 = vshrl.u32 %v2540, 7
    %v2542 = vsub.s32 0, %v2541
    %v2543 = vrot.slane %v1512, %v2542
    %v2545 = vsel %vm1365, %v2538, 0
    %v2548 = vsel %vm1365, %v2539, 0
    %2550 = vmatprep.subr.mxu0 0.0
    %2551 = vmatpush1.msra.mxu0 %v1499
    %2552 = vmatprep.subr.mxu0 0.0
    %2553 = vmatpush1.msra.mxu0 %v1500
    %2554 = vmatprep.subr.mxu0 0.0
    %2555 = vmatpush1.msra.mxu0 %v1501
    %2556 = vmatprep.subr.mxu0 0.0
    %2557 = vmatpush1.msra.mxu0 %v1502
    %2558 = vmatprep.subr.mxu0 0.0
    %2559 = vmatpush1.msra.mxu0 %v1503
    %2560 = vmatprep.subr.mxu0 0.0
    %2561 = vmatpush1.msra.mxu0 %v1504
    %2562 = vmatprep.subr.mxu0 0.0
    %2563 = vmatpush1.msra.mxu0 %v1505
    %2564 = vmatprep.subr.mxu0 0.0
    %2565 = vmatpush1.msra.mxu0 %v1506
    %2566 = vmatprep.subr.mxu0 0.0
    %2567 = vmatpush1.msra.mxu0 0.0
    %2568 = vmatprep.subr.mxu0 0.0
    %2569 = vmatpush1.msra.mxu0 0.0
    %2570 = vmatprep.subr.mxu0 0.0
    %2571 = vmatpush1.msra.mxu0 0.0
    %2572 = vmatprep.subr.mxu0 0.0
    %2573 = vmatpush1.msra.mxu0 0.0
    %2574 = vmatprep.subr.mxu0 0.0
    %2575 = vmatpush1.msra.mxu0 0.0
    %2576 = vmatprep.subr.mxu0 0.0
    %2577 = vmatpush1.msra.mxu0 0.0
    %2578 = vmatprep.subr.mxu0 0.0
    %2579 = vmatpush1.msra.mxu0 0.0
    %2580 = vmatprep.subr.mxu0 0.0
    %2581 = vmatpush1.msra.mxu0 0.0
    %2582 = vmatprep.subr.mxu0 0.0
    %2583 = vmatpush1.msra.mxu0 0.0
    %2584 = vmatprep.subr.mxu0 0.0
    %2585 = vmatpush1.msra.mxu0 0.0
    %2586 = vmatprep.subr.mxu0 0.0
    %2587 = vmatpush1.msra.mxu0 0.0
    %2588 = vmatprep.subr.mxu0 0.0
    %2589 = vmatpush1.msra.mxu0 0.0
    %2590 = vmatprep.subr.mxu0 0.0
    %2591 = vmatpush1.msra.mxu0 0.0
    %2592 = vmatprep.subr.mxu0 0.0
    %2593 = vmatpush1.msra.mxu0 0.0
    %2594 = vmatprep.subr.mxu0 0.0
    %2595 = vmatpush1.msra.mxu0 0.0
    %2596 = vmatprep.subr.mxu0 0.0
    %2597 = vmatpush1.msra.mxu0 0.0
    %2598 = vmatprep.subr.mxu0 0.0
    %2599 = vmatpush1.msra.mxu0 0.0
    %2600 = vmatprep.subr.mxu0 0.0
    %2601 = vmatpush1.msra.mxu0 0.0
    %2602 = vmatprep.subr.mxu0 0.0
    %2603 = vmatpush1.msra.mxu0 0.0
    %2604 = vmatprep.subr.mxu0 0.0
    %2605 = vmatpush1.msra.mxu0 0.0
    %2606 = vmatprep.subr.mxu0 0.0
    %2607 = vmatpush1.msra.mxu0 0.0
    %2608 = vmatprep.subr.mxu0 0.0
    %2609 = vmatpush1.msra.mxu0 0.0
    %2610 = vmatprep.subr.mxu0 0.0
    %2611 = vmatpush1.msra.mxu0 0.0
    %2612 = vmatprep.subr.mxu0 0.0
    %2613 = vmatpush1.msra.mxu0 0.0
    %2614 = vmatprep.mubr.f32.mxu0 0.0
    %2615 = vmatmul.mubr.f32.gmra.mrb[0].mxu0 %v2545
    %v2616 = vpop.f32.mrb[0].mxu0
    %v2617 = vadd.f32 %v2543, %v2616
    %v2618 = vpop.f32.mrb[0].mxu0
    %2619 = vmatprep.mubr.f32.mxu0 0.0
    %2620 = vmatmul.mubr.f32.gmra.mrb[0].mxu0 %v2548
    %v2621 = vpop.f32.mrb[0].mxu0
    %v2622 = vadd.f32 %v2543, %v2621
    %v2623 = vpop.f32.mrb[0].mxu0
    %2624 = vdwg.mxu0
    %v2625 = vadd.f32 %v2399, %v2617
    %v2626 = vadd.f32 %v2400, %v2622
    %v2627 = vsel %vm255, %v2625, 0.0
    %2628 = vadd.xlane.f32.xlu0 %v2627
    %v2629 = vpop.xlane.xlu0 %2628
    %v2630 = vsel %vm255, %v2626, 0.0
    %2631 = vadd.xlane.f32.xlu0 %v2630
    %v2632 = vpop.xlane.xlu0 %2631
    %v2633 = vmul.f32 %v2629, %v262
    %v2634 = vmul.f32 %v2632, %v262
    %v2635 = vsub.f32 %v2625, %v2633
    %v2636 = vsub.f32 %v2626, %v2634
    %v2637 = vmul.f32 %v2635, %v2635
    %v2638 = vmul.f32 %v2636, %v2636
    %v2639 = vsel %vm255, %v2637, 0.0
    %2640 = vadd.xlane.f32.xlu0 %v2639
    %v2641 = vpop.xlane.xlu0 %2640
    %v2642 = vsel %vm255, %v2638, 0.0
    %2643 = vadd.xlane.f32.xlu0 %v2642
    %v2644 = vpop.xlane.xlu0 %2643
    %v2645 = vmul.f32 %v2641, %v262
    %v2646 = vmul.f32 %v2644, %v262
    %v2647 = vadd.f32 %v2645, 1e-05
    %v2648 = vadd.f32 %v2646, 1e-05
    %v2649 = vrsqrt.pop %v2647
    %v2650 = vrsqrt.pop %v2648
    %v2651 = vmul.f32 %v2635, %v2649
    %v2652 = vmul.f32 %v2636, %v2650
    %v2653 = vlaneseq
    %v2654 = vshrl.u32 %v2653, 7
    %v2655 = vsub.s32 0, %v2654
    %v2656 = vrot.slane %v1513, %v2655
    %v2657 = vmul.f32 %v2651, %v2656
    %v2658 = vmul.f32 %v2652, %v2656
    %v2659 = vlaneseq
    %v2660 = vshrl.u32 %v2659, 7
    %v2661 = vsub.s32 0, %v2660
    %v2662 = vrot.slane %v1514, %v2661
    %v2663 = vadd.f32 %v2657, %v2662
    %v2664 = vadd.f32 %v2658, %v2662
    %v2665 = vld [vmem:[#allocation2 + $0x1b8] sm:$0xff]
    %v2666 = vld [vmem:[#allocation2 + $0x1c0] sm:$0xff]
    %v2667 = vld [vmem:[#allocation2 + $0x1c8] sm:$0xff]
    %v2668 = vld [vmem:[#allocation2 + $0x1d0] sm:$0xff]
    %v2669 = vld [vmem:[%s3 + $0x13] sm:$0x1]
    %v2670 = vld [vmem:[#allocation2 + $0x1d8] sm:$0xff]
    %v2671 = vld [vmem:[#allocation2 + $0x1e0] sm:$0xff]
    %v2672 = vld [vmem:[%s3 + $0x14] sm:$0x1]
    %v2673 = vlaneseq
    %v2674 = vshrl.u32 %v2673, 7
    %v2675 = vsub.s32 0, %v2674
    %v2676 = vrot.slane %v2669, %v2675
    %v2678 = vsel %vm255, %v2663, 0
    %v2681 = vsel %vm255, %v2664, 0
    %2683 = vmatprep.subr.mxu0 0.0
    %2684 = vmatpush1.msra.mxu0 %v2665
    %2685 = vmatprep.subr.mxu0 0.0
    %2686 = vmatpush1.msra.mxu0 %v2666
    %2687 = vmatprep.subr.mxu0 0.0
    %2688 = vmatpush1.msra.mxu0 %v2667
    %2689 = vmatprep.subr.mxu0 0.0
    %2690 = vmatpush1.msra.mxu0 %v2668
    %2691 = vmatprep.subr.mxu0 0.0
    %2692 = vmatpush1.msra.mxu0 0.0
    %2693 = vmatprep.subr.mxu0 0.0
    %2694 = vmatpush1.msra.mxu0 0.0
    %2695 = vmatprep.subr.mxu0 0.0
    %2696 = vmatpush1.msra.mxu0 0.0
    %2697 = vmatprep.subr.mxu0 0.0
    %2698 = vmatpush1.msra.mxu0 0.0
    %2699 = vmatprep.subr.mxu0 0.0
    %2700 = vmatpush1.msra.mxu0 0.0
    %2701 = vmatprep.subr.mxu0 0.0
    %2702 = vmatpush1.msra.mxu0 0.0
    %2703 = vmatprep.subr.mxu0 0.0
    %2704 = vmatpush1.msra.mxu0 0.0
    %2705 = vmatprep.subr.mxu0 0.0
    %2706 = vmatpush1.msra.mxu0 0.0
    %2707 = vmatprep.subr.mxu0 0.0
    %2708 = vmatpush1.msra.mxu0 0.0
    %2709 = vmatprep.subr.mxu0 0.0
    %2710 = vmatpush1.msra.mxu0 0.0
    %2711 = vmatprep.subr.mxu0 0.0
    %2712 = vmatpush1.msra.mxu0 0.0
    %2713 = vmatprep.subr.mxu0 0.0
    %2714 = vmatpush1.msra.mxu0 0.0
    %2715 = vmatprep.subr.mxu0 0.0
    %2716 = vmatpush1.msra.mxu0 0.0
    %2717 = vmatprep.subr.mxu0 0.0
    %2718 = vmatpush1.msra.mxu0 0.0
    %2719 = vmatprep.subr.mxu0 0.0
    %2720 = vmatpush1.msra.mxu0 0.0
    %2721 = vmatprep.subr.mxu0 0.0
    %2722 = vmatpush1.msra.mxu0 0.0
    %2723 = vmatprep.subr.mxu0 0.0
    %2724 = vmatpush1.msra.mxu0 0.0
    %2725 = vmatprep.subr.mxu0 0.0
    %2726 = vmatpush1.msra.mxu0 0.0
    %2727 = vmatprep.subr.mxu0 0.0
    %2728 = vmatpush1.msra.mxu0 0.0
    %2729 = vmatprep.subr.mxu0 0.0
    %2730 = vmatpush1.msra.mxu0 0.0
    %2731 = vmatprep.subr.mxu0 0.0
    %2732 = vmatpush1.msra.mxu0 0.0
    %2733 = vmatprep.subr.mxu0 0.0
    %2734 = vmatpush1.msra.mxu0 0.0
    %2735 = vmatprep.subr.mxu0 0.0
    %2736 = vmatpush1.msra.mxu0 0.0
    %2737 = vmatprep.subr.mxu0 0.0
    %2738 = vmatpush1.msra.mxu0 0.0
    %2739 = vmatprep.subr.mxu0 0.0
    %2740 = vmatpush1.msra.mxu0 0.0
    %2741 = vmatprep.subr.mxu0 0.0
    %2742 = vmatpush1.msra.mxu0 0.0
    %2743 = vmatprep.subr.mxu0 0.0
    %2744 = vmatpush1.msra.mxu0 0.0
    %2745 = vmatprep.subr.mxu0 0.0
    %2746 = vmatpush1.msra.mxu0 0.0
    %2747 = vmatprep.mubr.f32.mxu0 0.0
    %2748 = vmatmul.mubr.f32.gmra.mrb[0].mxu0 %v2678
    %v2749 = vpop.f32.mrb[0].mxu0
    %v2750 = vadd.f32 %v2676, %v2749
    %v2751 = vpop.f32.mrb[0].mxu0
    %2752 = vmatprep.mubr.f32.mxu0 0.0
    %2753 = vmatmul.mubr.f32.gmra.mrb[0].mxu0 %v2681
    %v2754 = vpop.f32.mrb[0].mxu0
    %v2755 = vadd.f32 %v2676, %v2754
    %v2756 = vpop.f32.mrb[0].mxu0
    %2757 = vdwg.mxu0
    %v2758 = vmax.f32 %v2750, 0.0
    %v2759 = vmax.f32 %v2755, 0.0
    %v2760 = vld [vmem:[%s2] sm:$0x3]
    %v2762 = vsel %vm78, %v2760, 0
    %2764 = vmatprep.subr.mxu0 0.0
    %2765 = vmatpush1.msra.mxu0 %v2758
    %2766 = vmatprep.subr.mxu0 0.0
    %2767 = vmatpush1.msra.mxu0 %v2759
    %2768 = vmatprep.subr.mxu0 0.0
    %2769 = vmatpush1.msra.mxu0 0.0
    %2770 = vmatprep.subr.mxu0 0.0
    %2771 = vmatpush1.msra.mxu0 0.0
    %2772 = vmatprep.subr.mxu0 0.0
    %2773 = vmatpush1.msra.mxu0 0.0
    %2774 = vmatprep.subr.mxu0 0.0
    %2775 = vmatpush1.msra.mxu0 0.0
    %2776 = vmatprep.subr.mxu0 0.0
    %2777 = vmatpush1.msra.mxu0 0.0
    %2778 = vmatprep.subr.mxu0 0.0
    %2779 = vmatpush1.msra.mxu0 0.0
    %2780 = vmatprep.subr.mxu0 0.0
    %2781 = vmatpush1.msra.mxu0 0.0
    %2782 = vmatprep.subr.mxu0 0.0
    %2783 = vmatpush1.msra.mxu0 0.0
    %2784 = vmatprep.subr.mxu0 0.0
    %2785 = vmatpush1.msra.mxu0 0.0
    %2786 = vmatprep.subr.mxu0 0.0
    %2787 = vmatpush1.msra.mxu0 0.0
    %2788 = vmatprep.subr.mxu0 0.0
    %2789 = vmatpush1.msra.mxu0 0.0
    %2790 = vmatprep.subr.mxu0 0.0
    %2791 = vmatpush1.msra.mxu0 0.0
    %2792 = vmatprep.subr.mxu0 0.0
    %2793 = vmatpush1.msra.mxu0 0.0
    %2794 = vmatprep.subr.mxu0 0.0
    %2795 = vmatpush1.msra.mxu0 0.0
    %2796 = vmatprep.subr.mxu0 0.0
    %2797 = vmatpush1.msra.mxu0 0.0
    %2798 = vmatprep.subr.mxu0 0.0
    %2799 = vmatpush1.msra.mxu0 0.0
    %2800 = vmatprep.subr.mxu0 0.0
    %2801 = vmatpush1.msra.mxu0 0.0
    %2802 = vmatprep.subr.mxu0 0.0
    %2803 = vmatpush1.msra.mxu0 0.0
    %2804 = vmatprep.subr.mxu0 0.0
    %2805 = vmatpush1.msra.mxu0 0.0
    %2806 = vmatprep.subr.mxu0 0.0
    %2807 = vmatpush1.msra.mxu0 0.0
    %2808 = vmatprep.subr.mxu0 0.0
    %2809 = vmatpush1.msra.mxu0 0.0
    %2810 = vmatprep.subr.mxu0 0.0
    %2811 = vmatpush1.msra.mxu0 0.0
    %2812 = vmatprep.subr.mxu0 0.0
    %2813 = vmatpush1.msra.mxu0 0.0
    %2814 = vmatprep.subr.mxu0 0.0
    %2815 = vmatpush1.msra.mxu0 0.0
    %2816 = vmatprep.subr.mxu0 0.0
    %2817 = vmatpush1.msra.mxu0 0.0
    %2818 = vmatprep.subr.mxu0 0.0
    %2819 = vmatpush1.msra.mxu0 0.0
    %2820 = vmatprep.subr.mxu0 0.0
    %2821 = vmatpush1.msra.mxu0 0.0
    %2822 = vmatprep.subr.mxu0 0.0
    %2823 = vmatpush1.msra.mxu0 0.0
    %2824 = vmatprep.subr.mxu0 0.0
    %2825 = vmatpush1.msra.mxu0 0.0
    %2826 = vmatprep.subr.mxu0 0.0
    %2827 = vmatpush1.msra.mxu0 0.0
    %2828 = vmatprep.mubr.f32.mxu0 0.0
    %2829 = vmatmul.mubr.f32.gmra.mrb[0].mxu0 %v2762
    %v2830 = vpop.f32.mrb[0].mxu0
    %v2831 = vadd.f32 0.0, %v2830
    %v2832 = vpop.f32.mrb[0].mxu0
    %2833 = vdwg.mxu0
    %v2834 = vlaneseq
    %v2835 = vshrl.u32 %v2834, 7
    %v2836 = vsub.s32 0, %v2835
    %v2837 = vrot.slane %v2672, %v2836
    %v2839 = vsel %vm78, %v2831, 0
    %2841 = vmatprep.subr.mxu0 0.0
    %2842 = vmatpush1.msra.mxu0 %v2670
    %2843 = vmatprep.subr.mxu0 0.0
    %2844 = vmatpush1.msra.mxu0 %v2671
    %2845 = vmatprep.subr.mxu0 0.0
    %2846 = vmatpush1.msra.mxu0 0.0
    %2847 = vmatprep.subr.mxu0 0.0
    %2848 = vmatpush1.msra.mxu0 0.0
    %2849 = vmatprep.subr.mxu0 0.0
    %2850 = vmatpush1.msra.mxu0 0.0
    %2851 = vmatprep.subr.mxu0 0.0
    %2852 = vmatpush1.msra.mxu0 0.0
    %2853 = vmatprep.subr.mxu0 0.0
    %2854 = vmatpush1.msra.mxu0 0.0
    %2855 = vmatprep.subr.mxu0 0.0
    %2856 = vmatpush1.msra.mxu0 0.0
    %2857 = vmatprep.subr.mxu0 0.0
    %2858 = vmatpush1.msra.mxu0 0.0
    %2859 = vmatprep.subr.mxu0 0.0
    %2860 = vmatpush1.msra.mxu0 0.0
    %2861 = vmatprep.subr.mxu0 0.0
    %2862 = vmatpush1.msra.mxu0 0.0
    %2863 = vmatprep.subr.mxu0 0.0
    %2864 = vmatpush1.msra.mxu0 0.0
    %2865 = vmatprep.subr.mxu0 0.0
    %2866 = vmatpush1.msra.mxu0 0.0
    %2867 = vmatprep.subr.mxu0 0.0
    %2868 = vmatpush1.msra.mxu0 0.0
    %2869 = vmatprep.subr.mxu0 0.0
    %2870 = vmatpush1.msra.mxu0 0.0
    %2871 = vmatprep.subr.mxu0 0.0
    %2872 = vmatpush1.msra.mxu0 0.0
    %2873 = vmatprep.subr.mxu0 0.0
    %2874 = vmatpush1.msra.mxu0 0.0
    %2875 = vmatprep.subr.mxu0 0.0
    %2876 = vmatpush1.msra.mxu0 0.0
    %2877 = vmatprep.subr.mxu0 0.0
    %2878 = vmatpush1.msra.mxu0 0.0
    %2879 = vmatprep.subr.mxu0 0.0
    %2880 = vmatpush1.msra.mxu0 0.0
    %2881 = vmatprep.subr.mxu0 0.0
    %2882 = vmatpush1.msra.mxu0 0.0
    %2883 = vmatprep.subr.mxu0 0.0
    %2884 = vmatpush1.msra.mxu0 0.0
    %2885 = vmatprep.subr.mxu0 0.0
    %2886 = vmatpush1.msra.mxu0 0.0
    %2887 = vmatprep.subr.mxu0 0.0
    %2888 = vmatpush1.msra.mxu0 0.0
    %2889 = vmatprep.subr.mxu0 0.0
    %2890 = vmatpush1.msra.mxu0 0.0
    %2891 = vmatprep.subr.mxu0 0.0
    %2892 = vmatpush1.msra.mxu0 0.0
    %2893 = vmatprep.subr.mxu0 0.0
    %2894 = vmatpush1.msra.mxu0 0.0
    %2895 = vmatprep.subr.mxu0 0.0
    %2896 = vmatpush1.msra.mxu0 0.0
    %2897 = vmatprep.subr.mxu0 0.0
    %2898 = vmatpush1.msra.mxu0 0.0
    %2899 = vmatprep.subr.mxu0 0.0
    %2900 = vmatpush1.msra.mxu0 0.0
    %2901 = vmatprep.subr.mxu0 0.0
    %2902 = vmatpush1.msra.mxu0 0.0
    %2903 = vmatprep.subr.mxu0 0.0
    %2904 = vmatpush1.msra.mxu0 0.0
    %2905 = vmatprep.mubr.f32.mxu0 0.0
    %2906 = vmatmul.mubr.f32.gmra.mrb[0].mxu0 %v2839
    %v2907 = vpop.f32.mrb[0].mxu0
    %v2908 = vadd.f32 %v2837, %v2907
    %v2909 = vpop.f32.mrb[0].mxu0
    %2910 = vdwg.mxu0
    %vm2911 = vcmask 17408
    %2912 = vst.msk [vmem:[#allocation5] sm:$0x3] %vm2911, %v2908
    // Predicated region
    $region26: #{roberta_sentiment_forward.1} parent=1 // pred_check
      _
    $region27: #{roberta_sentiment_forward.1} parent=1 // pred_check_branch
      %2914 = sbr.rel (0) target = $region29
    $region28: #{roberta_sentiment_forward.1} parent=1 // pred_region
      %s2916 = ssub.s32 32, 32
      %2917 = vsyncadd [#allocation4], %s2916
      %s2919 = sshll.u32 [#allocation5], 4
      %s2920 = int_to_ptr.vmem [resolvable:$true] %s2919
      %2922 = dma.vmem_to_hbm [thread:$0]  %s2920, 32, %s5, [#allocation4]
    $region29: #{roberta_sentiment_forward.1} parent=1 // pred_fallthru
      _
    // Predicated region
    $region30: #{roberta_sentiment_forward.1} parent=1 // pred_check
      _
    $region31: #{roberta_sentiment_forward.1} parent=1 // pred_check_branch
      %2924 = sbr.rel (0) target = $region33
    $region32: #{roberta_sentiment_forward.1} parent=1 // pred_region
      %2925 = dma.done [#allocation4], 32
    $region33: #{roberta_sentiment_forward.1} parent=1 // pred_fallthru
      _
    %2926 = vsyncpa [#allocation3], 1
    %2927 = vsyncpa [#allocation4], 1

</llo_original>
